<compile_context>
chip_gen: v5e
topology: v5e:2x2
jax: 0.10.0
libtpu: 0.0.40
codegen_flags: <defaults>
</compile_context>

<pallas_src>
import functools

import jax
import jax.numpy as jnp
from jax.experimental import pallas as pl
from jax.experimental.pallas import tpu as pltpu

W0 = 1.0  # Sine activation frequency


def _ru(x, m):
    return (x + m - 1) // m * m


def _row_tiles(M):
    """Padded row count and row tile.

    Large tiles (up to 1024) amortize the ~0.35us per-grid-step overhead on
    the memory-bound pointwise layers; for mid-sized M we keep >=2 row blocks
    so a v7x megacore can shard the 'parallel' axis across both TensorCores."""
    Mp = _ru(M, 16)
    if Mp <= 1024:
        half = Mp // 2
        if half >= 256 and half % 16 == 0:
            return Mp, half
        return Mp, Mp
    for tm in (1024, 512, 256, 128):
        if Mp % tm == 0:
            return Mp, tm
    return _ru(M, 128), 128


def _k_tiles(K):
    """Contraction tiling: keep K whole up to 8192 (a tk=8192 bf16 weight
    block for the branch GEMV is ~1 MiB, double-buffered), else big K tiles."""
    if K <= 8192:
        return K, K
    for tk in (8192, 4096, 2048, 1024, 512):
        if K % tk == 0:
            return K, tk
    return _ru(K, 2048), 2048


def _n_tiles(N):
    if N <= 512:
        return N, N
    if N % 128 == 0:
        return N, 128
    return _ru(N, 128), 128


def _coord_tiles(C):
    Cp = _ru(C, 8)
    if Cp <= 2048:
        half = Cp // 2
        if half >= 512 and half % 8 == 0:
            return Cp, half
        return Cp, Cp
    for tc in (2048, 1024, 512, 256):
        if Cp % tc == 0:
            return Cp, tc
    return _ru(C, 512), 512


def _apply_act(y, activation, w0):
    if activation == "sine":
        return jnp.sin(w0 * y)
    if activation == "gelu":
        return jax.nn.gelu(y)
    return y


# --------------------------------------------------------------------------
# Pallas kernel 1: fused Linear  y = act(x @ w + b)
#   bf16 operands on the MXU, f32 accumulation, NO scratch accumulator:
#   single-K-block -> direct store; K-tiled -> accumulate into the resident
#   f32 output block, bias/activation applied at the last k step.
# --------------------------------------------------------------------------
def _linear_kernel(x_ref, w_ref, b_ref, o_ref, *, activation, w0, nk):
    if nk == 1:
        y = jnp.dot(x_ref[...], w_ref[...],
                    preferred_element_type=jnp.float32) + b_ref[...]
        o_ref[...] = _apply_act(y, activation, w0).astype(o_ref.dtype)
    else:
        k = pl.program_id(2)

        @pl.when(k == 0)
        def _():
            o_ref[...] = jnp.zeros_like(o_ref)

        o_ref[...] += jnp.dot(x_ref[...], w_ref[...],
                              preferred_element_type=jnp.float32)

        @pl.when(k == nk - 1)
        def _():
            y = o_ref[...] + b_ref[...]
            o_ref[...] = _apply_act(y, activation, w0).astype(o_ref.dtype)


def pallas_linear(x, w, b, activation=None, w0=W0):
    """x: [M, K], w: [K, N], b: [N] or [1, N] -> [M, N] float32."""
    M, K = x.shape
    Kw, N = w.shape
    assert K == Kw
    Mp, tm = _row_tiles(M)
    Kp, tk = _k_tiles(K)
    Np, tn = _n_tiles(N)
    nk = Kp // tk

    xb = x if x.dtype == jnp.bfloat16 else x.astype(jnp.bfloat16)
    if (Mp, Kp) != (M, K):
        xb = jnp.zeros((Mp, Kp), jnp.bfloat16).at[:M, :K].set(xb)
    wb = w if w.dtype == jnp.bfloat16 else w.astype(jnp.bfloat16)
    if (Kp, Np) != (K, N):
        wb = jnp.zeros((Kp, Np), jnp.bfloat16).at[:K, :N].set(wb)
    bb = jnp.asarray(b, jnp.float32).reshape(1, -1)
    if Np != N:
        bb = jnp.zeros((1, Np), jnp.float32).at[:, :N].set(bb)

    kernel = functools.partial(_linear_kernel, activation=activation,
                               w0=w0, nk=nk)
    out = pl.pallas_call(
        kernel,
        out_shape=jax.ShapeDtypeStruct((Mp, Np), jnp.float32),
        grid_spec=pltpu.PrefetchScalarGridSpec(
            num_scalar_prefetch=0,
            grid=(Mp // tm, Np // tn, nk),
            in_specs=[
                pl.BlockSpec((tm, tk), lambda i, j, k: (i, k)),
                pl.BlockSpec((tk, tn), lambda i, j, k: (k, j)),
                pl.BlockSpec((1, tn), lambda i, j, k: (0, j)),
            ],
            out_specs=pl.BlockSpec((tm, tn), lambda i, j, k: (i, j)),
        ),
        compiler_params=pltpu.CompilerParams(
            dimension_semantics=("parallel", "parallel", "arbitrary")),
    )(xb, wb, bb)
    if (Mp, Np) != (M, N):
        out = out[:M, :N]
    return out


# --------------------------------------------------------------------------
# Pallas kernel 2: fused 2-layer pointwise MLP (x @ w1 + b1 -> act -> @ w2 + b2)
# Intermediate never leaves VMEM; weights resident across the whole grid.
# --------------------------------------------------------------------------
def _mlp2_kernel(x_ref, w1_ref, b1_ref, w2_ref, b2_ref, o_ref, *,
                 mid_activation, w0):
    h = jnp.dot(x_ref[...], w1_ref[...],
                preferred_element_type=jnp.float32) + b1_ref[...]
    h = _apply_act(h, mid_activation, w0)
    y = jnp.dot(h.astype(jnp.bfloat16), w2_ref[...],
                preferred_element_type=jnp.float32) + b2_ref[...]
    o_ref[...] = y.astype(o_ref.dtype)


def pallas_mlp2(x, w1, b1, w2, b2, mid_activation="gelu", w0=W0,
                out_dtype=jnp.float32):
    """x: [M, K], w1: [K, C], w2: [C, N] -> [M, N] (single HBM round trip)."""
    M, K = x.shape
    C = w1.shape[1]
    N = w2.shape[1]
    Mp, tm = _row_tiles(M)

    xb = x if x.dtype == jnp.bfloat16 else x.astype(jnp.bfloat16)
    if Mp != M:
        xb = jnp.zeros((Mp, K), jnp.bfloat16).at[:M].set(xb)

    kernel = functools.partial(_mlp2_kernel, mid_activation=mid_activation,
                               w0=w0)
    out = pl.pallas_call(
        kernel,
        out_shape=jax.ShapeDtypeStruct((Mp, N), out_dtype),
        grid_spec=pltpu.PrefetchScalarGridSpec(
            num_scalar_prefetch=0,
            grid=(Mp // tm,),
            in_specs=[
                pl.BlockSpec((tm, K), lambda i: (i, 0)),
                pl.BlockSpec((K, C), lambda i: (0, 0)),
                pl.BlockSpec((1, C), lambda i: (0, 0)),
                pl.BlockSpec((C, N), lambda i: (0, 0)),
                pl.BlockSpec((1, N), lambda i: (0, 0)),
            ],
            out_specs=pl.BlockSpec((tm, N), lambda i: (i, 0)),
        ),
        compiler_params=pltpu.CompilerParams(dimension_semantics=("parallel",)),
    )(xb, w1, b1, w2, b2)
    return out[:M] if Mp != M else out


# --------------------------------------------------------------------------
# Pallas kernel 3: fused trunk MLP + DeepONet head.
#   h = sin(w0*(x@W_in+b_in)); repeat sine hidden layers;
#   t = h@W_t+b_t; latent = branch_b * t; out = sin(w0*latent)@W_o + b_o
# Grid = (batch, coord-tile); every weight is VMEM-resident; the branch
# latent is read as a (1, L) block per batch (no HBM broadcast) and no trunk
# intermediate ever leaves VMEM.
# --------------------------------------------------------------------------
def _trunk_head_kernel(*refs, num_hidden, w0):
    x_ref, br_ref, w_in_ref, b_in_ref = refs[:4]
    pos = 4
    hidden = []
    for _ in range(num_hidden):
        hidden.append((refs[pos], refs[pos + 1]))
        pos += 2
    w_t_ref, b_t_ref, w_o_ref, b_o_ref, o_ref = refs[pos:pos + 5]

    h = jnp.dot(x_ref[...], w_in_ref[...],
                preferred_element_type=jnp.float32) + b_in_ref[...]
    h = jnp.sin(w0 * h)
    for w_ref, b_ref in hidden:
        h = jnp.dot(h.astype(jnp.bfloat16), w_ref[...],
                    preferred_element_type=jnp.float32) + b_ref[...]
        h = jnp.sin(w0 * h)
    t = jnp.dot(h.astype(jnp.bfloat16), w_t_ref[...],
                preferred_element_type=jnp.float32) + b_t_ref[...]
    latent = br_ref[...] * t                     # (1, L) broadcast over rows
    act = jnp.sin(w0 * latent)
    y = jnp.dot(act.astype(jnp.bfloat16), w_o_ref[...],
                preferred_element_type=jnp.float32) + b_o_ref[...]
    o_ref[...] = y.astype(o_ref.dtype)


def pallas_trunk_head(x, branch, tp, *, out_dim, w0=W0):
    """x: [B, C, Din] coords, branch: [B, L] -> [B, C, out_dim] f32."""
    B, C, Din = x.shape
    Din_p, Hd = tp["w_in"].shape
    L = tp["w_t"].shape[1]
    Cp, tc = _coord_tiles(C)
    R = B * C

    # Lane-dense (128-pad) output only when the row count is small; at large
    # B*C emit raw out_dim columns to avoid ~(128/out_dim)x writeback traffic.
    if R < 4096:
        w_o, b_o = tp["w_o_pad"], tp["b_o_pad"]
    else:
        w_o, b_o = tp["w_o"], tp["b_o"]
    Op = w_o.shape[1]

    xb = x.astype(jnp.bfloat16)
    if (Cp, Din_p) != (C, Din):
        xb = jnp.zeros((B, Cp, Din_p), jnp.bfloat16).at[:, :C, :Din].set(xb)
    br = branch.astype(jnp.float32).reshape(B, 1, L)

    args = [xb, br, tp["w_in"], tp["b_in"]]
    in_specs = [
        pl.BlockSpec((None, tc, Din_p), lambda b, c: (b, c, 0)),
        pl.BlockSpec((None, 1, L), lambda b, c: (b, 0, 0)),
        pl.BlockSpec((Din_p, Hd), lambda b, c: (0, 0)),
        pl.BlockSpec((1, Hd), lambda b, c: (0, 0)),
    ]
    for wh, bh in tp["hidden"]:
        args += [wh, bh]
        in_specs += [pl.BlockSpec((Hd, Hd), lambda b, c: (0, 0)),
                     pl.BlockSpec((1, Hd), lambda b, c: (0, 0))]
    args += [tp["w_t"], tp["b_t"], w_o, b_o]
    in_specs += [pl.BlockSpec((Hd, L), lambda b, c: (0, 0)),
                 pl.BlockSpec((1, L), lambda b, c: (0, 0)),
                 pl.BlockSpec((L, Op), lambda b, c: (0, 0)),
                 pl.BlockSpec((1, Op), lambda b, c: (0, 0))]

    kernel = functools.partial(_trunk_head_kernel,
                               num_hidden=len(tp["hidden"]), w0=w0)
    out = pl.pallas_call(
        kernel,
        out_shape=jax.ShapeDtypeStruct((B, Cp, Op), jnp.float32),
        grid_spec=pltpu.PrefetchScalarGridSpec(
            num_scalar_prefetch=0,
            grid=(B, Cp // tc),
            in_specs=in_specs,
            out_specs=pl.BlockSpec((None, tc, Op), lambda b, c: (b, c, 0)),
        ),
        compiler_params=pltpu.CompilerParams(
            dimension_semantics=("parallel", "parallel")),
    )(*args)
    return out[:, :C, :out_dim]


# --------------------------------------------------------------------------
# UNO branch network.  Channel MLPs (lifting / projection) are Pallas; the
# spectral blocks use jnp FFTs with the linear skip folded into the frequency
# domain so each block needs exactly one rfft2 + one irfft2.
# --------------------------------------------------------------------------
def pointwise_mlp2(x_nhwc, w1, b1, w2, b2, mid_activation="gelu",
                   out_dtype=jnp.float32):
    B, H, W, C = x_nhwc.shape
    y = pallas_mlp2(x_nhwc.reshape(B * H * W, C), w1, b1, w2, b2,
                    mid_activation=mid_activation, out_dtype=out_dtype)
    return y.reshape(B, H, W, -1)


def fourier_resample(x, out_hw):
    """Spectral resampling of [B, H, W, C] to spatial out_hw (U-skips)."""
    B, H, W, C = x.shape
    Ho, Wo = out_hw
    if (H, W) == (Ho, Wo):
        return x
    Xf = jnp.fft.rfft2(x, axes=(1, 2))
    kh = min(H, Ho) // 2
    kw = min(W // 2 + 1, Wo // 2 + 1)
    out = jnp.zeros((B, Ho, Wo // 2 + 1, C), jnp.complex64)
    out = out.at[:, :kh, :kw].set(Xf[:, :kh, :kw])
    out = out.at[:, Ho - kh:, :kw].set(Xf[:, H - kh:, :kw])
    y = jnp.fft.irfft2(out, s=(Ho, Wo), axes=(1, 2))
    return (y * (Ho * Wo) / (H * W)).astype(jnp.float32)


def uno_block(x, spec_w, skip_w, skip_b, out_hw, apply_gelu):
    """One UNO block: spectral conv + linear skip, both mixed in the
    frequency domain (single rfft2/irfft2 pair), with 0.5x spatial scaling."""
    B, H, W, _ = x.shape
    Ho, Wo = out_hw
    Cout = spec_w["pos"].shape[-1]
    Wf, Wfo = W // 2 + 1, Wo // 2 + 1
    Xf = jnp.fft.rfft2(x, axes=(1, 2))
    out = jnp.zeros((B, Ho, Wfo, Cout), jnp.complex64)
    # linear skip commutes with the FFT: keep all modes representable at (Ho,Wo)
    kh = min(H, Ho) // 2
    kw = min(Wf, Wfo)
    out = out.at[:, :kh, :kw].add(
        jnp.einsum("bhwi,io->bhwo", Xf[:, :kh, :kw], skip_w))
    out = out.at[:, Ho - kh:, :kw].add(
        jnp.einsum("bhwi,io->bhwo", Xf[:, H - kh:, :kw], skip_w))
    # spectral conv: low-mode complex channel mixing
    khs = min(spec_w["pos"].shape[0], H // 2, Ho // 2)
    kws = min(spec_w["pos"].shape[1], Wf, Wfo)
    out = out.at[:, :khs, :kws].add(
        jnp.einsum("bhwi,hwio->bhwo", Xf[:, :khs, :kws],
                   spec_w["pos"][:khs, :kws]))
    out = out.at[:, Ho - khs:, :kws].add(
        jnp.einsum("bhwi,hwio->bhwo", Xf[:, H - khs:, :kws],
                   spec_w["neg"][:khs, :kws]))
    y = jnp.fft.irfft2(out, s=(Ho, Wo), axes=(1, 2))
    y = (y * (Ho * Wo) / (H * W) + skip_b.reshape(1, 1, 1, -1)).astype(jnp.float32)
    return jax.nn.gelu(y) if apply_gelu else y


def uno_forward(bc_nchw, p):
    """bc_nchw: [B, 3, H, W] -> [B, H/16, W/16, 64] (channels-last, bf16)."""
    x = jnp.transpose(bc_nchw, (0, 2, 3, 1)).astype(jnp.float32)   # NHWC
    cin = x.shape[-1]
    k_lift = p["lift1"][0].shape[0]
    if k_lift != cin:    # lift weight rows pre-padded to 8 for the MXU
        x = jnp.pad(x, ((0, 0), (0, 0), (0, 0), (0, k_lift - cin)))
    # fused lifting ChannelMLP: 3 -> 64 (gelu) -> 64, single HBM round trip
    x = pointwise_mlp2(x, *p["lift1"], *p["lift2"], mid_activation="gelu")

    n_layers = 4
    skips_map = {3: 0, 2: 1}            # U-shape horizontal skips
    skip_store = {}
    for i in range(n_layers):
        if i in skips_map:
            src = fourier_resample(skip_store[skips_map[i]],
                                   (x.shape[1], x.shape[2]))
            x = jnp.concatenate([x, src], axis=-1)
        Ho, Wo = x.shape[1] // 2, x.shape[2] // 2       # uno_scalings 0.5
        sw, sb = p["skip"][i]
        x = uno_block(x, p["spec"][i], sw, sb, (Ho, Wo),
                      apply_gelu=(i < n_layers - 1))
        if i in skips_map.values():
            skip_store[i] = x
    # fused projection ChannelMLP: 64 -> 64 (gelu) -> 64; bf16 output feeds
    # the bf16 branch GEMV without an extra cast pass.
    return pointwise_mlp2(x, *p["proj1"], *p["proj2"], mid_activation="gelu",
                          out_dtype=jnp.bfloat16)


# --------------------------------------------------------------------------
# DeepONet forward
# --------------------------------------------------------------------------
def deeponet_forward(params, bc, x, *, out_dim):
    """
    bc : [B, 3, H, W]
    x  : [B, batch_coords, trunk_in_dim]
    ->   [B, batch_coords, out_dim]
    """
    B = bc.shape[0]
    feat = uno_forward(bc, params["uno"])      # [B, h, w, 64] NHWC bf16
    # NHWC flatten; the branch weight rows were permuted in prepare_params so
    # this matches torch.flatten(NCHW) with no runtime transpose.
    flat = feat.reshape(B, -1)
    branch_latent = pallas_linear(flat, *params["branch"])        # [B, latent]
    return pallas_trunk_head(x, branch_latent, params["trunk_head"],
                             out_dim=out_dim, w0=W0)


# --------------------------------------------------------------------------
# One-time parameter preparation
# --------------------------------------------------------------------------
def prepare_params(params, *, H, W):
    """bf16 casts, bias reshapes, K padding (->8) for the tiny lift/trunk_in
    contractions, branch-weight row permutation to NHWC flatten order, and a
    128-lane-padded d_out copy for small-row heads."""
    def lin(wb):
        w, b = wb
        return (jnp.asarray(w, jnp.bfloat16),
                jnp.asarray(b, jnp.float32).reshape(1, -1))

    def pad_rows(w, rows):
        w = jnp.asarray(w, jnp.bfloat16)
        if w.shape[0] >= rows:
            return w
        return jnp.zeros((rows, w.shape[1]), jnp.bfloat16).at[:w.shape[0]].set(w)

    uno = params["uno"]
    w_l1, b_l1 = uno["lift1"]
    puno = {
        "lift1": (pad_rows(w_l1, 8),
                  jnp.asarray(b_l1, jnp.float32).reshape(1, -1)),
        "lift2": lin(uno["lift2"]),
        "proj1": lin(uno["proj1"]),
        "proj2": lin(uno["proj2"]),
        "spec": [{"pos": jnp.asarray(s["pos"], jnp.complex64),
                  "neg": jnp.asarray(s["neg"], jnp.complex64)}
                 for s in uno["spec"]],
        "skip": [(jnp.asarray(w, jnp.float32), jnp.asarray(b, jnp.float32))
                 for (w, b) in uno["skip"]],
    }

    # branch linear: permute weight rows from NCHW-flatten to NHWC-flatten
    # order (removes the runtime feature-map transpose; mathematically equal).
    wb, bb = params["branch"]
    h_out, w_out = H // 16, W // 16
    latent = wb.shape[1]
    feat_c = wb.shape[0] // (h_out * w_out)
    wb_perm = jnp.transpose(
        jnp.asarray(wb, jnp.bfloat16).reshape(feat_c, h_out, w_out, latent),
        (1, 2, 0, 3)).reshape(h_out * w_out * feat_c, latent)

    # fused trunk + head parameters
    w_ti, b_ti = params["trunk_in"]
    wo, bo = params["d_out"]
    L, O = wo.shape
    Opad = _ru(O, 128)
    wo_pad = jnp.zeros((L, Opad), jnp.bfloat16).at[:, :O].set(
        jnp.asarray(wo, jnp.bfloat16))
    bo_pad = jnp.zeros((1, Opad), jnp.float32).at[0, :O].set(
        jnp.asarray(bo, jnp.float32))
    trunk_head = {
        "w_in": pad_rows(w_ti, 8),
        "b_in": jnp.asarray(b_ti, jnp.float32).reshape(1, -1),
        "hidden": [lin(l) for l in params["trunk_hidden"]],
        "w_t": jnp.asarray(params["trunk_out"][0], jnp.bfloat16),
        "b_t": jnp.asarray(params["trunk_out"][1], jnp.float32).reshape(1, -1),
        "w_o": jnp.asarray(wo, jnp.bfloat16),
        "b_o": jnp.asarray(bo, jnp.float32).reshape(1, -1),
        "w_o_pad": wo_pad,
        "b_o_pad": bo_pad,
    }
    return {"uno": puno,
            "branch": (wb_perm, jnp.asarray(bb, jnp.float32).reshape(1, -1)),
            "trunk_head": trunk_head}


# --------------------------------------------------------------------------
# Deterministic parameter init (synthetic weights)
# --------------------------------------------------------------------------
def init_linear(key, fan_in, fan_out):
    k1, k2 = jax.random.split(key)
    lim = 1.0 / jnp.sqrt(fan_in)
    w = jax.random.uniform(k1, (fan_in, fan_out), jnp.float32, -lim, lim)
    b = jax.random.uniform(k2, (fan_out,), jnp.float32, -lim, lim)
    return w, b


def init_spectral(key, cin, cout, modes_h, modes_w):
    kh, kw = modes_h // 2, modes_w // 2 + 1
    k1, k2, k3, k4 = jax.random.split(key, 4)
    scale = 1.0 / (cin * cout)
    pos = scale * (jax.random.normal(k1, (kh, kw, cin, cout))
                   + 1j * jax.random.normal(k2, (kh, kw, cin, cout)))
    neg = scale * (jax.random.normal(k3, (kh, kw, cin, cout))
                   + 1j * jax.random.normal(k4, (kh, kw, cin, cout)))
    return {"pos": pos.astype(jnp.complex64), "neg": neg.astype(jnp.complex64)}


def init_deeponet(key, *, H, W, trunk_in_dim, out_dim, latent_dim,
                  hidden_dim, num_layers):
    keys = iter(jax.random.split(key, 32))
    nxt = lambda: next(keys)
    uno = {
        "lift1": init_linear(nxt(), 3, 64),
        "lift2": init_linear(nxt(), 64, 64),
        "proj1": init_linear(nxt(), 64, 64),
        "proj2": init_linear(nxt(), 64, 64),
    }
    block_in = [64, 64, 128, 128]   # layers 2,3 take U-skip concat inputs
    uno["spec"] = [init_spectral(nxt(), cin, 64, 8, 8) for cin in block_in]
    uno["skip"] = [init_linear(nxt(), cin, 64) for cin in block_in]

    params = {"uno": uno}
    branch_in = 64 * (H // 16) * (W // 16)   # == 64*32*16 at full 512x256 input
    params["branch"] = init_linear(nxt(), branch_in, latent_dim)
    params["trunk_in"] = init_linear(nxt(), trunk_in_dim, hidden_dim)
    params["trunk_hidden"] = [init_linear(nxt(), hidden_dim, hidden_dim)
                              for _ in range(num_layers)]
    params["trunk_out"] = init_linear(nxt(), hidden_dim, latent_dim)
    params["d_out"] = init_linear(nxt(), latent_dim, out_dim)
    return params


if __name__ == "__main__":
    key = jax.random.PRNGKey(0)
    # SMALL shapes (reference uses bc [B,3,512,256]; here scaled down 8x)
    B, H, W = 2, 64, 32
    trunk_in_dim, out_dim, latent_dim, hidden_dim, num_layers = 3, 3, 64, 32, 2
    n_coords = 8

    kp, kb, kx = jax.random.split(key, 3)
    params = init_deeponet(kp, H=H, W=W, trunk_in_dim=trunk_in_dim,
                           out_dim=out_dim, latent_dim=latent_dim,
                           hidden_dim=hidden_dim, num_layers=num_layers)
    prepared = prepare_params(params, H=H, W=W)

    bc = jax.random.normal(kb, (B, 3, H, W), jnp.float32)
    x = jax.random.normal(kx, (B, n_coords, trunk_in_dim), jnp.float32)

    fwd = jax.jit(functools.partial(deeponet_forward, out_dim=out_dim))
    out = fwd(prepared, bc, x)
    out = jax.block_until_ready(out)
    assert out.shape == (B, n_coords, out_dim), out.shape
    assert bool(jnp.all(jnp.isfinite(out)))
    print("KERNEL_OK")
</pallas_src>

<mosaic_0001>
module attributes {stable_mosaic.version = 11 : i64} {
  func.func @_mlp2_kernel(%arg0: i32, %arg1: memref<1024x8xbf16, #tpu.memory_space<vmem>>, %arg2: memref<8x64xbf16, #tpu.memory_space<vmem>>, %arg3: memref<1x64xf32, #tpu.memory_space<vmem>>, %arg4: memref<64x64xbf16, #tpu.memory_space<vmem>>, %arg5: memref<1x64xf32, #tpu.memory_space<vmem>>, %arg6: memref<1024x64xf32, #tpu.memory_space<vmem>>) attributes {dimension_semantics = [#tpu.dimension_semantics<parallel>], iteration_bounds = array<i64: 4>, scalar_prefetch = 0 : i64, scratch_operands = 0 : i64, tpu.core_type = #tpu.core_type<tc>, window_params = [{transform_indices = @transform_0, window_bounds = array<i64: 1024, 8>}, {pipeline_mode = #tpu.pipeline_mode<synchronous>, transform_indices = @transform_1, window_bounds = array<i64: 8, 64>}, {pipeline_mode = #tpu.pipeline_mode<synchronous>, transform_indices = @transform_2, window_bounds = array<i64: 1, 64>}, {pipeline_mode = #tpu.pipeline_mode<synchronous>, transform_indices = @transform_3, window_bounds = array<i64: 64, 64>}, {pipeline_mode = #tpu.pipeline_mode<synchronous>, transform_indices = @transform_4, window_bounds = array<i64: 1, 64>}, {transform_indices = @transform_5, window_bounds = array<i64: 1024, 64>}]} {
    %c0 = arith.constant 0 : index
    %c0_0 = arith.constant 0 : index
    %0 = vector.load %arg1[%c0, %c0_0] : memref<1024x8xbf16, #tpu.memory_space<vmem>>, vector<1024x8xbf16>
    %c0_1 = arith.constant 0 : index
    %c0_2 = arith.constant 0 : index
    %1 = vector.load %arg2[%c0_1, %c0_2] : memref<8x64xbf16, #tpu.memory_space<vmem>>, vector<8x64xbf16>
    %cst = arith.constant dense<0.000000e+00> : vector<1024x64xf32>
    %2 = tpu.matmul %0, %1, %cst {dimension_numbers = #tpu.dot_dimension_numbers<[1], [0], [0], [1], [0, 0, 1, 1], [], []>} : vector<1024x8xbf16>, vector<8x64xbf16>, vector<1024x64xf32> -> vector<1024x64xf32>
    %c0_3 = arith.constant 0 : index
    %c0_4 = arith.constant 0 : index
    %3 = vector.load %arg3[%c0_3, %c0_4] : memref<1x64xf32, #tpu.memory_space<vmem>>, vector<1x64xf32>
    %4 = vector.broadcast %3 : vector<1x64xf32> to vector<1024x64xf32>
    %5 = arith.addf %2, %4 : vector<1024x64xf32>
    %6 = arith.mulf %5, %5 : vector<1024x64xf32>
    %7 = arith.mulf %5, %6 : vector<1024x64xf32>
    %cst_5 = arith.constant 4.471500e-02 : f32
    %8 = vector.broadcast %cst_5 : f32 to vector<1024x64xf32>
    %9 = arith.mulf %8, %7 : vector<1024x64xf32>
    %10 = arith.addf %5, %9 : vector<1024x64xf32>
    %cst_6 = arith.constant 0.797884583 : f32
    %11 = vector.broadcast %cst_6 : f32 to vector<1024x64xf32>
    %12 = arith.mulf %11, %10 : vector<1024x64xf32>
    %13 = math.tanh %12 : vector<1024x64xf32>
    %cst_7 = arith.constant 1.000000e+00 : f32
    %14 = vector.broadcast %cst_7 : f32 to vector<1024x64xf32>
    %15 = arith.addf %14, %13 : vector<1024x64xf32>
    %cst_8 = arith.constant 5.000000e-01 : f32
    %16 = vector.broadcast %cst_8 : f32 to vector<1024x64xf32>
    %17 = arith.mulf %16, %15 : vector<1024x64xf32>
    %18 = arith.mulf %5, %17 : vector<1024x64xf32>
    %19 = arith.truncf %18 : vector<1024x64xf32> to vector<1024x64xbf16>
    %c0_9 = arith.constant 0 : index
    %c0_10 = arith.constant 0 : index
    %20 = vector.load %arg4[%c0_9, %c0_10] : memref<64x64xbf16, #tpu.memory_space<vmem>>, vector<64x64xbf16>
    %cst_11 = arith.constant dense<0.000000e+00> : vector<1024x64xf32>
    %21 = tpu.matmul %19, %20, %cst_11 {dimension_numbers = #tpu.dot_dimension_numbers<[1], [0], [0], [1], [0, 0, 1, 1], [], []>} : vector<1024x64xbf16>, vector<64x64xbf16>, vector<1024x64xf32> -> vector<1024x64xf32>
    %c0_12 = arith.constant 0 : index
    %c0_13 = arith.constant 0 : index
    %22 = vector.load %arg5[%c0_12, %c0_13] : memref<1x64xf32, #tpu.memory_space<vmem>>, vector<1x64xf32>
    %23 = vector.broadcast %22 : vector<1x64xf32> to vector<1024x64xf32>
    %24 = arith.addf %21, %23 : vector<1024x64xf32>
    %c0_14 = arith.constant 0 : index
    %c0_15 = arith.constant 0 : index
    %25 = vector.load %arg6[%c0_14, %c0_15] : memref<1024x64xf32, #tpu.memory_space<vmem>>, vector<1024x64xf32>
    tpu.vector_store %arg6[%c0_14, %c0_15], %24 {strides = array<i32>} : memref<1024x64xf32, #tpu.memory_space<vmem>>, vector<1024x64xf32>,
    return
  }
  func.func @transform_0(%arg0: i32) -> (i32, i32) {
    %c0_i32 = arith.constant 0 : i32
    %c0_i32_0 = arith.constant 0 : i32
    return %arg0, %c0_i32 : i32, i32
  }
  func.func @transform_1(%arg0: i32) -> (i32, i32) {
    %c0_i32 = arith.constant 0 : i32
    %c0_i32_0 = arith.constant 0 : i32
    %c0_i32_1 = arith.constant 0 : i32
    return %c0_i32, %c0_i32_0 : i32, i32
  }
  func.func @transform_2(%arg0: i32) -> (i32, i32) {
    %c0_i32 = arith.constant 0 : i32
    %c0_i32_0 = arith.constant 0 : i32
    %c0_i32_1 = arith.constant 0 : i32
    return %c0_i32, %c0_i32_0 : i32, i32
  }
  func.func @transform_3(%arg0: i32) -> (i32, i32) {
    %c0_i32 = arith.constant 0 : i32
    %c0_i32_0 = arith.constant 0 : i32
    %c0_i32_1 = arith.constant 0 : i32
    return %c0_i32, %c0_i32_0 : i32, i32
  }
  func.func @transform_4(%arg0: i32) -> (i32, i32) {
    %c0_i32 = arith.constant 0 : i32
    %c0_i32_0 = arith.constant 0 : i32
    %c0_i32_1 = arith.constant 0 : i32
    return %c0_i32, %c0_i32_0 : i32, i32
  }
  func.func @transform_5(%arg0: i32) -> (i32, i32) {
    %c0_i32 = arith.constant 0 : i32
    %c0_i32_0 = arith.constant 0 : i32
    return %arg0, %c0_i32 : i32, i32
  }
}

module attributes {stable_mosaic.version = 11 : i64} {
  func.func @_mlp2_kernel(%arg0: i32, %arg1: memref<16x64xbf16, #tpu.memory_space<vmem>>, %arg2: memref<64x64xbf16, #tpu.memory_space<vmem>>, %arg3: memref<1x64xf32, #tpu.memory_space<vmem>>, %arg4: memref<64x64xbf16, #tpu.memory_space<vmem>>, %arg5: memref<1x64xf32, #tpu.memory_space<vmem>>, %arg6: memref<16x64xbf16, #tpu.memory_space<vmem>>) attributes {dimension_semantics = [#tpu.dimension_semantics<parallel>], iteration_bounds = array<i64: 1>, scalar_prefetch = 0 : i64, scratch_operands = 0 : i64, tpu.core_type = #tpu.core_type<tc>, window_params = [{transform_indices = @transform_0, window_bounds = array<i64: 16, 64>}, {pipeline_mode = #tpu.pipeline_mode<synchronous>, transform_indices = @transform_1, window_bounds = array<i64: 64, 64>}, {pipeline_mode = #tpu.pipeline_mode<synchronous>, transform_indices = @transform_2, window_bounds = array<i64: 1, 64>}, {pipeline_mode = #tpu.pipeline_mode<synchronous>, transform_indices = @transform_3, window_bounds = array<i64: 64, 64>}, {pipeline_mode = #tpu.pipeline_mode<synchronous>, transform_indices = @transform_4, window_bounds = array<i64: 1, 64>}, {transform_indices = @transform_5, window_bounds = array<i64: 16, 64>}]} {
    %c0 = arith.constant 0 : index
    %c0_0 = arith.constant 0 : index
    %0 = vector.load %arg1[%c0, %c0_0] : memref<16x64xbf16, #tpu.memory_space<vmem>>, vector<16x64xbf16>
    %c0_1 = arith.constant 0 : index
    %c0_2 = arith.constant 0 : index
    %1 = vector.load %arg2[%c0_1, %c0_2] : memref<64x64xbf16, #tpu.memory_space<vmem>>, vector<64x64xbf16>
    %cst = arith.constant dense<0.000000e+00> : vector<16x64xf32>
    %2 = tpu.matmul %0, %1, %cst {dimension_numbers = #tpu.dot_dimension_numbers<[1], [0], [0], [1], [0, 0, 1, 1], [], []>} : vector<16x64xbf16>, vector<64x64xbf16>, vector<16x64xf32> -> vector<16x64xf32>
    %c0_3 = arith.constant 0 : index
    %c0_4 = arith.constant 0 : index
    %3 = vector.load %arg3[%c0_3, %c0_4] : memref<1x64xf32, #tpu.memory_space<vmem>>, vector<1x64xf32>
    %4 = vector.broadcast %3 : vector<1x64xf32> to vector<16x64xf32>
    %5 = arith.addf %2, %4 : vector<16x64xf32>
    %6 = arith.mulf %5, %5 : vector<16x64xf32>
    %7 = arith.mulf %5, %6 : vector<16x64xf32>
    %cst_5 = arith.constant 4.471500e-02 : f32
    %8 = vector.broadcast %cst_5 : f32 to vector<16x64xf32>
    %9 = arith.mulf %8, %7 : vector<16x64xf32>
    %10 = arith.addf %5, %9 : vector<16x64xf32>
    %cst_6 = arith.constant 0.797884583 : f32
    %11 = vector.broadcast %cst_6 : f32 to vector<16x64xf32>
    %12 = arith.mulf %11, %10 : vector<16x64xf32>
    %13 = math.tanh %12 : vector<16x64xf32>
    %cst_7 = arith.constant 1.000000e+00 : f32
    %14 = vector.broadcast %cst_7 : f32 to vector<16x64xf32>
    %15 = arith.addf %14, %13 : vector<16x64xf32>
    %cst_8 = arith.constant 5.000000e-01 : f32
    %16 = vector.broadcast %cst_8 : f32 to vector<16x64xf32>
    %17 = arith.mulf %16, %15 : vector<16x64xf32>
    %18 = arith.mulf %5, %17 : vector<16x64xf32>
    %19 = arith.truncf %18 : vector<16x64xf32> to vector<16x64xbf16>
    %c0_9 = arith.constant 0 : index
    %c0_10 = arith.constant 0 : index
    %20 = vector.load %arg4[%c0_9, %c0_10] : memref<64x64xbf16, #tpu.memory_space<vmem>>, vector<64x64xbf16>
    %cst_11 = arith.constant dense<0.000000e+00> : vector<16x64xf32>
    %21 = tpu.matmul %19, %20, %cst_11 {dimension_numbers = #tpu.dot_dimension_numbers<[1], [0], [0], [1], [0, 0, 1, 1], [], []>} : vector<16x64xbf16>, vector<64x64xbf16>, vector<16x64xf32> -> vector<16x64xf32>
    %c0_12 = arith.constant 0 : index
    %c0_13 = arith.constant 0 : index
    %22 = vector.load %arg5[%c0_12, %c0_13] : memref<1x64xf32, #tpu.memory_space<vmem>>, vector<1x64xf32>
    %23 = vector.broadcast %22 : vector<1x64xf32> to vector<16x64xf32>
    %24 = arith.addf %21, %23 : vector<16x64xf32>
    %25 = arith.truncf %24 : vector<16x64xf32> to vector<16x64xbf16>
    %c0_14 = arith.constant 0 : index
    %c0_15 = arith.constant 0 : index
    %26 = vector.load %arg6[%c0_14, %c0_15] : memref<16x64xbf16, #tpu.memory_space<vmem>>, vector<16x64xbf16>
    tpu.vector_store %arg6[%c0_14, %c0_15], %25 {strides = array<i32>} : memref<16x64xbf16, #tpu.memory_space<vmem>>, vector<16x64xbf16>,
    return
  }
  func.func @transform_0(%arg0: i32) -> (i32, i32) {
    %c0_i32 = arith.constant 0 : i32
    %c0_i32_0 = arith.constant 0 : i32
    return %arg0, %c0_i32 : i32, i32
  }
  func.func @transform_1(%arg0: i32) -> (i32, i32) {
    %c0_i32 = arith.constant 0 : i32
    %c0_i32_0 = arith.constant 0 : i32
    %c0_i32_1 = arith.constant 0 : i32
    return %c0_i32, %c0_i32_0 : i32, i32
  }
  func.func @transform_2(%arg0: i32) -> (i32, i32) {
    %c0_i32 = arith.constant 0 : i32
    %c0_i32_0 = arith.constant 0 : i32
    %c0_i32_1 = arith.constant 0 : i32
    return %c0_i32, %c0_i32_0 : i32, i32
  }
  func.func @transform_3(%arg0: i32) -> (i32, i32) {
    %c0_i32 = arith.constant 0 : i32
    %c0_i32_0 = arith.constant 0 : i32
    %c0_i32_1 = arith.constant 0 : i32
    return %c0_i32, %c0_i32_0 : i32, i32
  }
  func.func @transform_4(%arg0: i32) -> (i32, i32) {
    %c0_i32 = arith.constant 0 : i32
    %c0_i32_0 = arith.constant 0 : i32
    %c0_i32_1 = arith.constant 0 : i32
    return %c0_i32, %c0_i32_0 : i32, i32
  }
  func.func @transform_5(%arg0: i32) -> (i32, i32) {
    %c0_i32 = arith.constant 0 : i32
    %c0_i32_0 = arith.constant 0 : i32
    return %arg0, %c0_i32 : i32, i32
  }
}

module attributes {stable_mosaic.version = 11 : i64} {
  func.func @_linear_kernel(%arg0: i32, %arg1: i32, %arg2: i32, %arg3: memref<16x512xbf16, #tpu.memory_space<vmem>>, %arg4: memref<512x64xbf16, #tpu.memory_space<vmem>>, %arg5: memref<1x64xf32, #tpu.memory_space<vmem>>, %arg6: memref<16x64xf32, #tpu.memory_space<vmem>>) attributes {dimension_semantics = [#tpu.dimension_semantics<parallel>, #tpu.dimension_semantics<parallel>, #tpu.dimension_semantics<arbitrary>], iteration_bounds = array<i64: 1, 1, 1>, scalar_prefetch = 0 : i64, scratch_operands = 0 : i64, tpu.core_type = #tpu.core_type<tc>, window_params = [{transform_indices = @transform_0, window_bounds = array<i64: 16, 512>}, {transform_indices = @transform_1, window_bounds = array<i64: 512, 64>}, {transform_indices = @transform_2, window_bounds = array<i64: 1, 64>}, {transform_indices = @transform_3, window_bounds = array<i64: 16, 64>}]} {
    %c0 = arith.constant 0 : index
    %c0_0 = arith.constant 0 : index
    %0 = vector.load %arg3[%c0, %c0_0] : memref<16x512xbf16, #tpu.memory_space<vmem>>, vector<16x512xbf16>
    %c0_1 = arith.constant 0 : index
    %c0_2 = arith.constant 0 : index
    %1 = vector.load %arg4[%c0_1, %c0_2] : memref<512x64xbf16, #tpu.memory_space<vmem>>, vector<512x64xbf16>
    %cst = arith.constant dense<0.000000e+00> : vector<16x64xf32>
    %2 = tpu.matmul %0, %1, %cst {dimension_numbers = #tpu.dot_dimension_numbers<[1], [0], [0], [1], [0, 0, 1, 1], [], []>} : vector<16x512xbf16>, vector<512x64xbf16>, vector<16x64xf32> -> vector<16x64xf32>
    %c0_3 = arith.constant 0 : index
    %c0_4 = arith.constant 0 : index
    %3 = vector.load %arg5[%c0_3, %c0_4] : memref<1x64xf32, #tpu.memory_space<vmem>>, vector<1x64xf32>
    %4 = vector.broadcast %3 : vector<1x64xf32> to vector<16x64xf32>
    %5 = arith.addf %2, %4 : vector<16x64xf32>
    %c0_5 = arith.constant 0 : index
    %c0_6 = arith.constant 0 : index
    %6 = vector.load %arg6[%c0_5, %c0_6] : memref<16x64xf32, #tpu.memory_space<vmem>>, vector<16x64xf32>
    tpu.vector_store %arg6[%c0_5, %c0_6], %5 {strides = array<i32>} : memref<16x64xf32, #tpu.memory_space<vmem>>, vector<16x64xf32>,
    return
  }
  func.func @transform_0(%arg0: i32, %arg1: i32, %arg2: i32) -> (i32, i32) {
    %c0_i32 = arith.constant 0 : i32
    return %arg0, %arg2 : i32, i32
  }
  func.func @transform_1(%arg0: i32, %arg1: i32, %arg2: i32) -> (i32, i32) {
    %c0_i32 = arith.constant 0 : i32
    return %arg2, %arg1 : i32, i32
  }
  func.func @transform_2(%arg0: i32, %arg1: i32, %arg2: i32) -> (i32, i32) {
    %c0_i32 = arith.constant 0 : i32
    %c0_i32_0 = arith.constant 0 : i32
    return %c0_i32, %arg1 : i32, i32
  }
  func.func @transform_3(%arg0: i32, %arg1: i32, %arg2: i32) -> (i32, i32) {
    %c0_i32 = arith.constant 0 : i32
    return %arg0, %arg1 : i32, i32
  }
}

module attributes {stable_mosaic.version = 11 : i64} {
  func.func @_trunk_head_kernel(%arg0: i32, %arg1: i32, %arg2: memref<1x8x8xbf16, #tpu.memory_space<vmem>>, %arg3: memref<1x1x64xf32, #tpu.memory_space<vmem>>, %arg4: memref<8x32xbf16, #tpu.memory_space<vmem>>, %arg5: memref<1x32xf32, #tpu.memory_space<vmem>>, %arg6: memref<32x32xbf16, #tpu.memory_space<vmem>>, %arg7: memref<1x32xf32, #tpu.memory_space<vmem>>, %arg8: memref<32x32xbf16, #tpu.memory_space<vmem>>, %arg9: memref<1x32xf32, #tpu.memory_space<vmem>>, %arg10: memref<32x64xbf16, #tpu.memory_space<vmem>>, %arg11: memref<1x64xf32, #tpu.memory_space<vmem>>, %arg12: memref<64x128xbf16, #tpu.memory_space<vmem>>, %arg13: memref<1x128xf32, #tpu.memory_space<vmem>>, %arg14: memref<1x8x128xf32, #tpu.memory_space<vmem>>) attributes {dimension_semantics = [#tpu.dimension_semantics<parallel>, #tpu.dimension_semantics<parallel>], iteration_bounds = array<i64: 2, 1>, scalar_prefetch = 0 : i64, scratch_operands = 0 : i64, tpu.core_type = #tpu.core_type<tc>, window_params = [{transform_indices = @transform_0, window_bounds = array<i64: 1, 8, 8>}, {transform_indices = @transform_1, window_bounds = array<i64: 1, 1, 64>}, {pipeline_mode = #tpu.pipeline_mode<synchronous>, transform_indices = @transform_2, window_bounds = array<i64: 8, 32>}, {pipeline_mode = #tpu.pipeline_mode<synchronous>, transform_indices = @transform_3, window_bounds = array<i64: 1, 32>}, {pipeline_mode = #tpu.pipeline_mode<synchronous>, transform_indices = @transform_4, window_bounds = array<i64: 32, 32>}, {pipeline_mode = #tpu.pipeline_mode<synchronous>, transform_indices = @transform_5, window_bounds = array<i64: 1, 32>}, {pipeline_mode = #tpu.pipeline_mode<synchronous>, transform_indices = @transform_6, window_bounds = array<i64: 32, 32>}, {pipeline_mode = #tpu.pipeline_mode<synchronous>, transform_indices = @transform_7, window_bounds = array<i64: 1, 32>}, {pipeline_mode = #tpu.pipeline_mode<synchronous>, transform_indices = @transform_8, window_bounds = array<i64: 32, 64>}, {pipeline_mode = #tpu.pipeline_mode<synchronous>, transform_indices = @transform_9, window_bounds = array<i64: 1, 64>}, {pipeline_mode = #tpu.pipeline_mode<synchronous>, transform_indices = @transform_10, window_bounds = array<i64: 64, 128>}, {pipeline_mode = #tpu.pipeline_mode<synchronous>, transform_indices = @transform_11, window_bounds = array<i64: 1, 128>}, {transform_indices = @transform_12, window_bounds = array<i64: 1, 8, 128>}]} {
    %c0 = arith.constant 0 : index
    %c0_0 = arith.constant 0 : index
    %c0_1 = arith.constant 0 : index
    %0 = vector.load %arg2[%c0, %c0_0, %c0_1] : memref<1x8x8xbf16, #tpu.memory_space<vmem>>, vector<1x8x8xbf16>
    %1 = vector.shape_cast %0 : vector<1x8x8xbf16> to vector<8x8xbf16>
    %c0_2 = arith.constant 0 : index
    %c0_3 = arith.constant 0 : index
    %2 = vector.load %arg4[%c0_2, %c0_3] : memref<8x32xbf16, #tpu.memory_space<vmem>>, vector<8x32xbf16>
    %cst = arith.constant dense<0.000000e+00> : vector<8x32xf32>
    %3 = tpu.matmul %1, %2, %cst {dimension_numbers = #tpu.dot_dimension_numbers<[1], [0], [0], [1], [0, 0, 1, 1], [], []>} : vector<8x8xbf16>, vector<8x32xbf16>, vector<8x32xf32> -> vector<8x32xf32>
    %c0_4 = arith.constant 0 : index
    %c0_5 = arith.constant 0 : index
    %4 = vector.load %arg5[%c0_4, %c0_5] : memref<1x32xf32, #tpu.memory_space<vmem>>, vector<1x32xf32>
    %5 = vector.broadcast %4 : vector<1x32xf32> to vector<8x32xf32>
    %6 = arith.addf %3, %5 : vector<8x32xf32>
    %cst_6 = arith.constant 1.000000e+00 : f32
    %7 = vector.broadcast %cst_6 : f32 to vector<8x32xf32>
    %8 = arith.mulf %7, %6 : vector<8x32xf32>
    %9 = math.sin %8 : vector<8x32xf32>
    %10 = arith.truncf %9 : vector<8x32xf32> to vector<8x32xbf16>
    %c0_7 = arith.constant 0 : index
    %c0_8 = arith.constant 0 : index
    %11 = vector.load %arg6[%c0_7, %c0_8] : memref<32x32xbf16, #tpu.memory_space<vmem>>, vector<32x32xbf16>
    %cst_9 = arith.constant dense<0.000000e+00> : vector<8x32xf32>
    %12 = tpu.matmul %10, %11, %cst_9 {dimension_numbers = #tpu.dot_dimension_numbers<[1], [0], [0], [1], [0, 0, 1, 1], [], []>} : vector<8x32xbf16>, vector<32x32xbf16>, vector<8x32xf32> -> vector<8x32xf32>
    %c0_10 = arith.constant 0 : index
    %c0_11 = arith.constant 0 : index
    %13 = vector.load %arg7[%c0_10, %c0_11] : memref<1x32xf32, #tpu.memory_space<vmem>>, vector<1x32xf32>
    %14 = vector.broadcast %13 : vector<1x32xf32> to vector<8x32xf32>
    %15 = arith.addf %12, %14 : vector<8x32xf32>
    %cst_12 = arith.constant 1.000000e+00 : f32
    %16 = vector.broadcast %cst_12 : f32 to vector<8x32xf32>
    %17 = arith.mulf %16, %15 : vector<8x32xf32>
    %18 = math.sin %17 : vector<8x32xf32>
    %19 = arith.truncf %18 : vector<8x32xf32> to vector<8x32xbf16>
    %c0_13 = arith.constant 0 : index
    %c0_14 = arith.constant 0 : index
    %20 = vector.load %arg8[%c0_13, %c0_14] : memref<32x32xbf16, #tpu.memory_space<vmem>>, vector<32x32xbf16>
    %cst_15 = arith.constant dense<0.000000e+00> : vector<8x32xf32>
    %21 = tpu.matmul %19, %20, %cst_15 {dimension_numbers = #tpu.dot_dimension_numbers<[1], [0], [0], [1], [0, 0, 1, 1], [], []>} : vector<8x32xbf16>, vector<32x32xbf16>, vector<8x32xf32> -> vector<8x32xf32>
    %c0_16 = arith.constant 0 : index
    %c0_17 = arith.constant 0 : index
    %22 = vector.load %arg9[%c0_16, %c0_17] : memref<1x32xf32, #tpu.memory_space<vmem>>, vector<1x32xf32>
    %23 = vector.broadcast %22 : vector<1x32xf32> to vector<8x32xf32>
    %24 = arith.addf %21, %23 : vector<8x32xf32>
    %cst_18 = arith.constant 1.000000e+00 : f32
    %25 = vector.broadcast %cst_18 : f32 to vector<8x32xf32>
    %26 = arith.mulf %25, %24 : vector<8x32xf32>
    %27 = math.sin %26 : vector<8x32xf32>
    %28 = arith.truncf %27 : vector<8x32xf32> to vector<8x32xbf16>
    %c0_19 = arith.constant 0 : index
    %c0_20 = arith.constant 0 : index
    %29 = vector.load %arg10[%c0_19, %c0_20] : memref<32x64xbf16, #tpu.memory_space<vmem>>, vector<32x64xbf16>
    %cst_21 = arith.constant dense<0.000000e+00> : vector<8x64xf32>
    %30 = tpu.matmul %28, %29, %cst_21 {dimension_numbers = #tpu.dot_dimension_numbers<[1], [0], [0], [1], [0, 0, 1, 1], [], []>} : vector<8x32xbf16>, vector<32x64xbf16>, vector<8x64xf32> -> vector<8x64xf32>
    %c0_22 = arith.constant 0 : index
    %c0_23 = arith.constant 0 : index
    %31 = vector.load %arg11[%c0_22, %c0_23] : memref<1x64xf32, #tpu.memory_space<vmem>>, vector<1x64xf32>
    %32 = vector.broadcast %31 : vector<1x64xf32> to vector<8x64xf32>
    %33 = arith.addf %30, %32 : vector<8x64xf32>
    %c0_24 = arith.constant 0 : index
    %c0_25 = arith.constant 0 : index
    %c0_26 = arith.constant 0 : index
    %34 = vector.load %arg3[%c0_24, %c0_25, %c0_26] : memref<1x1x64xf32, #tpu.memory_space<vmem>>, vector<1x1x64xf32>
    %35 = vector.shape_cast %34 : vector<1x1x64xf32> to vector<1x64xf32>
    %36 = vector.broadcast %35 : vector<1x64xf32> to vector<8x64xf32>
    %37 = arith.mulf %36, %33 : vector<8x64xf32>
    %cst_27 = arith.constant 1.000000e+00 : f32
    %38 = vector.broadcast %cst_27 : f32 to vector<8x64xf32>
    %39 = arith.mulf %38, %37 : vector<8x64xf32>
    %40 = math.sin %39 : vector<8x64xf32>
    %41 = arith.truncf %40 : vector<8x64xf32> to vector<8x64xbf16>
    %c0_28 = arith.constant 0 : index
    %c0_29 = arith.constant 0 : index
    %42 = vector.load %arg12[%c0_28, %c0_29] : memref<64x128xbf16, #tpu.memory_space<vmem>>, vector<64x128xbf16>
    %cst_30 = arith.constant dense<0.000000e+00> : vector<8x128xf32>
    %43 = tpu.matmul %41, %42, %cst_30 {dimension_numbers = #tpu.dot_dimension_numbers<[1], [0], [0], [1], [0, 0, 1, 1], [], []>} : vector<8x64xbf16>, vector<64x128xbf16>, vector<8x128xf32> -> vector<8x128xf32>
    %c0_31 = arith.constant 0 : index
    %c0_32 = arith.constant 0 : index
    %44 = vector.load %arg13[%c0_31, %c0_32] : memref<1x128xf32, #tpu.memory_space<vmem>>, vector<1x128xf32>
    %45 = vector.broadcast %44 : vector<1x128xf32> to vector<8x128xf32>
    %46 = arith.addf %43, %45 : vector<8x128xf32>
    %c0_33 = arith.constant 0 : index
    %c0_34 = arith.constant 0 : index
    %c0_35 = arith.constant 0 : index
    %47 = vector.load %arg14[%c0_33, %c0_34, %c0_35] : memref<1x8x128xf32, #tpu.memory_space<vmem>>, vector<1x8x128xf32>
    %48 = vector.shape_cast %47 : vector<1x8x128xf32> to vector<8x128xf32>
    %49 = vector.shape_cast %46 : vector<8x128xf32> to vector<1x8x128xf32>
    tpu.vector_store %arg14[%c0_33, %c0_34, %c0_35], %49 {strides = array<i32>} : memref<1x8x128xf32, #tpu.memory_space<vmem>>, vector<1x8x128xf32>,
    return
  }
  func.func @transform_0(%arg0: i32, %arg1: i32) -> (i32, i32, i32) {
    %c0_i32 = arith.constant 0 : i32
    %c0_i32_0 = arith.constant 0 : i32
    return %arg0, %arg1, %c0_i32 : i32, i32, i32
  }
  func.func @transform_1(%arg0: i32, %arg1: i32) -> (i32, i32, i32) {
    %c0_i32 = arith.constant 0 : i32
    %c0_i32_0 = arith.constant 0 : i32
    %c0_i32_1 = arith.constant 0 : i32
    return %arg0, %c0_i32, %c0_i32_0 : i32, i32, i32
  }
  func.func @transform_2(%arg0: i32, %arg1: i32) -> (i32, i32) {
    %c0_i32 = arith.constant 0 : i32
    %c0_i32_0 = arith.constant 0 : i32
    %c0_i32_1 = arith.constant 0 : i32
    return %c0_i32, %c0_i32_0 : i32, i32
  }
  func.func @transform_3(%arg0: i32, %arg1: i32) -> (i32, i32) {
    %c0_i32 = arith.constant 0 : i32
    %c0_i32_0 = arith.constant 0 : i32
    %c0_i32_1 = arith.constant 0 : i32
    return %c0_i32, %c0_i32_0 : i32, i32
  }
  func.func @transform_4(%arg0: i32, %arg1: i32) -> (i32, i32) {
    %c0_i32 = arith.constant 0 : i32
    %c0_i32_0 = arith.constant 0 : i32
    %c0_i32_1 = arith.constant 0 : i32
    return %c0_i32, %c0_i32_0 : i32, i32
  }
  func.func @transform_5(%arg0: i32, %arg1: i32) -> (i32, i32) {
    %c0_i32 = arith.constant 0 : i32
    %c0_i32_0 = arith.constant 0 : i32
    %c0_i32_1 = arith.constant 0 : i32
    return %c0_i32, %c0_i32_0 : i32, i32
  }
  func.func @transform_6(%arg0: i32, %arg1: i32) -> (i32, i32) {
    %c0_i32 = arith.constant 0 : i32
    %c0_i32_0 = arith.constant 0 : i32
    %c0_i32_1 = arith.constant 0 : i32
    return %c0_i32, %c0_i32_0 : i32, i32
  }
  func.func @transform_7(%arg0: i32, %arg1: i32) -> (i32, i32) {
    %c0_i32 = arith.constant 0 : i32
    %c0_i32_0 = arith.constant 0 : i32
    %c0_i32_1 = arith.constant 0 : i32
    return %c0_i32, %c0_i32_0 : i32, i32
  }
  func.func @transform_8(%arg0: i32, %arg1: i32) -> (i32, i32) {
    %c0_i32 = arith.constant 0 : i32
    %c0_i32_0 = arith.constant 0 : i32
    %c0_i32_1 = arith.constant 0 : i32
    return %c0_i32, %c0_i32_0 : i32, i32
  }
  func.func @transform_9(%arg0: i32, %arg1: i32) -> (i32, i32) {
    %c0_i32 = arith.constant 0 : i32
    %c0_i32_0 = arith.constant 0 : i32
    %c0_i32_1 = arith.constant 0 : i32
    return %c0_i32, %c0_i32_0 : i32, i32
  }
  func.func @transform_10(%arg0: i32, %arg1: i32) -> (i32, i32) {
    %c0_i32 = arith.constant 0 : i32
    %c0_i32_0 = arith.constant 0 : i32
    %c0_i32_1 = arith.constant 0 : i32
    return %c0_i32, %c0_i32_0 : i32, i32
  }
  func.func @transform_11(%arg0: i32, %arg1: i32) -> (i32, i32) {
    %c0_i32 = arith.constant 0 : i32
    %c0_i32_0 = arith.constant 0 : i32
    %c0_i32_1 = arith.constant 0 : i32
    return %c0_i32, %c0_i32_0 : i32, i32
  }
  func.func @transform_12(%arg0: i32, %arg1: i32) -> (i32, i32, i32) {
    %c0_i32 = arith.constant 0 : i32
    %c0_i32_0 = arith.constant 0 : i32
    return %arg0, %arg1, %c0_i32 : i32, i32, i32
  }
}

</mosaic_0001>

<llo_original>
// kernel: deeponet_forward.4
$region0: #{deeponet_forward.4}
  #allocation0 [shape = 'u32[]', space=smem, size = 0x4, offset = 0x4, fixed_abs, tag = 'smem constant byte address 0x4 - core index']
  #allocation1 [shape = 'u32[72,128]{1,0:T(1,128)}', space=vmem, size = 0x9000, scoped, tag = 'internal scratch']
  %s0 = inlined_call_operand.vmem [shape: bf16[4096,8], index: 0, kind: input, shape index: {}]
  %s1 = inlined_call_operand.vmem [shape: bf16[8,64], index: 1, kind: input, shape index: {}]
  %s2 = inlined_call_operand.vmem [shape: f32[1,64], index: 2, kind: input, shape index: {}]
  %s3 = inlined_call_operand.vmem [shape: bf16[64,64], index: 3, kind: input, shape index: {}]
  %s4 = inlined_call_operand.vmem [shape: f32[1,64], index: 4, kind: input, shape index: {}]
  %s5 = inlined_call_operand.vmem [shape: f32[4096,64], index: 5, kind: output, shape index: {}]
  %s6 = sld [smem:[#allocation0]]
  $region53: #{deeponet_forward.4} parent=0
    _
  %s8 = ssub.s32 1, %s6
  %s9 = scalar_select 0, %s8, %s6
  loop: start=0, step=1, limit=6
  $region2: #{deeponet_forward.4} parent=0 // loop_pre_header
    _
  $region3: #{deeponet_forward.4} parent=0 // loop_header
    %s11 = sphi 0, %s15
    %p12 = scmp.ge.s32.totalorder %s11, 6
    %s21 = sphi 0, %s23
    %s24 = sphi 0, %s21
    %s25 = sphi 0, %s24
    %s41 = sphi 0, %s25
    %s45 = sphi 0, %s45
    %s47 = sphi 0, %s45
    %s48 = sphi 0, %s47
    %s62 = sphi 0, %s48
    %s66 = sphi 0, %s66
    %s68 = sphi 0, %s66
    %s69 = sphi 0, %s68
    %s83 = sphi 0, %s69
    %s87 = sphi 0, %s87
    %s89 = sphi 0, %s87
    %s90 = sphi 0, %s89
    %s104 = sphi 0, %s90
    %s108 = sphi 0, %s108
    %s110 = sphi 0, %s108
    %s111 = sphi 0, %s110
    %s125 = sphi 0, %s111
    %s131 = sphi 0, %s133
    %s134 = sphi 0, %s131
    %s135 = sphi 0, %s134
    %s151 = sphi 0, %s135
  $region4: #{deeponet_forward.4} parent=0 // loop_header_branch
    %14 = sbr.rel (%p12) target = $region8
  $region5: #{deeponet_forward.4} parent=0 // loop_body
    %s16 = ssub.s32 %s11, 1
    %s17 = ssub.s32 %s11, 2
    %s18 = sadd.s32 %s11, 1
    %s19 = ssub.s32 %s11, %s18
    %p20 = scmp.eq.s32.totalorder %s19, 0
    %s22 = sadd.s32 %s21, 1
    %s23 = scalar_select %p20, %s21, %s22
    %p26 = pneg %p20
    %p27 = scmp.eq.s32.totalorder %s11, 3
    %p28 = por %p26, %p27
    %p29 = scmp.ne.s32.totalorder %s21, %s24
    %p30 = scmp.eq.s32.totalorder %s11, 0
    %p31 = por %p29, %p30
    %p32 = scmp.ne.s32.totalorder %s21, %s24
    %p33 = scmp.eq.s32.totalorder %s16, 3
    %p34 = por %p32, %p33
    %p35 = scmp.ne.s32.totalorder %s24, %s25
    %p36 = scmp.eq.s32.totalorder %s16, 0
    %p37 = por %p35, %p36
    %p38 = scmp.ne.s32.totalorder %s24, %s25
    %p39 = scmp.eq.s32.totalorder %s17, 3
    %p40 = por %p38, %p39
    %p42 = scmp.ne.s32.totalorder %s25, %s41
    %p43 = scmp.eq.s32.totalorder %s17, 0
    %p44 = por %p42, %p43
    %s46 = sadd.s32 %s45, 1
    %p49 = scmp.eq.s32.totalorder %s11, 3
    %p50 = scmp.ne.s32.totalorder %s45, %s47
    %p51 = scmp.eq.s32.totalorder %s11, 0
    %p52 = por %p50, %p51
    %p53 = scmp.ne.s32.totalorder %s45, %s47
    %p54 = scmp.eq.s32.totalorder %s16, 3
    %p55 = por %p53, %p54
    %p56 = scmp.ne.s32.totalorder %s47, %s48
    %p57 = scmp.eq.s32.totalorder %s16, 0
    %p58 = por %p56, %p57
    %p59 = scmp.ne.s32.totalorder %s47, %s48
    %p60 = scmp.eq.s32.totalorder %s17, 3
    %p61 = por %p59, %p60
    %p63 = scmp.ne.s32.totalorder %s48, %s62
    %p64 = scmp.eq.s32.totalorder %s17, 0
    %p65 = por %p63, %p64
    %s67 = sadd.s32 %s66, 1
    %p70 = scmp.eq.s32.totalorder %s11, 3
    %p71 = scmp.ne.s32.totalorder %s66, %s68
    %p72 = scmp.eq.s32.totalorder %s11, 0
    %p73 = por %p71, %p72
    %p74 = scmp.ne.s32.totalorder %s66, %s68
    %p75 = scmp.eq.s32.totalorder %s16, 3
    %p76 = por %p74, %p75
    %p77 = scmp.ne.s32.totalorder %s68, %s69
    %p78 = scmp.eq.s32.totalorder %s16, 0
    %p79 = por %p77, %p78
    %p80 = scmp.ne.s32.totalorder %s68, %s69
    %p81 = scmp.eq.s32.totalorder %s17, 3
    %p82 = por %p80, %p81
    %p84 = scmp.ne.s32.totalorder %s69, %s83
    %p85 = scmp.eq.s32.totalorder %s17, 0
    %p86 = por %p84, %p85
    %s88 = sadd.s32 %s87, 1
    %p91 = scmp.eq.s32.totalorder %s11, 3
    %p92 = scmp.ne.s32.totalorder %s87, %s89
    %p93 = scmp.eq.s32.totalorder %s11, 0
    %p94 = por %p92, %p93
    %p95 = scmp.ne.s32.totalorder %s87, %s89
    %p96 = scmp.eq.s32.totalorder %s16, 3
    %p97 = por %p95, %p96
    %p98 = scmp.ne.s32.totalorder %s89, %s90
    %p99 = scmp.eq.s32.totalorder %s16, 0
    %p100 = por %p98, %p99
    %p101 = scmp.ne.s32.totalorder %s89, %s90
    %p102 = scmp.eq.s32.totalorder %s17, 3
    %p103 = por %p101, %p102
    %p105 = scmp.ne.s32.totalorder %s90, %s104
    %p106 = scmp.eq.s32.totalorder %s17, 0
    %p107 = por %p105, %p106
    %s109 = sadd.s32 %s108, 1
    %p112 = scmp.eq.s32.totalorder %s11, 3
    %p113 = scmp.ne.s32.totalorder %s108, %s110
    %p114 = scmp.eq.s32.totalorder %s11, 0
    %p115 = por %p113, %p114
    %p116 = scmp.ne.s32.totalorder %s108, %s110
    %p117 = scmp.eq.s32.totalorder %s16, 3
    %p118 = por %p116, %p117
    %p119 = scmp.ne.s32.totalorder %s110, %s111
    %p120 = scmp.eq.s32.totalorder %s16, 0
    %p121 = por %p119, %p120
    %p122 = scmp.ne.s32.totalorder %s110, %s111
    %p123 = scmp.eq.s32.totalorder %s17, 3
    %p124 = por %p122, %p123
    %p126 = scmp.ne.s32.totalorder %s111, %s125
    %p127 = scmp.eq.s32.totalorder %s17, 0
    %p128 = por %p126, %p127
    %s129 = ssub.s32 %s11, %s18
    %p130 = scmp.eq.s32.totalorder %s129, 0
    %s132 = sadd.s32 %s131, 1
    %s133 = scalar_select %p130, %s131, %s132
    %p136 = pneg %p130
    %p137 = scmp.eq.s32.totalorder %s11, 3
    %p138 = por %p136, %p137
    %p139 = scmp.ne.s32.totalorder %s131, %s134
    %p140 = scmp.eq.s32.totalorder %s11, 0
    %p141 = por %p139, %p140
    %p142 = scmp.ne.s32.totalorder %s131, %s134
    %p143 = scmp.eq.s32.totalorder %s16, 3
    %p144 = por %p142, %p143
    %p145 = scmp.ne.s32.totalorder %s134, %s135
    %p146 = scmp.eq.s32.totalorder %s16, 0
    %p147 = por %p145, %p146
    %p148 = scmp.ne.s32.totalorder %s134, %s135
    %p149 = scmp.eq.s32.totalorder %s17, 3
    %p150 = por %p148, %p149
    %p152 = scmp.ne.s32.totalorder %s135, %s151
    %p153 = scmp.eq.s32.totalorder %s17, 0
    %p154 = por %p152, %p153
    %p155 = scmp.le.s32.totalorder 1, %s11
    %p156 = scmp.lt.s32.totalorder %s11, 5
    %p157 = pnand %p155, %p156
    %p158 = pneg %p157
    // Predicated region
    $region9: #{deeponet_forward.4} parent=5 // pred_check
      _
    $region10: #{deeponet_forward.4} parent=5 // pred_check_branch
      %160 = sbr.rel (%p157) target = $region12
    $region11: #{deeponet_forward.4} parent=5 // pred_region
      %s161 = ssub.s32 %s11, 1
      // Predicated region
      $region13: #{deeponet_forward.4} parent=11 // pred_check
        %p162 = pneg %p58
      $region14: #{deeponet_forward.4} parent=11 // pred_check_branch
        %164 = sbr.rel (%p162) target = $region16
      $region15: #{deeponet_forward.4} parent=11 // pred_region
        _
      $region16: #{deeponet_forward.4} parent=11 // pred_fallthru
        _
      // Predicated region
      $region17: #{deeponet_forward.4} parent=11 // pred_check
        %p165 = pneg %p79
      $region18: #{deeponet_forward.4} parent=11 // pred_check_branch
        %167 = sbr.rel (%p165) target = $region20
      $region19: #{deeponet_forward.4} parent=11 // pred_region
        _
      $region20: #{deeponet_forward.4} parent=11 // pred_fallthru
        _
      // Predicated region
      $region21: #{deeponet_forward.4} parent=11 // pred_check
        %p168 = pneg %p100
      $region22: #{deeponet_forward.4} parent=11 // pred_check_branch
        %170 = sbr.rel (%p168) target = $region24
      $region23: #{deeponet_forward.4} parent=11 // pred_region
        _
      $region24: #{deeponet_forward.4} parent=11 // pred_fallthru
        _
      // Predicated region
      $region25: #{deeponet_forward.4} parent=11 // pred_check
        %p171 = pneg %p121
      $region26: #{deeponet_forward.4} parent=11 // pred_check_branch
        %173 = sbr.rel (%p171) target = $region28
      $region27: #{deeponet_forward.4} parent=11 // pred_region
        _
      $region28: #{deeponet_forward.4} parent=11 // pred_fallthru
        _
    $region12: #{deeponet_forward.4} parent=5 // pred_fallthru
      _
    %p174 = scmp.lt.s32.totalorder %s11, 4
    // Predicated region
    $region29: #{deeponet_forward.4} parent=5 // pred_check
      %p175 = pneg %p174
    $region30: #{deeponet_forward.4} parent=5 // pred_check_branch
      %177 = sbr.rel (%p175) target = $region32
    $region31: #{deeponet_forward.4} parent=5 // pred_region
      // Predicated region
      $region33: #{deeponet_forward.4} parent=31 // pred_check
        %p178 = pneg %p31
      $region34: #{deeponet_forward.4} parent=31 // pred_check_branch
        %180 = sbr.rel (%p178) target = $region36
      $region35: #{deeponet_forward.4} parent=31 // pred_region
        %s181 = smul.u32 128, %s11
        %p182 = scmp.lt.s32.totalorder %s181, 511
        %s183 = scalar_select %p182, %s181, 511
        %s184 = smul.addr %s183, 4
        %s185 = scalar_lea.vmem %s0, %s184
        %s186 = smul.u32 128, %s11
      $region36: #{deeponet_forward.4} parent=31 // pred_fallthru
        _
    $region32: #{deeponet_forward.4} parent=5 // pred_fallthru
      _
    %p187 = scmp.le.s32.totalorder 1, %s11
    %p188 = scmp.lt.s32.totalorder %s11, 5
    %p189 = pnand %p187, %p188
    %p190 = pneg %p189
    // Predicated region
    $region37: #{deeponet_forward.4} parent=5 // pred_check
      _
    $region38: #{deeponet_forward.4} parent=5 // pred_check_branch
      %192 = sbr.rel (%p189) target = $region40
    $region39: #{deeponet_forward.4} parent=5 // pred_region
      %s193 = ssub.s32 %s11, 1
      %s194 = smul.u32 128, %s16
      %p195 = scmp.lt.s32.totalorder %s194, 511
      %s196 = scalar_select %p195, %s194, 511
      %s197 = smul.addr %s196, 4
      %s198 = scalar_lea.vmem %s0, %s197
      %p199 = pneg %p37
      %p200 = pneg %p34
      %p201 = pneg %p58
      %p202 = pneg %p55
      %p203 = pneg %p79
      %p204 = pneg %p76
      %p205 = pneg %p100
      %p206 = pneg %p97
      %p207 = pneg %p121
      %p208 = pneg %p118
      %p209 = pneg %p147
      %p210 = pneg %p144
      %s211 = smul.u32 128, %s16
      %p212 = scmp.lt.s32.totalorder %s211, 511
      %s213 = scalar_select %p212, %s211, 511
      %s214 = smul.addr %s213, 8
      %s215 = scalar_lea.vmem %s5, %s214
      %s216 = smul.u32 128, %s16
      %p217 = scmp.lt.s32.totalorder %s216, 511
      %s218 = scalar_select %p217, %s216, 511
      %s219 = smul.addr %s218, 4
      %s220 = scalar_lea.vmem %s0, %s219
      %s221 = smul.u32 128, %s16
      %s222 = smul.u32 128, %s16
      %p223 = scmp.lt.s32.totalorder %s222, 511
      %s224 = scalar_select %p223, %s222, 511
      %s225 = smul.addr %s224, 8
      %s226 = scalar_lea.vmem %s5, %s225
      %s227 = smul.u32 128, %s16
      %v229 = vld [vmem:[%s220] sm:$0xf]
      %v230 = vld [vmem:[%s220 + $0x4] sm:$0xf]
      %v231 = vld [vmem:[%s220 + $0x8] sm:$0xf]
      %v232 = vld [vmem:[%s220 + $0xc] sm:$0xf]
      %v233 = vld [vmem:[%s220 + $0x10] sm:$0xf]
      %v234 = vld [vmem:[%s220 + $0x14] sm:$0xf]
      %v235 = vld [vmem:[%s220 + $0x18] sm:$0xf]
      %v236 = vld [vmem:[%s220 + $0x1c] sm:$0xf]
      %v237 = vld [vmem:[%s220 + $0x20] sm:$0xf]
      %v238 = vld [vmem:[%s220 + $0x24] sm:$0xf]
      %v239 = vld [vmem:[%s220 + $0x28] sm:$0xf]
      %v240 = vld [vmem:[%s220 + $0x2c] sm:$0xf]
      %v241 = vld [vmem:[%s220 + $0x30] sm:$0xf]
      %v242 = vld [vmem:[%s220 + $0x34] sm:$0xf]
      %v243 = vld [vmem:[%s220 + $0x38] sm:$0xf]
      %v244 = vld [vmem:[%s220 + $0x3c] sm:$0xf]
      %v245 = vld [vmem:[%s220 + $0x40] sm:$0xf]
      %v246 = vld [vmem:[%s220 + $0x44] sm:$0xf]
      %v247 = vld [vmem:[%s220 + $0x48] sm:$0xf]
      %v248 = vld [vmem:[%s220 + $0x4c] sm:$0xf]
      %v249 = vld [vmem:[%s220 + $0x50] sm:$0xf]
      %v250 = vld [vmem:[%s220 + $0x54] sm:$0xf]
      %v251 = vld [vmem:[%s220 + $0x58] sm:$0xf]
      %v252 = vld [vmem:[%s220 + $0x5c] sm:$0xf]
      %v253 = vld [vmem:[%s220 + $0x60] sm:$0xf]
      %v254 = vld [vmem:[%s220 + $0x64] sm:$0xf]
      %v255 = vld [vmem:[%s220 + $0x68] sm:$0xf]
      %v256 = vld [vmem:[%s220 + $0x6c] sm:$0xf]
      %v257 = vld [vmem:[%s220 + $0x70] sm:$0xf]
      %v258 = vld [vmem:[%s220 + $0x74] sm:$0xf]
      %v259 = vld [vmem:[%s220 + $0x78] sm:$0xf]
      %v260 = vld [vmem:[%s220 + $0x7c] sm:$0xf]
      %v261 = vld [vmem:[%s220 + $0x80] sm:$0xf]
      %v262 = vld [vmem:[%s220 + $0x84] sm:$0xf]
      %v263 = vld [vmem:[%s220 + $0x88] sm:$0xf]
      %v264 = vld [vmem:[%s220 + $0x8c] sm:$0xf]
      %v265 = vld [vmem:[%s220 + $0x90] sm:$0xf]
      %v266 = vld [vmem:[%s220 + $0x94] sm:$0xf]
      %v267 = vld [vmem:[%s220 + $0x98] sm:$0xf]
      %v268 = vld [vmem:[%s220 + $0x9c] sm:$0xf]
      %v269 = vld [vmem:[%s220 + $0xa0] sm:$0xf]
      %v270 = vld [vmem:[%s220 + $0xa4] sm:$0xf]
      %v271 = vld [vmem:[%s220 + $0xa8] sm:$0xf]
      %v272 = vld [vmem:[%s220 + $0xac] sm:$0xf]
      %v273 = vld [vmem:[%s220 + $0xb0] sm:$0xf]
      %v274 = vld [vmem:[%s220 + $0xb4] sm:$0xf]
      %v275 = vld [vmem:[%s220 + $0xb8] sm:$0xf]
      %v276 = vld [vmem:[%s220 + $0xbc] sm:$0xf]
      %v277 = vld [vmem:[%s220 + $0xc0] sm:$0xf]
      %v278 = vld [vmem:[%s220 + $0xc4] sm:$0xf]
      %v279 = vld [vmem:[%s220 + $0xc8] sm:$0xf]
      %v280 = vld [vmem:[%s220 + $0xcc] sm:$0xf]
      %v281 = vld [vmem:[%s220 + $0xd0] sm:$0xf]
      %v282 = vld [vmem:[%s220 + $0xd4] sm:$0xf]
      %v283 = vld [vmem:[%s220 + $0xd8] sm:$0xf]
      %v284 = vld [vmem:[%s220 + $0xdc] sm:$0xf]
      %v285 = vld [vmem:[%s220 + $0xe0] sm:$0xf]
      %v286 = vld [vmem:[%s220 + $0xe4] sm:$0xf]
      %v287 = vld [vmem:[%s220 + $0xe8] sm:$0xf]
      %v288 = vld [vmem:[%s220 + $0xec] sm:$0xf]
      %v289 = vld [vmem:[%s220 + $0xf0] sm:$0xf]
      %v290 = vld [vmem:[%s220 + $0xf4] sm:$0xf]
      %v291 = vld [vmem:[%s220 + $0xf8] sm:$0xf]
      %v292 = vld [vmem:[%s220 + $0xfc] sm:$0xf]
      %v293 = vld [vmem:[%s220 + $0x100] sm:$0xf]
      %v294 = vld [vmem:[%s220 + $0x104] sm:$0xf]
      %v295 = vld [vmem:[%s220 + $0x108] sm:$0xf]
      %v296 = vld [vmem:[%s220 + $0x10c] sm:$0xf]
      %v297 = vld [vmem:[%s220 + $0x110] sm:$0xf]
      %v298 = vld [vmem:[%s220 + $0x114] sm:$0xf]
      %v299 = vld [vmem:[%s220 + $0x118] sm:$0xf]
      %v300 = vld [vmem:[%s220 + $0x11c] sm:$0xf]
      %v301 = vld [vmem:[%s220 + $0x120] sm:$0xf]
      %v302 = vld [vmem:[%s220 + $0x124] sm:$0xf]
      %v303 = vld [vmem:[%s220 + $0x128] sm:$0xf]
      %v304 = vld [vmem:[%s220 + $0x12c] sm:$0xf]
      %v305 = vld [vmem:[%s220 + $0x130] sm:$0xf]
      %v306 = vld [vmem:[%s220 + $0x134] sm:$0xf]
      %v307 = vld [vmem:[%s220 + $0x138] sm:$0xf]
      %v308 = vld [vmem:[%s220 + $0x13c] sm:$0xf]
      %v309 = vld [vmem:[%s220 + $0x140] sm:$0xf]
      %v310 = vld [vmem:[%s220 + $0x144] sm:$0xf]
      %v311 = vld [vmem:[%s220 + $0x148] sm:$0xf]
      %v312 = vld [vmem:[%s220 + $0x14c] sm:$0xf]
      %v313 = vld [vmem:[%s220 + $0x150] sm:$0xf]
      %v314 = vld [vmem:[%s220 + $0x154] sm:$0xf]
      %v315 = vld [vmem:[%s220 + $0x158] sm:$0xf]
      %v316 = vld [vmem:[%s220 + $0x15c] sm:$0xf]
      %v317 = vld [vmem:[%s220 + $0x160] sm:$0xf]
      %v318 = vld [vmem:[%s220 + $0x164] sm:$0xf]
      %v319 = vld [vmem:[%s220 + $0x168] sm:$0xf]
      %v320 = vld [vmem:[%s220 + $0x16c] sm:$0xf]
      %v321 = vld [vmem:[%s220 + $0x170] sm:$0xf]
      %v322 = vld [vmem:[%s220 + $0x174] sm:$0xf]
      %v323 = vld [vmem:[%s220 + $0x178] sm:$0xf]
      %v324 = vld [vmem:[%s220 + $0x17c] sm:$0xf]
      %v325 = vld [vmem:[%s220 + $0x180] sm:$0xf]
      %v326 = vld [vmem:[%s220 + $0x184] sm:$0xf]
      %v327 = vld [vmem:[%s220 + $0x188] sm:$0xf]
      %v328 = vld [vmem:[%s220 + $0x18c] sm:$0xf]
      %v329 = vld [vmem:[%s220 + $0x190] sm:$0xf]
      %v330 = vld [vmem:[%s220 + $0x194] sm:$0xf]
      %v331 = vld [vmem:[%s220 + $0x198] sm:$0xf]
      %v332 = vld [vmem:[%s220 + $0x19c] sm:$0xf]
      %v333 = vld [vmem:[%s220 + $0x1a0] sm:$0xf]
      %v334 = vld [vmem:[%s220 + $0x1a4] sm:$0xf]
      %v335 = vld [vmem:[%s220 + $0x1a8] sm:$0xf]
      %v336 = vld [vmem:[%s220 + $0x1ac] sm:$0xf]
      %v337 = vld [vmem:[%s220 + $0x1b0] sm:$0xf]
      %v338 = vld [vmem:[%s220 + $0x1b4] sm:$0xf]
      %v339 = vld [vmem:[%s220 + $0x1b8] sm:$0xf]
      %v340 = vld [vmem:[%s220 + $0x1bc] sm:$0xf]
      %v341 = vld [vmem:[%s220 + $0x1c0] sm:$0xf]
      %v342 = vld [vmem:[%s220 + $0x1c4] sm:$0xf]
      %v343 = vld [vmem:[%s220 + $0x1c8] sm:$0xf]
      %v344 = vld [vmem:[%s220 + $0x1cc] sm:$0xf]
      %v345 = vld [vmem:[%s220 + $0x1d0] sm:$0xf]
      %v346 = vld [vmem:[%s220 + $0x1d4] sm:$0xf]
      %v347 = vld [vmem:[%s220 + $0x1d8] sm:$0xf]
      %v348 = vld [vmem:[%s220 + $0x1dc] sm:$0xf]
      %v349 = vld [vmem:[%s220 + $0x1e0] sm:$0xf]
      %v350 = vld [vmem:[%s220 + $0x1e4] sm:$0xf]
      %v351 = vld [vmem:[%s220 + $0x1e8] sm:$0xf]
      %v352 = vld [vmem:[%s220 + $0x1ec] sm:$0xf]
      %v353 = vld [vmem:[%s220 + $0x1f0] sm:$0xf]
      %v354 = vld [vmem:[%s220 + $0x1f4] sm:$0xf]
      %v355 = vld [vmem:[%s220 + $0x1f8] sm:$0xf]
      %v356 = vld [vmem:[%s220 + $0x1fc] sm:$0xf]
      %v357 = vld [vmem:[%s1] sm:$0xf]
      %v358 = vld [vmem:[%s2] sm:$0x1]
      %v360 = vperm.slane %v358, 0
      %v490 = vunpack.c.l.b16 %v229
      %v491 = vunpack.c.l.b16 %v230
      %v492 = vunpack.c.l.b16 %v231
      %v493 = vunpack.c.l.b16 %v232
      %v494 = vunpack.c.l.b16 %v233
      %v495 = vunpack.c.l.b16 %v234
      %v496 = vunpack.c.l.b16 %v235
      %v497 = vunpack.c.l.b16 %v236
      %v498 = vunpack.c.l.b16 %v237
      %v499 = vunpack.c.l.b16 %v238
      %v500 = vunpack.c.l.b16 %v239
      %v501 = vunpack.c.l.b16 %v240
      %v502 = vunpack.c.l.b16 %v241
      %v503 = vunpack.c.l.b16 %v242
      %v504 = vunpack.c.l.b16 %v243
      %v505 = vunpack.c.l.b16 %v244
      %v506 = vunpack.c.l.b16 %v245
      %v507 = vunpack.c.l.b16 %v246
      %v508 = vunpack.c.l.b16 %v247
      %v509 = vunpack.c.l.b16 %v248
      %v510 = vunpack.c.l.b16 %v249
      %v511 = vunpack.c.l.b16 %v250
      %v512 = vunpack.c.l.b16 %v251
      %v513 = vunpack.c.l.b16 %v252
      %v514 = vunpack.c.l.b16 %v253
      %v515 = vunpack.c.l.b16 %v254
      %v516 = vunpack.c.l.b16 %v255
      %v517 = vunpack.c.l.b16 %v256
      %v518 = vunpack.c.l.b16 %v257
      %v519 = vunpack.c.l.b16 %v258
      %v520 = vunpack.c.l.b16 %v259
      %v521 = vunpack.c.l.b16 %v260
      %v522 = vunpack.c.l.b16 %v261
      %v523 = vunpack.c.l.b16 %v262
      %v524 = vunpack.c.l.b16 %v263
      %v525 = vunpack.c.l.b16 %v264
      %v526 = vunpack.c.l.b16 %v265
      %v527 = vunpack.c.l.b16 %v266
      %v528 = vunpack.c.l.b16 %v267
      %v529 = vunpack.c.l.b16 %v268
      %v530 = vunpack.c.l.b16 %v269
      %v531 = vunpack.c.l.b16 %v270
      %v532 = vunpack.c.l.b16 %v271
      %v533 = vunpack.c.l.b16 %v272
      %v534 = vunpack.c.l.b16 %v273
      %v535 = vunpack.c.l.b16 %v274
      %v536 = vunpack.c.l.b16 %v275
      %v537 = vunpack.c.l.b16 %v276
      %v538 = vunpack.c.l.b16 %v277
      %v539 = vunpack.c.l.b16 %v278
      %v540 = vunpack.c.l.b16 %v279
      %v541 = vunpack.c.l.b16 %v280
      %v542 = vunpack.c.l.b16 %v281
      %v543 = vunpack.c.l.b16 %v282
      %v544 = vunpack.c.l.b16 %v283
      %v545 = vunpack.c.l.b16 %v284
      %v546 = vunpack.c.l.b16 %v285
      %v547 = vunpack.c.l.b16 %v286
      %v548 = vunpack.c.l.b16 %v287
      %v549 = vunpack.c.l.b16 %v288
      %v550 = vunpack.c.l.b16 %v289
      %v551 = vunpack.c.l.b16 %v290
      %v552 = vunpack.c.l.b16 %v291
      %v553 = vunpack.c.l.b16 %v292
      %v554 = vunpack.c.l.b16 %v293
      %v555 = vunpack.c.l.b16 %v294
      %v556 = vunpack.c.l.b16 %v295
      %v557 = vunpack.c.l.b16 %v296
      %v558 = vunpack.c.l.b16 %v297
      %v559 = vunpack.c.l.b16 %v298
      %v560 = vunpack.c.l.b16 %v299
      %v561 = vunpack.c.l.b16 %v300
      %v562 = vunpack.c.l.b16 %v301
      %v563 = vunpack.c.l.b16 %v302
      %v564 = vunpack.c.l.b16 %v303
      %v565 = vunpack.c.l.b16 %v304
      %v566 = vunpack.c.l.b16 %v305
      %v567 = vunpack.c.l.b16 %v306
      %v568 = vunpack.c.l.b16 %v307
      %v569 = vunpack.c.l.b16 %v308
      %v570 = vunpack.c.l.b16 %v309
      %v571 = vunpack.c.l.b16 %v310
      %v572 = vunpack.c.l.b16 %v311
      %v573 = vunpack.c.l.b16 %v312
      %v574 = vunpack.c.l.b16 %v313
      %v575 = vunpack.c.l.b16 %v314
      %v576 = vunpack.c.l.b16 %v315
      %v577 = vunpack.c.l.b16 %v316
      %v578 = vunpack.c.l.b16 %v317
      %v579 = vunpack.c.l.b16 %v318
      %v580 = vunpack.c.l.b16 %v319
      %v581 = vunpack.c.l.b16 %v320
      %v582 = vunpack.c.l.b16 %v321
      %v583 = vunpack.c.l.b16 %v322
      %v584 = vunpack.c.l.b16 %v323
      %v585 = vunpack.c.l.b16 %v324
      %v586 = vunpack.c.l.b16 %v325
      %v587 = vunpack.c.l.b16 %v326
      %v588 = vunpack.c.l.b16 %v327
      %v589 = vunpack.c.l.b16 %v328
      %v590 = vunpack.c.l.b16 %v329
      %v591 = vunpack.c.l.b16 %v330
      %v592 = vunpack.c.l.b16 %v331
      %v593 = vunpack.c.l.b16 %v332
      %v594 = vunpack.c.l.b16 %v333
      %v595 = vunpack.c.l.b16 %v334
      %v596 = vunpack.c.l.b16 %v335
      %v597 = vunpack.c.l.b16 %v336
      %v598 = vunpack.c.l.b16 %v337
      %v599 = vunpack.c.l.b16 %v338
      %v600 = vunpack.c.l.b16 %v339
      %v601 = vunpack.c.l.b16 %v340
      %v602 = vunpack.c.l.b16 %v341
      %v603 = vunpack.c.l.b16 %v342
      %v604 = vunpack.c.l.b16 %v343
      %v605 = vunpack.c.l.b16 %v344
      %v606 = vunpack.c.l.b16 %v345
      %v607 = vunpack.c.l.b16 %v346
      %v608 = vunpack.c.l.b16 %v347
      %v609 = vunpack.c.l.b16 %v348
      %v610 = vunpack.c.l.b16 %v349
      %v611 = vunpack.c.l.b16 %v350
      %v612 = vunpack.c.l.b16 %v351
      %v613 = vunpack.c.l.b16 %v352
      %v614 = vunpack.c.l.b16 %v353
      %v615 = vunpack.c.l.b16 %v354
      %v616 = vunpack.c.l.b16 %v355
      %v617 = vunpack.c.l.b16 %v356
      %v618 = vpack.c.b16 %v491, %v490
      %v619 = vpack.c.b16 %v493, %v492
      %v620 = vpack.c.b16 %v495, %v494
      %v621 = vpack.c.b16 %v497, %v496
      %v622 = vpack.c.b16 %v499, %v498
      %v623 = vpack.c.b16 %v501, %v500
      %v624 = vpack.c.b16 %v503, %v502
      %v625 = vpack.c.b16 %v505, %v504
      %v626 = vpack.c.b16 %v507, %v506
      %v627 = vpack.c.b16 %v509, %v508
      %v628 = vpack.c.b16 %v511, %v510
      %v629 = vpack.c.b16 %v513, %v512
      %v630 = vpack.c.b16 %v515, %v514
      %v631 = vpack.c.b16 %v517, %v516
      %v632 = vpack.c.b16 %v519, %v518
      %v633 = vpack.c.b16 %v521, %v520
      %v634 = vpack.c.b16 %v523, %v522
      %v635 = vpack.c.b16 %v525, %v524
      %v636 = vpack.c.b16 %v527, %v526
      %v637 = vpack.c.b16 %v529, %v528
      %v638 = vpack.c.b16 %v531, %v530
      %v639 = vpack.c.b16 %v533, %v532
      %v640 = vpack.c.b16 %v535, %v534
      %v641 = vpack.c.b16 %v537, %v536
      %v642 = vpack.c.b16 %v539, %v538
      %v643 = vpack.c.b16 %v541, %v540
      %v644 = vpack.c.b16 %v543, %v542
      %v645 = vpack.c.b16 %v545, %v544
      %v646 = vpack.c.b16 %v547, %v546
      %v647 = vpack.c.b16 %v549, %v548
      %v648 = vpack.c.b16 %v551, %v550
      %v649 = vpack.c.b16 %v553, %v552
      %v650 = vpack.c.b16 %v555, %v554
      %v651 = vpack.c.b16 %v557, %v556
      %v652 = vpack.c.b16 %v559, %v558
      %v653 = vpack.c.b16 %v561, %v560
      %v654 = vpack.c.b16 %v563, %v562
      %v655 = vpack.c.b16 %v565, %v564
      %v656 = vpack.c.b16 %v567, %v566
      %v657 = vpack.c.b16 %v569, %v568
      %v658 = vpack.c.b16 %v571, %v570
      %v659 = vpack.c.b16 %v573, %v572
      %v660 = vpack.c.b16 %v575, %v574
      %v661 = vpack.c.b16 %v577, %v576
      %v662 = vpack.c.b16 %v579, %v578
      %v663 = vpack.c.b16 %v581, %v580
      %v664 = vpack.c.b16 %v583, %v582
      %v665 = vpack.c.b16 %v585, %v584
      %v666 = vpack.c.b16 %v587, %v586
      %v667 = vpack.c.b16 %v589, %v588
      %v668 = vpack.c.b16 %v591, %v590
      %v669 = vpack.c.b16 %v593, %v592
      %v670 = vpack.c.b16 %v595, %v594
      %v671 = vpack.c.b16 %v597, %v596
      %v672 = vpack.c.b16 %v599, %v598
      %v673 = vpack.c.b16 %v601, %v600
      %v674 = vpack.c.b16 %v603, %v602
      %v675 = vpack.c.b16 %v605, %v604
      %v676 = vpack.c.b16 %v607, %v606
      %v677 = vpack.c.b16 %v609, %v608
      %v678 = vpack.c.b16 %v611, %v610
      %v679 = vpack.c.b16 %v613, %v612
      %v680 = vpack.c.b16 %v615, %v614
      %v681 = vpack.c.b16 %v617, %v616
      %vm682 = vcmask 64512
      %v684 = vsel %vm682, %v618, 0
      %v687 = vsel %vm682, %v619, 0
      %v690 = vsel %vm682, %v620, 0
      %v693 = vsel %vm682, %v621, 0
      %v696 = vsel %vm682, %v622, 0
      %v699 = vsel %vm682, %v623, 0
      %v702 = vsel %vm682, %v624, 0
      %v705 = vsel %vm682, %v625, 0
      %v708 = vsel %vm682, %v626, 0
      %v711 = vsel %vm682, %v627, 0
      %v714 = vsel %vm682, %v628, 0
      %v717 = vsel %vm682, %v629, 0
      %v720 = vsel %vm682, %v630, 0
      %v723 = vsel %vm682, %v631, 0
      %v726 = vsel %vm682, %v632, 0
      %v729 = vsel %vm682, %v633, 0
      %v732 = vsel %vm682, %v634, 0
      %v735 = vsel %vm682, %v635, 0
      %v738 = vsel %vm682, %v636, 0
      %v741 = vsel %vm682, %v637, 0
      %v744 = vsel %vm682, %v638, 0
      %v747 = vsel %vm682, %v639, 0
      %v750 = vsel %vm682, %v640, 0
      %v753 = vsel %vm682, %v641, 0
      %v756 = vsel %vm682, %v642, 0
      %v759 = vsel %vm682, %v643, 0
      %v762 = vsel %vm682, %v644, 0
      %v765 = vsel %vm682, %v645, 0
      %v768 = vsel %vm682, %v646, 0
      %v771 = vsel %vm682, %v647, 0
      %v774 = vsel %vm682, %v648, 0
      %v777 = vsel %vm682, %v649, 0
      %v780 = vsel %vm682, %v650, 0
      %v783 = vsel %vm682, %v651, 0
      %v786 = vsel %vm682, %v652, 0
      %v789 = vsel %vm682, %v653, 0
      %v792 = vsel %vm682, %v654, 0
      %v795 = vsel %vm682, %v655, 0
      %v798 = vsel %vm682, %v656, 0
      %v801 = vsel %vm682, %v657, 0
      %v804 = vsel %vm682, %v658, 0
      %v807 = vsel %vm682, %v659, 0
      %v810 = vsel %vm682, %v660, 0
      %v813 = vsel %vm682, %v661, 0
      %v816 = vsel %vm682, %v662, 0
      %v819 = vsel %vm682, %v663, 0
      %v822 = vsel %vm682, %v664, 0
      %v825 = vsel %vm682, %v665, 0
      %v828 = vsel %vm682, %v666, 0
      %v831 = vsel %vm682, %v667, 0
      %v834 = vsel %vm682, %v668, 0
      %v837 = vsel %vm682, %v669, 0
      %v840 = vsel %vm682, %v670, 0
      %v843 = vsel %vm682, %v671, 0
      %v846 = vsel %vm682, %v672, 0
      %v849 = vsel %vm682, %v673, 0
      %v852 = vsel %vm682, %v674, 0
      %v855 = vsel %vm682, %v675, 0
      %v858 = vsel %vm682, %v676, 0
      %v861 = vsel %vm682, %v677, 0
      %v864 = vsel %vm682, %v678, 0
      %v867 = vsel %vm682, %v679, 0
      %v870 = vsel %vm682, %v680, 0
      %v873 = vsel %vm682, %v681, 0
      %vm875 = vcmask 1043456
      %v877 = vsel %vm875, %v357, 0
      %879 = vmatpush.bf16.msra.mxu0 0
      %880 = vmatpush.bf16.msra.mxu0 0
      %881 = vmatpush.bf16.msra.mxu0 0
      %882 = vmatpush.bf16.msra.mxu0 0
      %883 = vmatpush.bf16.msra.mxu0 0
      %884 = vmatpush.bf16.msra.mxu0 0
      %885 = vmatpush.bf16.msra.mxu0 0
      %886 = vmatpush.bf16.msra.mxu0 %v877
      %887 = vmatmul.bf16.gmra.mxu0 %v684
      %v888 = vpop.f32.mrf.mxu0
      %v889 = vadd.f32 %v360, %v888
      %v890 = vpop.f32.mrf.mxu0
      %v891 = vadd.f32 %v360, %v890
      %892 = vmatmul.bf16.gmra.mxu0 %v687
      %v893 = vpop.f32.mrf.mxu0
      %v894 = vadd.f32 %v360, %v893
      %v895 = vpop.f32.mrf.mxu0
      %v896 = vadd.f32 %v360, %v895
      %897 = vmatmul.bf16.gmra.mxu0 %v690
      %v898 = vpop.f32.mrf.mxu0
      %v899 = vadd.f32 %v360, %v898
      %v900 = vpop.f32.mrf.mxu0
      %v901 = vadd.f32 %v360, %v900
      %902 = vmatmul.bf16.gmra.mxu0 %v693
      %v903 = vpop.f32.mrf.mxu0
      %v904 = vadd.f32 %v360, %v903
      %v905 = vpop.f32.mrf.mxu0
      %v906 = vadd.f32 %v360, %v905
      %907 = vmatmul.bf16.gmra.mxu0 %v696
      %v908 = vpop.f32.mrf.mxu0
      %v909 = vadd.f32 %v360, %v908
      %v910 = vpop.f32.mrf.mxu0
      %v911 = vadd.f32 %v360, %v910
      %912 = vmatmul.bf16.gmra.mxu0 %v699
      %v913 = vpop.f32.mrf.mxu0
      %v914 = vadd.f32 %v360, %v913
      %v915 = vpop.f32.mrf.mxu0
      %v916 = vadd.f32 %v360, %v915
      %917 = vmatmul.bf16.gmra.mxu0 %v702
      %v918 = vpop.f32.mrf.mxu0
      %v919 = vadd.f32 %v360, %v918
      %v920 = vpop.f32.mrf.mxu0
      %v921 = vadd.f32 %v360, %v920
      %922 = vmatmul.bf16.gmra.mxu0 %v705
      %v923 = vpop.f32.mrf.mxu0
      %v924 = vadd.f32 %v360, %v923
      %v925 = vpop.f32.mrf.mxu0
      %v926 = vadd.f32 %v360, %v925
      %927 = vmatmul.bf16.gmra.mxu0 %v708
      %v928 = vpop.f32.mrf.mxu0
      %v929 = vadd.f32 %v360, %v928
      %v930 = vpop.f32.mrf.mxu0
      %v931 = vadd.f32 %v360, %v930
      %932 = vmatmul.bf16.gmra.mxu0 %v711
      %v933 = vpop.f32.mrf.mxu0
      %v934 = vadd.f32 %v360, %v933
      %v935 = vpop.f32.mrf.mxu0
      %v936 = vadd.f32 %v360, %v935
      %937 = vmatmul.bf16.gmra.mxu0 %v714
      %v938 = vpop.f32.mrf.mxu0
      %v939 = vadd.f32 %v360, %v938
      %v940 = vpop.f32.mrf.mxu0
      %v941 = vadd.f32 %v360, %v940
      %942 = vmatmul.bf16.gmra.mxu0 %v717
      %v943 = vpop.f32.mrf.mxu0
      %v944 = vadd.f32 %v360, %v943
      %v945 = vpop.f32.mrf.mxu0
      %v946 = vadd.f32 %v360, %v945
      %947 = vmatmul.bf16.gmra.mxu0 %v720
      %v948 = vpop.f32.mrf.mxu0
      %v949 = vadd.f32 %v360, %v948
      %v950 = vpop.f32.mrf.mxu0
      %v951 = vadd.f32 %v360, %v950
      %952 = vmatmul.bf16.gmra.mxu0 %v723
      %v953 = vpop.f32.mrf.mxu0
      %v954 = vadd.f32 %v360, %v953
      %v955 = vpop.f32.mrf.mxu0
      %v956 = vadd.f32 %v360, %v955
      %957 = vmatmul.bf16.gmra.mxu0 %v726
      %v958 = vpop.f32.mrf.mxu0
      %v959 = vadd.f32 %v360, %v958
      %v960 = vpop.f32.mrf.mxu0
      %v961 = vadd.f32 %v360, %v960
      %962 = vmatmul.bf16.gmra.mxu0 %v729
      %v963 = vpop.f32.mrf.mxu0
      %v964 = vadd.f32 %v360, %v963
      %v965 = vpop.f32.mrf.mxu0
      %v966 = vadd.f32 %v360, %v965
      %967 = vmatmul.bf16.gmra.mxu0 %v732
      %v968 = vpop.f32.mrf.mxu0
      %v969 = vadd.f32 %v360, %v968
      %v970 = vpop.f32.mrf.mxu0
      %v971 = vadd.f32 %v360, %v970
      %972 = vmatmul.bf16.gmra.mxu0 %v735
      %v973 = vpop.f32.mrf.mxu0
      %v974 = vadd.f32 %v360, %v973
      %v975 = vpop.f32.mrf.mxu0
      %v976 = vadd.f32 %v360, %v975
      %977 = vmatmul.bf16.gmra.mxu0 %v738
      %v978 = vpop.f32.mrf.mxu0
      %v979 = vadd.f32 %v360, %v978
      %v980 = vpop.f32.mrf.mxu0
      %v981 = vadd.f32 %v360, %v980
      %982 = vmatmul.bf16.gmra.mxu0 %v741
      %v983 = vpop.f32.mrf.mxu0
      %v984 = vadd.f32 %v360, %v983
      %v985 = vpop.f32.mrf.mxu0
      %v986 = vadd.f32 %v360, %v985
      %987 = vmatmul.bf16.gmra.mxu0 %v744
      %v988 = vpop.f32.mrf.mxu0
      %v989 = vadd.f32 %v360, %v988
      %v990 = vpop.f32.mrf.mxu0
      %v991 = vadd.f32 %v360, %v990
      %992 = vmatmul.bf16.gmra.mxu0 %v747
      %v993 = vpop.f32.mrf.mxu0
      %v994 = vadd.f32 %v360, %v993
      %v995 = vpop.f32.mrf.mxu0
      %v996 = vadd.f32 %v360, %v995
      %997 = vmatmul.bf16.gmra.mxu0 %v750
      %v998 = vpop.f32.mrf.mxu0
      %v999 = vadd.f32 %v360, %v998
      %v1000 = vpop.f32.mrf.mxu0
      %v1001 = vadd.f32 %v360, %v1000
      %1002 = vmatmul.bf16.gmra.mxu0 %v753
      %v1003 = vpop.f32.mrf.mxu0
      %v1004 = vadd.f32 %v360, %v1003
      %v1005 = vpop.f32.mrf.mxu0
      %v1006 = vadd.f32 %v360, %v1005
      %1007 = vmatmul.bf16.gmra.mxu0 %v756
      %v1008 = vpop.f32.mrf.mxu0
      %v1009 = vadd.f32 %v360, %v1008
      %v1010 = vpop.f32.mrf.mxu0
      %v1011 = vadd.f32 %v360, %v1010
      %1012 = vmatmul.bf16.gmra.mxu0 %v759
      %v1013 = vpop.f32.mrf.mxu0
      %v1014 = vadd.f32 %v360, %v1013
      %v1015 = vpop.f32.mrf.mxu0
      %v1016 = vadd.f32 %v360, %v1015
      %1017 = vmatmul.bf16.gmra.mxu0 %v762
      %v1018 = vpop.f32.mrf.mxu0
      %v1019 = vadd.f32 %v360, %v1018
      %v1020 = vpop.f32.mrf.mxu0
      %v1021 = vadd.f32 %v360, %v1020
      %1022 = vmatmul.bf16.gmra.mxu0 %v765
      %v1023 = vpop.f32.mrf.mxu0
      %v1024 = vadd.f32 %v360, %v1023
      %v1025 = vpop.f32.mrf.mxu0
      %v1026 = vadd.f32 %v360, %v1025
      %1027 = vmatmul.bf16.gmra.mxu0 %v768
      %v1028 = vpop.f32.mrf.mxu0
      %v1029 = vadd.f32 %v360, %v1028
      %v1030 = vpop.f32.mrf.mxu0
      %v1031 = vadd.f32 %v360, %v1030
      %1032 = vmatmul.bf16.gmra.mxu0 %v771
      %v1033 = vpop.f32.mrf.mxu0
      %v1034 = vadd.f32 %v360, %v1033
      %v1035 = vpop.f32.mrf.mxu0
      %v1036 = vadd.f32 %v360, %v1035
      %1037 = vmatmul.bf16.gmra.mxu0 %v774
      %v1038 = vpop.f32.mrf.mxu0
      %v1039 = vadd.f32 %v360, %v1038
      %v1040 = vpop.f32.mrf.mxu0
      %v1041 = vadd.f32 %v360, %v1040
      %1042 = vmatmul.bf16.gmra.mxu0 %v777
      %v1043 = vpop.f32.mrf.mxu0
      %v1044 = vadd.f32 %v360, %v1043
      %v1045 = vpop.f32.mrf.mxu0
      %v1046 = vadd.f32 %v360, %v1045
      %1047 = vmatmul.bf16.gmra.mxu0 %v780
      %v1048 = vpop.f32.mrf.mxu0
      %v1049 = vadd.f32 %v360, %v1048
      %v1050 = vpop.f32.mrf.mxu0
      %v1051 = vadd.f32 %v360, %v1050
      %1052 = vmatmul.bf16.gmra.mxu0 %v783
      %v1053 = vpop.f32.mrf.mxu0
      %v1054 = vadd.f32 %v360, %v1053
      %v1055 = vpop.f32.mrf.mxu0
      %v1056 = vadd.f32 %v360, %v1055
      %1057 = vmatmul.bf16.gmra.mxu0 %v786
      %v1058 = vpop.f32.mrf.mxu0
      %v1059 = vadd.f32 %v360, %v1058
      %v1060 = vpop.f32.mrf.mxu0
      %v1061 = vadd.f32 %v360, %v1060
      %1062 = vmatmul.bf16.gmra.mxu0 %v789
      %v1063 = vpop.f32.mrf.mxu0
      %v1064 = vadd.f32 %v360, %v1063
      %v1065 = vpop.f32.mrf.mxu0
      %v1066 = vadd.f32 %v360, %v1065
      %1067 = vmatmul.bf16.gmra.mxu0 %v792
      %v1068 = vpop.f32.mrf.mxu0
      %v1069 = vadd.f32 %v360, %v1068
      %v1070 = vpop.f32.mrf.mxu0
      %v1071 = vadd.f32 %v360, %v1070
      %1072 = vmatmul.bf16.gmra.mxu0 %v795
      %v1073 = vpop.f32.mrf.mxu0
      %v1074 = vadd.f32 %v360, %v1073
      %v1075 = vpop.f32.mrf.mxu0
      %v1076 = vadd.f32 %v360, %v1075
      %1077 = vmatmul.bf16.gmra.mxu0 %v798
      %v1078 = vpop.f32.mrf.mxu0
      %v1079 = vadd.f32 %v360, %v1078
      %v1080 = vpop.f32.mrf.mxu0
      %v1081 = vadd.f32 %v360, %v1080
      %1082 = vmatmul.bf16.gmra.mxu0 %v801
      %v1083 = vpop.f32.mrf.mxu0
      %v1084 = vadd.f32 %v360, %v1083
      %v1085 = vpop.f32.mrf.mxu0
      %v1086 = vadd.f32 %v360, %v1085
      %1087 = vmatmul.bf16.gmra.mxu0 %v804
      %v1088 = vpop.f32.mrf.mxu0
      %v1089 = vadd.f32 %v360, %v1088
      %v1090 = vpop.f32.mrf.mxu0
      %v1091 = vadd.f32 %v360, %v1090
      %1092 = vmatmul.bf16.gmra.mxu0 %v807
      %v1093 = vpop.f32.mrf.mxu0
      %v1094 = vadd.f32 %v360, %v1093
      %v1095 = vpop.f32.mrf.mxu0
      %v1096 = vadd.f32 %v360, %v1095
      %1097 = vmatmul.bf16.gmra.mxu0 %v810
      %v1098 = vpop.f32.mrf.mxu0
      %v1099 = vadd.f32 %v360, %v1098
      %v1100 = vpop.f32.mrf.mxu0
      %v1101 = vadd.f32 %v360, %v1100
      %1102 = vmatmul.bf16.gmra.mxu0 %v813
      %v1103 = vpop.f32.mrf.mxu0
      %v1104 = vadd.f32 %v360, %v1103
      %v1105 = vpop.f32.mrf.mxu0
      %v1106 = vadd.f32 %v360, %v1105
      %1107 = vmatmul.bf16.gmra.mxu0 %v816
      %v1108 = vpop.f32.mrf.mxu0
      %v1109 = vadd.f32 %v360, %v1108
      %v1110 = vpop.f32.mrf.mxu0
      %v1111 = vadd.f32 %v360, %v1110
      %1112 = vmatmul.bf16.gmra.mxu0 %v819
      %v1113 = vpop.f32.mrf.mxu0
      %v1114 = vadd.f32 %v360, %v1113
      %v1115 = vpop.f32.mrf.mxu0
      %v1116 = vadd.f32 %v360, %v1115
      %1117 = vmatmul.bf16.gmra.mxu0 %v822
      %v1118 = vpop.f32.mrf.mxu0
      %v1119 = vadd.f32 %v360, %v1118
      %v1120 = vpop.f32.mrf.mxu0
      %v1121 = vadd.f32 %v360, %v1120
      %1122 = vmatmul.bf16.gmra.mxu0 %v825
      %v1123 = vpop.f32.mrf.mxu0
      %v1124 = vadd.f32 %v360, %v1123
      %v1125 = vpop.f32.mrf.mxu0
      %v1126 = vadd.f32 %v360, %v1125
      %1127 = vmatmul.bf16.gmra.mxu0 %v828
      %v1128 = vpop.f32.mrf.mxu0
      %v1129 = vadd.f32 %v360, %v1128
      %v1130 = vpop.f32.mrf.mxu0
      %v1131 = vadd.f32 %v360, %v1130
      %1132 = vmatmul.bf16.gmra.mxu0 %v831
      %v1133 = vpop.f32.mrf.mxu0
      %v1134 = vadd.f32 %v360, %v1133
      %v1135 = vpop.f32.mrf.mxu0
      %v1136 = vadd.f32 %v360, %v1135
      %1137 = vmatmul.bf16.gmra.mxu0 %v834
      %v1138 = vpop.f32.mrf.mxu0
      %v1139 = vadd.f32 %v360, %v1138
      %v1140 = vpop.f32.mrf.mxu0
      %v1141 = vadd.f32 %v360, %v1140
      %1142 = vmatmul.bf16.gmra.mxu0 %v837
      %v1143 = vpop.f32.mrf.mxu0
      %v1144 = vadd.f32 %v360, %v1143
      %v1145 = vpop.f32.mrf.mxu0
      %v1146 = vadd.f32 %v360, %v1145
      %1147 = vmatmul.bf16.gmra.mxu0 %v840
      %v1148 = vpop.f32.mrf.mxu0
      %v1149 = vadd.f32 %v360, %v1148
      %v1150 = vpop.f32.mrf.mxu0
      %v1151 = vadd.f32 %v360, %v1150
      %1152 = vmatmul.bf16.gmra.mxu0 %v843
      %v1153 = vpop.f32.mrf.mxu0
      %v1154 = vadd.f32 %v360, %v1153
      %v1155 = vpop.f32.mrf.mxu0
      %v1156 = vadd.f32 %v360, %v1155
      %1157 = vmatmul.bf16.gmra.mxu0 %v846
      %v1158 = vpop.f32.mrf.mxu0
      %v1159 = vadd.f32 %v360, %v1158
      %v1160 = vpop.f32.mrf.mxu0
      %v1161 = vadd.f32 %v360, %v1160
      %1162 = vmatmul.bf16.gmra.mxu0 %v849
      %v1163 = vpop.f32.mrf.mxu0
      %v1164 = vadd.f32 %v360, %v1163
      %v1165 = vpop.f32.mrf.mxu0
      %v1166 = vadd.f32 %v360, %v1165
      %1167 = vmatmul.bf16.gmra.mxu0 %v852
      %v1168 = vpop.f32.mrf.mxu0
      %v1169 = vadd.f32 %v360, %v1168
      %v1170 = vpop.f32.mrf.mxu0
      %v1171 = vadd.f32 %v360, %v1170
      %1172 = vmatmul.bf16.gmra.mxu0 %v855
      %v1173 = vpop.f32.mrf.mxu0
      %v1174 = vadd.f32 %v360, %v1173
      %v1175 = vpop.f32.mrf.mxu0
      %v1176 = vadd.f32 %v360, %v1175
      %1177 = vmatmul.bf16.gmra.mxu0 %v858
      %v1178 = vpop.f32.mrf.mxu0
      %v1179 = vadd.f32 %v360, %v1178
      %v1180 = vpop.f32.mrf.mxu0
      %v1181 = vadd.f32 %v360, %v1180
      %1182 = vmatmul.bf16.gmra.mxu0 %v861
      %v1183 = vpop.f32.mrf.mxu0
      %v1184 = vadd.f32 %v360, %v1183
      %v1185 = vpop.f32.mrf.mxu0
      %v1186 = vadd.f32 %v360, %v1185
      %1187 = vmatmul.bf16.gmra.mxu0 %v864
      %v1188 = vpop.f32.mrf.mxu0
      %v1189 = vadd.f32 %v360, %v1188
      %v1190 = vpop.f32.mrf.mxu0
      %v1191 = vadd.f32 %v360, %v1190
      %1192 = vmatmul.bf16.gmra.mxu0 %v867
      %v1193 = vpop.f32.mrf.mxu0
      %v1194 = vadd.f32 %v360, %v1193
      %v1195 = vpop.f32.mrf.mxu0
      %v1196 = vadd.f32 %v360, %v1195
      %1197 = vmatmul.bf16.gmra.mxu0 %v870
      %v1198 = vpop.f32.mrf.mxu0
      %v1199 = vadd.f32 %v360, %v1198
      %v1200 = vpop.f32.mrf.mxu0
      %v1201 = vadd.f32 %v360, %v1200
      %1202 = vmatmul.bf16.gmra.mxu0 %v873
      %v1203 = vpop.f32.mrf.mxu0
      %v1204 = vadd.f32 %v360, %v1203
      %v1205 = vpop.f32.mrf.mxu0
      %v1206 = vadd.f32 %v360, %v1205
      %1207 = vdwg.mxu0
      %v1208 = vmul.f32 %v889, %v889
      %v1209 = vmul.f32 %v891, %v891
      %v1210 = vmul.f32 %v894, %v894
      %v1211 = vmul.f32 %v896, %v896
      %v1212 = vmul.f32 %v899, %v899
      %v1213 = vmul.f32 %v901, %v901
      %v1214 = vmul.f32 %v904, %v904
      %v1215 = vmul.f32 %v906, %v906
      %v1216 = vmul.f32 %v909, %v909
      %v1217 = vmul.f32 %v911, %v911
      %v1218 = vmul.f32 %v914, %v914
      %v1219 = vmul.f32 %v916, %v916
      %v1220 = vmul.f32 %v919, %v919
      %v1221 = vmul.f32 %v921, %v921
      %v1222 = vmul.f32 %v924, %v924
      %v1223 = vmul.f32 %v926, %v926
      %v1224 = vmul.f32 %v929, %v929
      %v1225 = vmul.f32 %v931, %v931
      %v1226 = vmul.f32 %v934, %v934
      %v1227 = vmul.f32 %v936, %v936
      %v1228 = vmul.f32 %v939, %v939
      %v1229 = vmul.f32 %v941, %v941
      %v1230 = vmul.f32 %v944, %v944
      %v1231 = vmul.f32 %v946, %v946
      %v1232 = vmul.f32 %v949, %v949
      %v1233 = vmul.f32 %v951, %v951
      %v1234 = vmul.f32 %v954, %v954
      %v1235 = vmul.f32 %v956, %v956
      %v1236 = vmul.f32 %v959, %v959
      %v1237 = vmul.f32 %v961, %v961
      %v1238 = vmul.f32 %v964, %v964
      %v1239 = vmul.f32 %v966, %v966
      %v1240 = vmul.f32 %v969, %v969
      %v1241 = vmul.f32 %v971, %v971
      %v1242 = vmul.f32 %v974, %v974
      %v1243 = vmul.f32 %v976, %v976
      %v1244 = vmul.f32 %v979, %v979
      %v1245 = vmul.f32 %v981, %v981
      %v1246 = vmul.f32 %v984, %v984
      %v1247 = vmul.f32 %v986, %v986
      %v1248 = vmul.f32 %v989, %v989
      %v1249 = vmul.f32 %v991, %v991
      %v1250 = vmul.f32 %v994, %v994
      %v1251 = vmul.f32 %v996, %v996
      %v1252 = vmul.f32 %v999, %v999
      %v1253 = vmul.f32 %v1001, %v1001
      %v1254 = vmul.f32 %v1004, %v1004
      %v1255 = vmul.f32 %v1006, %v1006
      %v1256 = vmul.f32 %v1009, %v1009
      %v1257 = vmul.f32 %v1011, %v1011
      %v1258 = vmul.f32 %v1014, %v1014
      %v1259 = vmul.f32 %v1016, %v1016
      %v1260 = vmul.f32 %v1019, %v1019
      %v1261 = vmul.f32 %v1021, %v1021
      %v1262 = vmul.f32 %v1024, %v1024
      %v1263 = vmul.f32 %v1026, %v1026
      %v1264 = vmul.f32 %v1029, %v1029
      %v1265 = vmul.f32 %v1031, %v1031
      %v1266 = vmul.f32 %v1034, %v1034
      %v1267 = vmul.f32 %v1036, %v1036
      %v1268 = vmul.f32 %v1039, %v1039
      %v1269 = vmul.f32 %v1041, %v1041
      %v1270 = vmul.f32 %v1044, %v1044
      %v1271 = vmul.f32 %v1046, %v1046
      %v1272 = vmul.f32 %v1049, %v1049
      %v1273 = vmul.f32 %v1051, %v1051
      %v1274 = vmul.f32 %v1054, %v1054
      %v1275 = vmul.f32 %v1056, %v1056
      %v1276 = vmul.f32 %v1059, %v1059
      %v1277 = vmul.f32 %v1061, %v1061
      %v1278 = vmul.f32 %v1064, %v1064
      %v1279 = vmul.f32 %v1066, %v1066
      %v1280 = vmul.f32 %v1069, %v1069
      %v1281 = vmul.f32 %v1071, %v1071
      %v1282 = vmul.f32 %v1074, %v1074
      %v1283 = vmul.f32 %v1076, %v1076
      %v1284 = vmul.f32 %v1079, %v1079
      %v1285 = vmul.f32 %v1081, %v1081
      %v1286 = vmul.f32 %v1084, %v1084
      %v1287 = vmul.f32 %v1086, %v1086
      %v1288 = vmul.f32 %v1089, %v1089
      %v1289 = vmul.f32 %v1091, %v1091
      %v1290 = vmul.f32 %v1094, %v1094
      %v1291 = vmul.f32 %v1096, %v1096
      %v1292 = vmul.f32 %v1099, %v1099
      %v1293 = vmul.f32 %v1101, %v1101
      %v1294 = vmul.f32 %v1104, %v1104
      %v1295 = vmul.f32 %v1106, %v1106
      %v1296 = vmul.f32 %v1109, %v1109
      %v1297 = vmul.f32 %v1111, %v1111
      %v1298 = vmul.f32 %v1114, %v1114
      %v1299 = vmul.f32 %v1116, %v1116
      %v1300 = vmul.f32 %v1119, %v1119
      %v1301 = vmul.f32 %v1121, %v1121
      %v1302 = vmul.f32 %v1124, %v1124
      %v1303 = vmul.f32 %v1126, %v1126
      %v1304 = vmul.f32 %v1129, %v1129
      %v1305 = vmul.f32 %v1131, %v1131
      %v1306 = vmul.f32 %v1134, %v1134
      %v1307 = vmul.f32 %v1136, %v1136
      %v1308 = vmul.f32 %v1139, %v1139
      %v1309 = vmul.f32 %v1141, %v1141
      %v1310 = vmul.f32 %v1144, %v1144
      %v1311 = vmul.f32 %v1146, %v1146
      %v1312 = vmul.f32 %v1149, %v1149
      %v1313 = vmul.f32 %v1151, %v1151
      %v1314 = vmul.f32 %v1154, %v1154
      %v1315 = vmul.f32 %v1156, %v1156
      %v1316 = vmul.f32 %v1159, %v1159
      %v1317 = vmul.f32 %v1161, %v1161
      %v1318 = vmul.f32 %v1164, %v1164
      %v1319 = vmul.f32 %v1166, %v1166
      %v1320 = vmul.f32 %v1169, %v1169
      %v1321 = vmul.f32 %v1171, %v1171
      %v1322 = vmul.f32 %v1174, %v1174
      %v1323 = vmul.f32 %v1176, %v1176
      %v1324 = vmul.f32 %v1179, %v1179
      %v1325 = vmul.f32 %v1181, %v1181
      %v1326 = vmul.f32 %v1184, %v1184
      %v1327 = vmul.f32 %v1186, %v1186
      %v1328 = vmul.f32 %v1189, %v1189
      %v1329 = vmul.f32 %v1191, %v1191
      %v1330 = vmul.f32 %v1194, %v1194
      %v1331 = vmul.f32 %v1196, %v1196
      %v1332 = vmul.f32 %v1199, %v1199
      %v1333 = vmul.f32 %v1201, %v1201
      %v1334 = vmul.f32 %v1204, %v1204
      %v1335 = vmul.f32 %v1206, %v1206
      %v1336 = vmul.f32 %v889, %v1208
      %v1337 = vmul.f32 %v891, %v1209
      %v1338 = vmul.f32 %v894, %v1210
      %v1339 = vmul.f32 %v896, %v1211
      %v1340 = vmul.f32 %v899, %v1212
      %v1341 = vmul.f32 %v901, %v1213
      %v1342 = vmul.f32 %v904, %v1214
      %v1343 = vmul.f32 %v906, %v1215
      %v1344 = vmul.f32 %v909, %v1216
      %v1345 = vmul.f32 %v911, %v1217
      %v1346 = vmul.f32 %v914, %v1218
      %v1347 = vmul.f32 %v916, %v1219
      %v1348 = vmul.f32 %v919, %v1220
      %v1349 = vmul.f32 %v921, %v1221
      %v1350 = vmul.f32 %v924, %v1222
      %v1351 = vmul.f32 %v926, %v1223
      %v1352 = vmul.f32 %v929, %v1224
      %v1353 = vmul.f32 %v931, %v1225
      %v1354 = vmul.f32 %v934, %v1226
      %v1355 = vmul.f32 %v936, %v1227
      %v1356 = vmul.f32 %v939, %v1228
      %v1357 = vmul.f32 %v941, %v1229
      %v1358 = vmul.f32 %v944, %v1230
      %v1359 = vmul.f32 %v946, %v1231
      %v1360 = vmul.f32 %v949, %v1232
      %v1361 = vmul.f32 %v951, %v1233
      %v1362 = vmul.f32 %v954, %v1234
      %v1363 = vmul.f32 %v956, %v1235
      %v1364 = vmul.f32 %v959, %v1236
      %v1365 = vmul.f32 %v961, %v1237
      %v1366 = vmul.f32 %v964, %v1238
      %v1367 = vmul.f32 %v966, %v1239
      %v1368 = vmul.f32 %v969, %v1240
      %v1369 = vmul.f32 %v971, %v1241
      %v1370 = vmul.f32 %v974, %v1242
      %v1371 = vmul.f32 %v976, %v1243
      %v1372 = vmul.f32 %v979, %v1244
      %v1373 = vmul.f32 %v981, %v1245
      %v1374 = vmul.f32 %v984, %v1246
      %v1375 = vmul.f32 %v986, %v1247
      %v1376 = vmul.f32 %v989, %v1248
      %v1377 = vmul.f32 %v991, %v1249
      %v1378 = vmul.f32 %v994, %v1250
      %v1379 = vmul.f32 %v996, %v1251
      %v1380 = vmul.f32 %v999, %v1252
      %v1381 = vmul.f32 %v1001, %v1253
      %v1382 = vmul.f32 %v1004, %v1254
      %v1383 = vmul.f32 %v1006, %v1255
      %v1384 = vmul.f32 %v1009, %v1256
      %v1385 = vmul.f32 %v1011, %v1257
      %v1386 = vmul.f32 %v1014, %v1258
      %v1387 = vmul.f32 %v1016, %v1259
      %v1388 = vmul.f32 %v1019, %v1260
      %v1389 = vmul.f32 %v1021, %v1261
      %v1390 = vmul.f32 %v1024, %v1262
      %v1391 = vmul.f32 %v1026, %v1263
      %v1392 = vmul.f32 %v1029, %v1264
      %v1393 = vmul.f32 %v1031, %v1265
      %v1394 = vmul.f32 %v1034, %v1266
      %v1395 = vmul.f32 %v1036, %v1267
      %v1396 = vmul.f32 %v1039, %v1268
      %v1397 = vmul.f32 %v1041, %v1269
      %v1398 = vmul.f32 %v1044, %v1270
      %v1399 = vmul.f32 %v1046, %v1271
      %v1400 = vmul.f32 %v1049, %v1272
      %v1401 = vmul.f32 %v1051, %v1273
      %v1402 = vmul.f32 %v1054, %v1274
      %v1403 = vmul.f32 %v1056, %v1275
      %v1404 = vmul.f32 %v1059, %v1276
      %v1405 = vmul.f32 %v1061, %v1277
      %v1406 = vmul.f32 %v1064, %v1278
      %v1407 = vmul.f32 %v1066, %v1279
      %v1408 = vmul.f32 %v1069, %v1280
      %v1409 = vmul.f32 %v1071, %v1281
      %v1410 = vmul.f32 %v1074, %v1282
      %v1411 = vmul.f32 %v1076, %v1283
      %v1412 = vmul.f32 %v1079, %v1284
      %v1413 = vmul.f32 %v1081, %v1285
      %v1414 = vmul.f32 %v1084, %v1286
      %v1415 = vmul.f32 %v1086, %v1287
      %v1416 = vmul.f32 %v1089, %v1288
      %v1417 = vmul.f32 %v1091, %v1289
      %v1418 = vmul.f32 %v1094, %v1290
      %v1419 = vmul.f32 %v1096, %v1291
      %v1420 = vmul.f32 %v1099, %v1292
      %v1421 = vmul.f32 %v1101, %v1293
      %v1422 = vmul.f32 %v1104, %v1294
      %v1423 = vmul.f32 %v1106, %v1295
      %v1424 = vmul.f32 %v1109, %v1296
      %v1425 = vmul.f32 %v1111, %v1297
      %v1426 = vmul.f32 %v1114, %v1298
      %v1427 = vmul.f32 %v1116, %v1299
      %v1428 = vmul.f32 %v1119, %v1300
      %v1429 = vmul.f32 %v1121, %v1301
      %v1430 = vmul.f32 %v1124, %v1302
      %v1431 = vmul.f32 %v1126, %v1303
      %v1432 = vmul.f32 %v1129, %v1304
      %v1433 = vmul.f32 %v1131, %v1305
      %v1434 = vmul.f32 %v1134, %v1306
      %v1435 = vmul.f32 %v1136, %v1307
      %v1436 = vmul.f32 %v1139, %v1308
      %v1437 = vmul.f32 %v1141, %v1309
      %v1438 = vmul.f32 %v1144, %v1310
      %v1439 = vmul.f32 %v1146, %v1311
      %v1440 = vmul.f32 %v1149, %v1312
      %v1441 = vmul.f32 %v1151, %v1313
      %v1442 = vmul.f32 %v1154, %v1314
      %v1443 = vmul.f32 %v1156, %v1315
      %v1444 = vmul.f32 %v1159, %v1316
      %v1445 = vmul.f32 %v1161, %v1317
      %v1446 = vmul.f32 %v1164, %v1318
      %v1447 = vmul.f32 %v1166, %v1319
      %v1448 = vmul.f32 %v1169, %v1320
      %v1449 = vmul.f32 %v1171, %v1321
      %v1450 = vmul.f32 %v1174, %v1322
      %v1451 = vmul.f32 %v1176, %v1323
      %v1452 = vmul.f32 %v1179, %v1324
      %v1453 = vmul.f32 %v1181, %v1325
      %v1454 = vmul.f32 %v1184, %v1326
      %v1455 = vmul.f32 %v1186, %v1327
      %v1456 = vmul.f32 %v1189, %v1328
      %v1457 = vmul.f32 %v1191, %v1329
      %v1458 = vmul.f32 %v1194, %v1330
      %v1459 = vmul.f32 %v1196, %v1331
      %v1460 = vmul.f32 %v1199, %v1332
      %v1461 = vmul.f32 %v1201, %v1333
      %v1462 = vmul.f32 %v1204, %v1334
      %v1463 = vmul.f32 %v1206, %v1335
      %v1464 = vmul.f32 %v1336, 0.044715
      %v1465 = vmul.f32 %v1337, 0.044715
      %v1466 = vmul.f32 %v1338, 0.044715
      %v1467 = vmul.f32 %v1339, 0.044715
      %v1468 = vmul.f32 %v1340, 0.044715
      %v1469 = vmul.f32 %v1341, 0.044715
      %v1470 = vmul.f32 %v1342, 0.044715
      %v1471 = vmul.f32 %v1343, 0.044715
      %v1472 = vmul.f32 %v1344, 0.044715
      %v1473 = vmul.f32 %v1345, 0.044715
      %v1474 = vmul.f32 %v1346, 0.044715
      %v1475 = vmul.f32 %v1347, 0.044715
      %v1476 = vmul.f32 %v1348, 0.044715
      %v1477 = vmul.f32 %v1349, 0.044715
      %v1478 = vmul.f32 %v1350, 0.044715
      %v1479 = vmul.f32 %v1351, 0.044715
      %v1480 = vmul.f32 %v1352, 0.044715
      %v1481 = vmul.f32 %v1353, 0.044715
      %v1482 = vmul.f32 %v1354, 0.044715
      %v1483 = vmul.f32 %v1355, 0.044715
      %v1484 = vmul.f32 %v1356, 0.044715
      %v1485 = vmul.f32 %v1357, 0.044715
      %v1486 = vmul.f32 %v1358, 0.044715
      %v1487 = vmul.f32 %v1359, 0.044715
      %v1488 = vmul.f32 %v1360, 0.044715
      %v1489 = vmul.f32 %v1361, 0.044715
      %v1490 = vmul.f32 %v1362, 0.044715
      %v1491 = vmul.f32 %v1363, 0.044715
      %v1492 = vmul.f32 %v1364, 0.044715
      %v1493 = vmul.f32 %v1365, 0.044715
      %v1494 = vmul.f32 %v1366, 0.044715
      %v1495 = vmul.f32 %v1367, 0.044715
      %v1496 = vmul.f32 %v1368, 0.044715
      %v1497 = vmul.f32 %v1369, 0.044715
      %v1498 = vmul.f32 %v1370, 0.044715
      %v1499 = vmul.f32 %v1371, 0.044715
      %v1500 = vmul.f32 %v1372, 0.044715
      %v1501 = vmul.f32 %v1373, 0.044715
      %v1502 = vmul.f32 %v1374, 0.044715
      %v1503 = vmul.f32 %v1375, 0.044715
      %v1504 = vmul.f32 %v1376, 0.044715
      %v1505 = vmul.f32 %v1377, 0.044715
      %v1506 = vmul.f32 %v1378, 0.044715
      %v1507 = vmul.f32 %v1379, 0.044715
      %v1508 = vmul.f32 %v1380, 0.044715
      %v1509 = vmul.f32 %v1381, 0.044715
      %v1510 = vmul.f32 %v1382, 0.044715
      %v1511 = vmul.f32 %v1383, 0.044715
      %v1512 = vmul.f32 %v1384, 0.044715
      %v1513 = vmul.f32 %v1385, 0.044715
      %v1514 = vmul.f32 %v1386, 0.044715
      %v1515 = vmul.f32 %v1387, 0.044715
      %v1516 = vmul.f32 %v1388, 0.044715
      %v1517 = vmul.f32 %v1389, 0.044715
      %v1518 = vmul.f32 %v1390, 0.044715
      %v1519 = vmul.f32 %v1391, 0.044715
      %v1520 = vmul.f32 %v1392, 0.044715
      %v1521 = vmul.f32 %v1393, 0.044715
      %v1522 = vmul.f32 %v1394, 0.044715
      %v1523 = vmul.f32 %v1395, 0.044715
      %v1524 = vmul.f32 %v1396, 0.044715
      %v1525 = vmul.f32 %v1397, 0.044715
      %v1526 = vmul.f32 %v1398, 0.044715
      %v1527 = vmul.f32 %v1399, 0.044715
      %v1528 = vmul.f32 %v1400, 0.044715
      %v1529 = vmul.f32 %v1401, 0.044715
      %v1530 = vmul.f32 %v1402, 0.044715
      %v1531 = vmul.f32 %v1403, 0.044715
      %v1532 = vmul.f32 %v1404, 0.044715
      %v1533 = vmul.f32 %v1405, 0.044715
      %v1534 = vmul.f32 %v1406, 0.044715
      %v1535 = vmul.f32 %v1407, 0.044715
      %v1536 = vmul.f32 %v1408, 0.044715
      %v1537 = vmul.f32 %v1409, 0.044715
      %v1538 = vmul.f32 %v1410, 0.044715
      %v1539 = vmul.f32 %v1411, 0.044715
      %v1540 = vmul.f32 %v1412, 0.044715
      %v1541 = vmul.f32 %v1413, 0.044715
      %v1542 = vmul.f32 %v1414, 0.044715
      %v1543 = vmul.f32 %v1415, 0.044715
      %v1544 = vmul.f32 %v1416, 0.044715
      %v1545 = vmul.f32 %v1417, 0.044715
      %v1546 = vmul.f32 %v1418, 0.044715
      %v1547 = vmul.f32 %v1419, 0.044715
      %v1548 = vmul.f32 %v1420, 0.044715
      %v1549 = vmul.f32 %v1421, 0.044715
      %v1550 = vmul.f32 %v1422, 0.044715
      %v1551 = vmul.f32 %v1423, 0.044715
      %v1552 = vmul.f32 %v1424, 0.044715
      %v1553 = vmul.f32 %v1425, 0.044715
      %v1554 = vmul.f32 %v1426, 0.044715
      %v1555 = vmul.f32 %v1427, 0.044715
      %v1556 = vmul.f32 %v1428, 0.044715
      %v1557 = vmul.f32 %v1429, 0.044715
      %v1558 = vmul.f32 %v1430, 0.044715
      %v1559 = vmul.f32 %v1431, 0.044715
      %v1560 = vmul.f32 %v1432, 0.044715
      %v1561 = vmul.f32 %v1433, 0.044715
      %v1562 = vmul.f32 %v1434, 0.044715
      %v1563 = vmul.f32 %v1435, 0.044715
      %v1564 = vmul.f32 %v1436, 0.044715
      %v1565 = vmul.f32 %v1437, 0.044715
      %v1566 = vmul.f32 %v1438, 0.044715
      %v1567 = vmul.f32 %v1439, 0.044715
      %v1568 = vmul.f32 %v1440, 0.044715
      %v1569 = vmul.f32 %v1441, 0.044715
      %v1570 = vmul.f32 %v1442, 0.044715
      %v1571 = vmul.f32 %v1443, 0.044715
      %v1572 = vmul.f32 %v1444, 0.044715
      %v1573 = vmul.f32 %v1445, 0.044715
      %v1574 = vmul.f32 %v1446, 0.044715
      %v1575 = vmul.f32 %v1447, 0.044715
      %v1576 = vmul.f32 %v1448, 0.044715
      %v1577 = vmul.f32 %v1449, 0.044715
      %v1578 = vmul.f32 %v1450, 0.044715
      %v1579 = vmul.f32 %v1451, 0.044715
      %v1580 = vmul.f32 %v1452, 0.044715
      %v1581 = vmul.f32 %v1453, 0.044715
      %v1582 = vmul.f32 %v1454, 0.044715
      %v1583 = vmul.f32 %v1455, 0.044715
      %v1584 = vmul.f32 %v1456, 0.044715
      %v1585 = vmul.f32 %v1457, 0.044715
      %v1586 = vmul.f32 %v1458, 0.044715
      %v1587 = vmul.f32 %v1459, 0.044715
      %v1588 = vmul.f32 %v1460, 0.044715
      %v1589 = vmul.f32 %v1461, 0.044715
      %v1590 = vmul.f32 %v1462, 0.044715
      %v1591 = vmul.f32 %v1463, 0.044715
      %v1592 = vadd.f32 %v889, %v1464
      %v1593 = vadd.f32 %v891, %v1465
      %v1594 = vadd.f32 %v894, %v1466
      %v1595 = vadd.f32 %v896, %v1467
      %v1596 = vadd.f32 %v899, %v1468
      %v1597 = vadd.f32 %v901, %v1469
      %v1598 = vadd.f32 %v904, %v1470
      %v1599 = vadd.f32 %v906, %v1471
      %v1600 = vadd.f32 %v909, %v1472
      %v1601 = vadd.f32 %v911, %v1473
      %v1602 = vadd.f32 %v914, %v1474
      %v1603 = vadd.f32 %v916, %v1475
      %v1604 = vadd.f32 %v919, %v1476
      %v1605 = vadd.f32 %v921, %v1477
      %v1606 = vadd.f32 %v924, %v1478
      %v1607 = vadd.f32 %v926, %v1479
      %v1608 = vadd.f32 %v929, %v1480
      %v1609 = vadd.f32 %v931, %v1481
      %v1610 = vadd.f32 %v934, %v1482
      %v1611 = vadd.f32 %v936, %v1483
      %v1612 = vadd.f32 %v939, %v1484
      %v1613 = vadd.f32 %v941, %v1485
      %v1614 = vadd.f32 %v944, %v1486
      %v1615 = vadd.f32 %v946, %v1487
      %v1616 = vadd.f32 %v949, %v1488
      %v1617 = vadd.f32 %v951, %v1489
      %v1618 = vadd.f32 %v954, %v1490
      %v1619 = vadd.f32 %v956, %v1491
      %v1620 = vadd.f32 %v959, %v1492
      %v1621 = vadd.f32 %v961, %v1493
      %v1622 = vadd.f32 %v964, %v1494
      %v1623 = vadd.f32 %v966, %v1495
      %v1624 = vadd.f32 %v969, %v1496
      %v1625 = vadd.f32 %v971, %v1497
      %v1626 = vadd.f32 %v974, %v1498
      %v1627 = vadd.f32 %v976, %v1499
      %v1628 = vadd.f32 %v979, %v1500
      %v1629 = vadd.f32 %v981, %v1501
      %v1630 = vadd.f32 %v984, %v1502
      %v1631 = vadd.f32 %v986, %v1503
      %v1632 = vadd.f32 %v989, %v1504
      %v1633 = vadd.f32 %v991, %v1505
      %v1634 = vadd.f32 %v994, %v1506
      %v1635 = vadd.f32 %v996, %v1507
      %v1636 = vadd.f32 %v999, %v1508
      %v1637 = vadd.f32 %v1001, %v1509
      %v1638 = vadd.f32 %v1004, %v1510
      %v1639 = vadd.f32 %v1006, %v1511
      %v1640 = vadd.f32 %v1009, %v1512
      %v1641 = vadd.f32 %v1011, %v1513
      %v1642 = vadd.f32 %v1014, %v1514
      %v1643 = vadd.f32 %v1016, %v1515
      %v1644 = vadd.f32 %v1019, %v1516
      %v1645 = vadd.f32 %v1021, %v1517
      %v1646 = vadd.f32 %v1024, %v1518
      %v1647 = vadd.f32 %v1026, %v1519
      %v1648 = vadd.f32 %v1029, %v1520
      %v1649 = vadd.f32 %v1031, %v1521
      %v1650 = vadd.f32 %v1034, %v1522
      %v1651 = vadd.f32 %v1036, %v1523
      %v1652 = vadd.f32 %v1039, %v1524
      %v1653 = vadd.f32 %v1041, %v1525
      %v1654 = vadd.f32 %v1044, %v1526
      %v1655 = vadd.f32 %v1046, %v1527
      %v1656 = vadd.f32 %v1049, %v1528
      %v1657 = vadd.f32 %v1051, %v1529
      %v1658 = vadd.f32 %v1054, %v1530
      %v1659 = vadd.f32 %v1056, %v1531
      %v1660 = vadd.f32 %v1059, %v1532
      %v1661 = vadd.f32 %v1061, %v1533
      %v1662 = vadd.f32 %v1064, %v1534
      %v1663 = vadd.f32 %v1066, %v1535
      %v1664 = vadd.f32 %v1069, %v1536
      %v1665 = vadd.f32 %v1071, %v1537
      %v1666 = vadd.f32 %v1074, %v1538
      %v1667 = vadd.f32 %v1076, %v1539
      %v1668 = vadd.f32 %v1079, %v1540
      %v1669 = vadd.f32 %v1081, %v1541
      %v1670 = vadd.f32 %v1084, %v1542
      %v1671 = vadd.f32 %v1086, %v1543
      %v1672 = vadd.f32 %v1089, %v1544
      %v1673 = vadd.f32 %v1091, %v1545
      %v1674 = vadd.f32 %v1094, %v1546
      %v1675 = vadd.f32 %v1096, %v1547
      %v1676 = vadd.f32 %v1099, %v1548
      %v1677 = vadd.f32 %v1101, %v1549
      %v1678 = vadd.f32 %v1104, %v1550
      %v1679 = vadd.f32 %v1106, %v1551
      %v1680 = vadd.f32 %v1109, %v1552
      %v1681 = vadd.f32 %v1111, %v1553
      %v1682 = vadd.f32 %v1114, %v1554
      %v1683 = vadd.f32 %v1116, %v1555
      %v1684 = vadd.f32 %v1119, %v1556
      %v1685 = vadd.f32 %v1121, %v1557
      %v1686 = vadd.f32 %v1124, %v1558
      %v1687 = vadd.f32 %v1126, %v1559
      %v1688 = vadd.f32 %v1129, %v1560
      %v1689 = vadd.f32 %v1131, %v1561
      %v1690 = vadd.f32 %v1134, %v1562
      %v1691 = vadd.f32 %v1136, %v1563
      %v1692 = vadd.f32 %v1139, %v1564
      %v1693 = vadd.f32 %v1141, %v1565
      %v1694 = vadd.f32 %v1144, %v1566
      %v1695 = vadd.f32 %v1146, %v1567
      %v1696 = vadd.f32 %v1149, %v1568
      %v1697 = vadd.f32 %v1151, %v1569
      %v1698 = vadd.f32 %v1154, %v1570
      %v1699 = vadd.f32 %v1156, %v1571
      %v1700 = vadd.f32 %v1159, %v1572
      %v1701 = vadd.f32 %v1161, %v1573
      %v1702 = vadd.f32 %v1164, %v1574
      %v1703 = vadd.f32 %v1166, %v1575
      %v1704 = vadd.f32 %v1169, %v1576
      %v1705 = vadd.f32 %v1171, %v1577
      %v1706 = vadd.f32 %v1174, %v1578
      %v1707 = vadd.f32 %v1176, %v1579
      %v1708 = vadd.f32 %v1179, %v1580
      %v1709 = vadd.f32 %v1181, %v1581
      %v1710 = vadd.f32 %v1184, %v1582
      %v1711 = vadd.f32 %v1186, %v1583
      %v1712 = vadd.f32 %v1189, %v1584
      %v1713 = vadd.f32 %v1191, %v1585
      %v1714 = vadd.f32 %v1194, %v1586
      %v1715 = vadd.f32 %v1196, %v1587
      %v1716 = vadd.f32 %v1199, %v1588
      %v1717 = vadd.f32 %v1201, %v1589
      %v1718 = vadd.f32 %v1204, %v1590
      %v1719 = vadd.f32 %v1206, %v1591
      %v1720 = vmul.f32 %v1592, 0.7978846
      %v1721 = vmul.f32 %v1593, 0.7978846
      %v1722 = vmul.f32 %v1594, 0.7978846
      %v1723 = vmul.f32 %v1595, 0.7978846
      %v1724 = vmul.f32 %v1596, 0.7978846
      %v1725 = vmul.f32 %v1597, 0.7978846
      %v1726 = vmul.f32 %v1598, 0.7978846
      %v1727 = vmul.f32 %v1599, 0.7978846
      %v1728 = vmul.f32 %v1600, 0.7978846
      %v1729 = vmul.f32 %v1601, 0.7978846
      %v1730 = vmul.f32 %v1602, 0.7978846
      %v1731 = vmul.f32 %v1603, 0.7978846
      %v1732 = vmul.f32 %v1604, 0.7978846
      %v1733 = vmul.f32 %v1605, 0.7978846
      %v1734 = vmul.f32 %v1606, 0.7978846
      %v1735 = vmul.f32 %v1607, 0.7978846
      %v1736 = vmul.f32 %v1608, 0.7978846
      %v1737 = vmul.f32 %v1609, 0.7978846
      %v1738 = vmul.f32 %v1610, 0.7978846
      %v1739 = vmul.f32 %v1611, 0.7978846
      %v1740 = vmul.f32 %v1612, 0.7978846
      %v1741 = vmul.f32 %v1613, 0.7978846
      %v1742 = vmul.f32 %v1614, 0.7978846
      %v1743 = vmul.f32 %v1615, 0.7978846
      %v1744 = vmul.f32 %v1616, 0.7978846
      %v1745 = vmul.f32 %v1617, 0.7978846
      %v1746 = vmul.f32 %v1618, 0.7978846
      %v1747 = vmul.f32 %v1619, 0.7978846
      %v1748 = vmul.f32 %v1620, 0.7978846
      %v1749 = vmul.f32 %v1621, 0.7978846
      %v1750 = vmul.f32 %v1622, 0.7978846
      %v1751 = vmul.f32 %v1623, 0.7978846
      %v1752 = vmul.f32 %v1624, 0.7978846
      %v1753 = vmul.f32 %v1625, 0.7978846
      %v1754 = vmul.f32 %v1626, 0.7978846
      %v1755 = vmul.f32 %v1627, 0.7978846
      %v1756 = vmul.f32 %v1628, 0.7978846
      %v1757 = vmul.f32 %v1629, 0.7978846
      %v1758 = vmul.f32 %v1630, 0.7978846
      %v1759 = vmul.f32 %v1631, 0.7978846
      %v1760 = vmul.f32 %v1632, 0.7978846
      %v1761 = vmul.f32 %v1633, 0.7978846
      %v1762 = vmul.f32 %v1634, 0.7978846
      %v1763 = vmul.f32 %v1635, 0.7978846
      %v1764 = vmul.f32 %v1636, 0.7978846
      %v1765 = vmul.f32 %v1637, 0.7978846
      %v1766 = vmul.f32 %v1638, 0.7978846
      %v1767 = vmul.f32 %v1639, 0.7978846
      %v1768 = vmul.f32 %v1640, 0.7978846
      %v1769 = vmul.f32 %v1641, 0.7978846
      %v1770 = vmul.f32 %v1642, 0.7978846
      %v1771 = vmul.f32 %v1643, 0.7978846
      %v1772 = vmul.f32 %v1644, 0.7978846
      %v1773 = vmul.f32 %v1645, 0.7978846
      %v1774 = vmul.f32 %v1646, 0.7978846
      %v1775 = vmul.f32 %v1647, 0.7978846
      %v1776 = vmul.f32 %v1648, 0.7978846
      %v1777 = vmul.f32 %v1649, 0.7978846
      %v1778 = vmul.f32 %v1650, 0.7978846
      %v1779 = vmul.f32 %v1651, 0.7978846
      %v1780 = vmul.f32 %v1652, 0.7978846
      %v1781 = vmul.f32 %v1653, 0.7978846
      %v1782 = vmul.f32 %v1654, 0.7978846
      %v1783 = vmul.f32 %v1655, 0.7978846
      %v1784 = vmul.f32 %v1656, 0.7978846
      %v1785 = vmul.f32 %v1657, 0.7978846
      %v1786 = vmul.f32 %v1658, 0.7978846
      %v1787 = vmul.f32 %v1659, 0.7978846
      %v1788 = vmul.f32 %v1660, 0.7978846
      %v1789 = vmul.f32 %v1661, 0.7978846
      %v1790 = vmul.f32 %v1662, 0.7978846
      %v1791 = vmul.f32 %v1663, 0.7978846
      %v1792 = vmul.f32 %v1664, 0.7978846
      %v1793 = vmul.f32 %v1665, 0.7978846
      %v1794 = vmul.f32 %v1666, 0.7978846
      %v1795 = vmul.f32 %v1667, 0.7978846
      %v1796 = vmul.f32 %v1668, 0.7978846
      %v1797 = vmul.f32 %v1669, 0.7978846
      %v1798 = vmul.f32 %v1670, 0.7978846
      %v1799 = vmul.f32 %v1671, 0.7978846
      %v1800 = vmul.f32 %v1672, 0.7978846
      %v1801 = vmul.f32 %v1673, 0.7978846
      %v1802 = vmul.f32 %v1674, 0.7978846
      %v1803 = vmul.f32 %v1675, 0.7978846
      %v1804 = vmul.f32 %v1676, 0.7978846
      %v1805 = vmul.f32 %v1677, 0.7978846
      %v1806 = vmul.f32 %v1678, 0.7978846
      %v1807 = vmul.f32 %v1679, 0.7978846
      %v1808 = vmul.f32 %v1680, 0.7978846
      %v1809 = vmul.f32 %v1681, 0.7978846
      %v1810 = vmul.f32 %v1682, 0.7978846
      %v1811 = vmul.f32 %v1683, 0.7978846
      %v1812 = vmul.f32 %v1684, 0.7978846
      %v1813 = vmul.f32 %v1685, 0.7978846
      %v1814 = vmul.f32 %v1686, 0.7978846
      %v1815 = vmul.f32 %v1687, 0.7978846
      %v1816 = vmul.f32 %v1688, 0.7978846
      %v1817 = vmul.f32 %v1689, 0.7978846
      %v1818 = vmul.f32 %v1690, 0.7978846
      %v1819 = vmul.f32 %v1691, 0.7978846
      %v1820 = vmul.f32 %v1692, 0.7978846
      %v1821 = vmul.f32 %v1693, 0.7978846
      %v1822 = vmul.f32 %v1694, 0.7978846
      %v1823 = vmul.f32 %v1695, 0.7978846
      %v1824 = vmul.f32 %v1696, 0.7978846
      %v1825 = vmul.f32 %v1697, 0.7978846
      %v1826 = vmul.f32 %v1698, 0.7978846
      %v1827 = vmul.f32 %v1699, 0.7978846
      %v1828 = vmul.f32 %v1700, 0.7978846
      %v1829 = vmul.f32 %v1701, 0.7978846
      %v1830 = vmul.f32 %v1702, 0.7978846
      %v1831 = vmul.f32 %v1703, 0.7978846
      %v1832 = vmul.f32 %v1704, 0.7978846
      %v1833 = vmul.f32 %v1705, 0.7978846
      %v1834 = vmul.f32 %v1706, 0.7978846
      %v1835 = vmul.f32 %v1707, 0.7978846
      %v1836 = vmul.f32 %v1708, 0.7978846
      %v1837 = vmul.f32 %v1709, 0.7978846
      %v1838 = vmul.f32 %v1710, 0.7978846
      %v1839 = vmul.f32 %v1711, 0.7978846
      %v1840 = vmul.f32 %v1712, 0.7978846
      %v1841 = vmul.f32 %v1713, 0.7978846
      %v1842 = vmul.f32 %v1714, 0.7978846
      %v1843 = vmul.f32 %v1715, 0.7978846
      %v1844 = vmul.f32 %v1716, 0.7978846
      %v1845 = vmul.f32 %v1717, 0.7978846
      %v1846 = vmul.f32 %v1718, 0.7978846
      %v1847 = vmul.f32 %v1719, 0.7978846
      %v1848 = vtanh.pop %v1720
      %v1849 = vtanh.pop %v1721
      %v1850 = vtanh.pop %v1722
      %v1851 = vtanh.pop %v1723
      %v1852 = vtanh.pop %v1724
      %v1853 = vtanh.pop %v1725
      %v1854 = vtanh.pop %v1726
      %v1855 = vtanh.pop %v1727
      %v1856 = vtanh.pop %v1728
      %v1857 = vtanh.pop %v1729
      %v1858 = vtanh.pop %v1730
      %v1859 = vtanh.pop %v1731
      %v1860 = vtanh.pop %v1732
      %v1861 = vtanh.pop %v1733
      %v1862 = vtanh.pop %v1734
      %v1863 = vtanh.pop %v1735
      %v1864 = vtanh.pop %v1736
      %v1865 = vtanh.pop %v1737
      %v1866 = vtanh.pop %v1738
      %v1867 = vtanh.pop %v1739
      %v1868 = vtanh.pop %v1740
      %v1869 = vtanh.pop %v1741
      %v1870 = vtanh.pop %v1742
      %v1871 = vtanh.pop %v1743
      %v1872 = vtanh.pop %v1744
      %v1873 = vtanh.pop %v1745
      %v1874 = vtanh.pop %v1746
      %v1875 = vtanh.pop %v1747
      %v1876 = vtanh.pop %v1748
      %v1877 = vtanh.pop %v1749
      %v1878 = vtanh.pop %v1750
      %v1879 = vtanh.pop %v1751
      %v1880 = vtanh.pop %v1752
      %v1881 = vtanh.pop %v1753
      %v1882 = vtanh.pop %v1754
      %v1883 = vtanh.pop %v1755
      %v1884 = vtanh.pop %v1756
      %v1885 = vtanh.pop %v1757
      %v1886 = vtanh.pop %v1758
      %v1887 = vtanh.pop %v1759
      %v1888 = vtanh.pop %v1760
      %v1889 = vtanh.pop %v1761
      %v1890 = vtanh.pop %v1762
      %v1891 = vtanh.pop %v1763
      %v1892 = vtanh.pop %v1764
      %v1893 = vtanh.pop %v1765
      %v1894 = vtanh.pop %v1766
      %v1895 = vtanh.pop %v1767
      %v1896 = vtanh.pop %v1768
      %v1897 = vtanh.pop %v1769
      %v1898 = vtanh.pop %v1770
      %v1899 = vtanh.pop %v1771
      %v1900 = vtanh.pop %v1772
      %v1901 = vtanh.pop %v1773
      %v1902 = vtanh.pop %v1774
      %v1903 = vtanh.pop %v1775
      %v1904 = vtanh.pop %v1776
      %v1905 = vtanh.pop %v1777
      %v1906 = vtanh.pop %v1778
      %v1907 = vtanh.pop %v1779
      %v1908 = vtanh.pop %v1780
      %v1909 = vtanh.pop %v1781
      %v1910 = vtanh.pop %v1782
      %v1911 = vtanh.pop %v1783
      %v1912 = vtanh.pop %v1784
      %v1913 = vtanh.pop %v1785
      %v1914 = vtanh.pop %v1786
      %v1915 = vtanh.pop %v1787
      %v1916 = vtanh.pop %v1788
      %v1917 = vtanh.pop %v1789
      %v1918 = vtanh.pop %v1790
      %v1919 = vtanh.pop %v1791
      %v1920 = vtanh.pop %v1792
      %v1921 = vtanh.pop %v1793
      %v1922 = vtanh.pop %v1794
      %v1923 = vtanh.pop %v1795
      %v1924 = vtanh.pop %v1796
      %v1925 = vtanh.pop %v1797
      %v1926 = vtanh.pop %v1798
      %v1927 = vtanh.pop %v1799
      %v1928 = vtanh.pop %v1800
      %v1929 = vtanh.pop %v1801
      %v1930 = vtanh.pop %v1802
      %v1931 = vtanh.pop %v1803
      %v1932 = vtanh.pop %v1804
      %v1933 = vtanh.pop %v1805
      %v1934 = vtanh.pop %v1806
      %v1935 = vtanh.pop %v1807
      %v1936 = vtanh.pop %v1808
      %v1937 = vtanh.pop %v1809
      %v1938 = vtanh.pop %v1810
      %v1939 = vtanh.pop %v1811
      %v1940 = vtanh.pop %v1812
      %v1941 = vtanh.pop %v1813
      %v1942 = vtanh.pop %v1814
      %v1943 = vtanh.pop %v1815
      %v1944 = vtanh.pop %v1816
      %v1945 = vtanh.pop %v1817
      %v1946 = vtanh.pop %v1818
      %v1947 = vtanh.pop %v1819
      %v1948 = vtanh.pop %v1820
      %v1949 = vtanh.pop %v1821
      %v1950 = vtanh.pop %v1822
      %v1951 = vtanh.pop %v1823
      %v1952 = vtanh.pop %v1824
      %v1953 = vtanh.pop %v1825
      %v1954 = vtanh.pop %v1826
      %v1955 = vtanh.pop %v1827
      %v1956 = vtanh.pop %v1828
      %v1957 = vtanh.pop %v1829
      %v1958 = vtanh.pop %v1830
      %v1959 = vtanh.pop %v1831
      %v1960 = vtanh.pop %v1832
      %v1961 = vtanh.pop %v1833
      %v1962 = vtanh.pop %v1834
      %v1963 = vtanh.pop %v1835
      %v1964 = vtanh.pop %v1836
      %v1965 = vtanh.pop %v1837
      %v1966 = vtanh.pop %v1838
      %v1967 = vtanh.pop %v1839
      %v1968 = vtanh.pop %v1840
      %v1969 = vtanh.pop %v1841
      %v1970 = vtanh.pop %v1842
      %v1971 = vtanh.pop %v1843
      %v1972 = vtanh.pop %v1844
      %v1973 = vtanh.pop %v1845
      %v1974 = vtanh.pop %v1846
      %v1975 = vtanh.pop %v1847
      %v1976 = vadd.f32 %v1848, 1.0
      %v1977 = vadd.f32 %v1849, 1.0
      %v1978 = vadd.f32 %v1850, 1.0
      %v1979 = vadd.f32 %v1851, 1.0
      %v1980 = vadd.f32 %v1852, 1.0
      %v1981 = vadd.f32 %v1853, 1.0
      %v1982 = vadd.f32 %v1854, 1.0
      %v1983 = vadd.f32 %v1855, 1.0
      %v1984 = vadd.f32 %v1856, 1.0
      %v1985 = vadd.f32 %v1857, 1.0
      %v1986 = vadd.f32 %v1858, 1.0
      %v1987 = vadd.f32 %v1859, 1.0
      %v1988 = vadd.f32 %v1860, 1.0
      %v1989 = vadd.f32 %v1861, 1.0
      %v1990 = vadd.f32 %v1862, 1.0
      %v1991 = vadd.f32 %v1863, 1.0
      %v1992 = vadd.f32 %v1864, 1.0
      %v1993 = vadd.f32 %v1865, 1.0
      %v1994 = vadd.f32 %v1866, 1.0
      %v1995 = vadd.f32 %v1867, 1.0
      %v1996 = vadd.f32 %v1868, 1.0
      %v1997 = vadd.f32 %v1869, 1.0
      %v1998 = vadd.f32 %v1870, 1.0
      %v1999 = vadd.f32 %v1871, 1.0
      %v2000 = vadd.f32 %v1872, 1.0
      %v2001 = vadd.f32 %v1873, 1.0
      %v2002 = vadd.f32 %v1874, 1.0
      %v2003 = vadd.f32 %v1875, 1.0
      %v2004 = vadd.f32 %v1876, 1.0
      %v2005 = vadd.f32 %v1877, 1.0
      %v2006 = vadd.f32 %v1878, 1.0
      %v2007 = vadd.f32 %v1879, 1.0
      %v2008 = vadd.f32 %v1880, 1.0
      %v2009 = vadd.f32 %v1881, 1.0
      %v2010 = vadd.f32 %v1882, 1.0
      %v2011 = vadd.f32 %v1883, 1.0
      %v2012 = vadd.f32 %v1884, 1.0
      %v2013 = vadd.f32 %v1885, 1.0
      %v2014 = vadd.f32 %v1886, 1.0
      %v2015 = vadd.f32 %v1887, 1.0
      %v2016 = vadd.f32 %v1888, 1.0
      %v2017 = vadd.f32 %v1889, 1.0
      %v2018 = vadd.f32 %v1890, 1.0
      %v2019 = vadd.f32 %v1891, 1.0
      %v2020 = vadd.f32 %v1892, 1.0
      %v2021 = vadd.f32 %v1893, 1.0
      %v2022 = vadd.f32 %v1894, 1.0
      %v2023 = vadd.f32 %v1895, 1.0
      %v2024 = vadd.f32 %v1896, 1.0
      %v2025 = vadd.f32 %v1897, 1.0
      %v2026 = vadd.f32 %v1898, 1.0
      %v2027 = vadd.f32 %v1899, 1.0
      %v2028 = vadd.f32 %v1900, 1.0
      %v2029 = vadd.f32 %v1901, 1.0
      %v2030 = vadd.f32 %v1902, 1.0
      %v2031 = vadd.f32 %v1903, 1.0
      %v2032 = vadd.f32 %v1904, 1.0
      %v2033 = vadd.f32 %v1905, 1.0
      %v2034 = vadd.f32 %v1906, 1.0
      %v2035 = vadd.f32 %v1907, 1.0
      %v2036 = vadd.f32 %v1908, 1.0
      %v2037 = vadd.f32 %v1909, 1.0
      %v2038 = vadd.f32 %v1910, 1.0
      %v2039 = vadd.f32 %v1911, 1.0
      %v2040 = vadd.f32 %v1912, 1.0
      %v2041 = vadd.f32 %v1913, 1.0
      %v2042 = vadd.f32 %v1914, 1.0
      %v2043 = vadd.f32 %v1915, 1.0
      %v2044 = vadd.f32 %v1916, 1.0
      %v2045 = vadd.f32 %v1917, 1.0
      %v2046 = vadd.f32 %v1918, 1.0
      %v2047 = vadd.f32 %v1919, 1.0
      %v2048 = vadd.f32 %v1920, 1.0
      %v2049 = vadd.f32 %v1921, 1.0
      %v2050 = vadd.f32 %v1922, 1.0
      %v2051 = vadd.f32 %v1923, 1.0
      %v2052 = vadd.f32 %v1924, 1.0
      %v2053 = vadd.f32 %v1925, 1.0
      %v2054 = vadd.f32 %v1926, 1.0
      %v2055 = vadd.f32 %v1927, 1.0
      %v2056 = vadd.f32 %v1928, 1.0
      %v2057 = vadd.f32 %v1929, 1.0
      %v2058 = vadd.f32 %v1930, 1.0
      %v2059 = vadd.f32 %v1931, 1.0
      %v2060 = vadd.f32 %v1932, 1.0
      %v2061 = vadd.f32 %v1933, 1.0
      %v2062 = vadd.f32 %v1934, 1.0
      %v2063 = vadd.f32 %v1935, 1.0
      %v2064 = vadd.f32 %v1936, 1.0
      %v2065 = vadd.f32 %v1937, 1.0
      %v2066 = vadd.f32 %v1938, 1.0
      %v2067 = vadd.f32 %v1939, 1.0
      %v2068 = vadd.f32 %v1940, 1.0
      %v2069 = vadd.f32 %v1941, 1.0
      %v2070 = vadd.f32 %v1942, 1.0
      %v2071 = vadd.f32 %v1943, 1.0
      %v2072 = vadd.f32 %v1944, 1.0
      %v2073 = vadd.f32 %v1945, 1.0
      %v2074 = vadd.f32 %v1946, 1.0
      %v2075 = vadd.f32 %v1947, 1.0
      %v2076 = vadd.f32 %v1948, 1.0
      %v2077 = vadd.f32 %v1949, 1.0
      %v2078 = vadd.f32 %v1950, 1.0
      %v2079 = vadd.f32 %v1951, 1.0
      %v2080 = vadd.f32 %v1952, 1.0
      %v2081 = vadd.f32 %v1953, 1.0
      %v2082 = vadd.f32 %v1954, 1.0
      %v2083 = vadd.f32 %v1955, 1.0
      %v2084 = vadd.f32 %v1956, 1.0
      %v2085 = vadd.f32 %v1957, 1.0
      %v2086 = vadd.f32 %v1958, 1.0
      %v2087 = vadd.f32 %v1959, 1.0
      %v2088 = vadd.f32 %v1960, 1.0
      %v2089 = vadd.f32 %v1961, 1.0
      %v2090 = vadd.f32 %v1962, 1.0
      %v2091 = vadd.f32 %v1963, 1.0
      %v2092 = vadd.f32 %v1964, 1.0
      %v2093 = vadd.f32 %v1965, 1.0
      %v2094 = vadd.f32 %v1966, 1.0
      %v2095 = vadd.f32 %v1967, 1.0
      %v2096 = vadd.f32 %v1968, 1.0
      %v2097 = vadd.f32 %v1969, 1.0
      %v2098 = vadd.f32 %v1970, 1.0
      %v2099 = vadd.f32 %v1971, 1.0
      %v2100 = vadd.f32 %v1972, 1.0
      %v2101 = vadd.f32 %v1973, 1.0
      %v2102 = vadd.f32 %v1974, 1.0
      %v2103 = vadd.f32 %v1975, 1.0
      %v2104 = vmul.f32 %v1976, 0.5
      %v2105 = vmul.f32 %v1977, 0.5
      %v2106 = vmul.f32 %v1978, 0.5
      %v2107 = vmul.f32 %v1979, 0.5
      %v2108 = vmul.f32 %v1980, 0.5
      %v2109 = vmul.f32 %v1981, 0.5
      %v2110 = vmul.f32 %v1982, 0.5
      %v2111 = vmul.f32 %v1983, 0.5
      %v2112 = vmul.f32 %v1984, 0.5
      %v2113 = vmul.f32 %v1985, 0.5
      %v2114 = vmul.f32 %v1986, 0.5
      %v2115 = vmul.f32 %v1987, 0.5
      %v2116 = vmul.f32 %v1988, 0.5
      %v2117 = vmul.f32 %v1989, 0.5
      %v2118 = vmul.f32 %v1990, 0.5
      %v2119 = vmul.f32 %v1991, 0.5
      %v2120 = vmul.f32 %v1992, 0.5
      %v2121 = vmul.f32 %v1993, 0.5
      %v2122 = vmul.f32 %v1994, 0.5
      %v2123 = vmul.f32 %v1995, 0.5
      %v2124 = vmul.f32 %v1996, 0.5
      %v2125 = vmul.f32 %v1997, 0.5
      %v2126 = vmul.f32 %v1998, 0.5
      %v2127 = vmul.f32 %v1999, 0.5
      %v2128 = vmul.f32 %v2000, 0.5
      %v2129 = vmul.f32 %v2001, 0.5
      %v2130 = vmul.f32 %v2002, 0.5
      %v2131 = vmul.f32 %v2003, 0.5
      %v2132 = vmul.f32 %v2004, 0.5
      %v2133 = vmul.f32 %v2005, 0.5
      %v2134 = vmul.f32 %v2006, 0.5
      %v2135 = vmul.f32 %v2007, 0.5
      %v2136 = vmul.f32 %v2008, 0.5
      %v2137 = vmul.f32 %v2009, 0.5
      %v2138 = vmul.f32 %v2010, 0.5
      %v2139 = vmul.f32 %v2011, 0.5
      %v2140 = vmul.f32 %v2012, 0.5
      %v2141 = vmul.f32 %v2013, 0.5
      %v2142 = vmul.f32 %v2014, 0.5
      %v2143 = vmul.f32 %v2015, 0.5
      %v2144 = vmul.f32 %v2016, 0.5
      %v2145 = vmul.f32 %v2017, 0.5
      %v2146 = vmul.f32 %v2018, 0.5
      %v2147 = vmul.f32 %v2019, 0.5
      %v2148 = vmul.f32 %v2020, 0.5
      %v2149 = vmul.f32 %v2021, 0.5
      %v2150 = vmul.f32 %v2022, 0.5
      %v2151 = vmul.f32 %v2023, 0.5
      %v2152 = vmul.f32 %v2024, 0.5
      %v2153 = vmul.f32 %v2025, 0.5
      %v2154 = vmul.f32 %v2026, 0.5
      %v2155 = vmul.f32 %v2027, 0.5
      %v2156 = vmul.f32 %v2028, 0.5
      %v2157 = vmul.f32 %v2029, 0.5
      %v2158 = vmul.f32 %v2030, 0.5
      %v2159 = vmul.f32 %v2031, 0.5
      %v2160 = vmul.f32 %v2032, 0.5
      %v2161 = vmul.f32 %v2033, 0.5
      %v2162 = vmul.f32 %v2034, 0.5
      %v2163 = vmul.f32 %v2035, 0.5
      %v2164 = vmul.f32 %v2036, 0.5
      %v2165 = vmul.f32 %v2037, 0.5
      %v2166 = vmul.f32 %v2038, 0.5
      %v2167 = vmul.f32 %v2039, 0.5
      %v2168 = vmul.f32 %v2040, 0.5
      %v2169 = vmul.f32 %v2041, 0.5
      %v2170 = vmul.f32 %v2042, 0.5
      %v2171 = vmul.f32 %v2043, 0.5
      %v2172 = vmul.f32 %v2044, 0.5
      %v2173 = vmul.f32 %v2045, 0.5
      %v2174 = vmul.f32 %v2046, 0.5
      %v2175 = vmul.f32 %v2047, 0.5
      %v2176 = vmul.f32 %v2048, 0.5
      %v2177 = vmul.f32 %v2049, 0.5
      %v2178 = vmul.f32 %v2050, 0.5
      %v2179 = vmul.f32 %v2051, 0.5
      %v2180 = vmul.f32 %v2052, 0.5
      %v2181 = vmul.f32 %v2053, 0.5
      %v2182 = vmul.f32 %v2054, 0.5
      %v2183 = vmul.f32 %v2055, 0.5
      %v2184 = vmul.f32 %v2056, 0.5
      %v2185 = vmul.f32 %v2057, 0.5
      %v2186 = vmul.f32 %v2058, 0.5
      %v2187 = vmul.f32 %v2059, 0.5
      %v2188 = vmul.f32 %v2060, 0.5
      %v2189 = vmul.f32 %v2061, 0.5
      %v2190 = vmul.f32 %v2062, 0.5
      %v2191 = vmul.f32 %v2063, 0.5
      %v2192 = vmul.f32 %v2064, 0.5
      %v2193 = vmul.f32 %v2065, 0.5
      %v2194 = vmul.f32 %v2066, 0.5
      %v2195 = vmul.f32 %v2067, 0.5
      %v2196 = vmul.f32 %v2068, 0.5
      %v2197 = vmul.f32 %v2069, 0.5
      %v2198 = vmul.f32 %v2070, 0.5
      %v2199 = vmul.f32 %v2071, 0.5
      %v2200 = vmul.f32 %v2072, 0.5
      %v2201 = vmul.f32 %v2073, 0.5
      %v2202 = vmul.f32 %v2074, 0.5
      %v2203 = vmul.f32 %v2075, 0.5
      %v2204 = vmul.f32 %v2076, 0.5
      %v2205 = vmul.f32 %v2077, 0.5
      %v2206 = vmul.f32 %v2078, 0.5
      %v2207 = vmul.f32 %v2079, 0.5
      %v2208 = vmul.f32 %v2080, 0.5
      %v2209 = vmul.f32 %v2081, 0.5
      %v2210 = vmul.f32 %v2082, 0.5
      %v2211 = vmul.f32 %v2083, 0.5
      %v2212 = vmul.f32 %v2084, 0.5
      %v2213 = vmul.f32 %v2085, 0.5
      %v2214 = vmul.f32 %v2086, 0.5
      %v2215 = vmul.f32 %v2087, 0.5
      %v2216 = vmul.f32 %v2088, 0.5
      %v2217 = vmul.f32 %v2089, 0.5
      %v2218 = vmul.f32 %v2090, 0.5
      %v2219 = vmul.f32 %v2091, 0.5
      %v2220 = vmul.f32 %v2092, 0.5
      %v2221 = vmul.f32 %v2093, 0.5
      %v2222 = vmul.f32 %v2094, 0.5
      %v2223 = vmul.f32 %v2095, 0.5
      %v2224 = vmul.f32 %v2096, 0.5
      %v2225 = vmul.f32 %v2097, 0.5
      %v2226 = vmul.f32 %v2098, 0.5
      %v2227 = vmul.f32 %v2099, 0.5
      %v2228 = vmul.f32 %v2100, 0.5
      %v2229 = vmul.f32 %v2101, 0.5
      %v2230 = vmul.f32 %v2102, 0.5
      %v2231 = vmul.f32 %v2103, 0.5
      %v2232 = vmul.f32 %v889, %v2104
      %v2233 = vmul.f32 %v891, %v2105
      %v2234 = vmul.f32 %v894, %v2106
      %v2235 = vmul.f32 %v896, %v2107
      %v2236 = vmul.f32 %v899, %v2108
      %v2237 = vmul.f32 %v901, %v2109
      %v2238 = vmul.f32 %v904, %v2110
      %v2239 = vmul.f32 %v906, %v2111
      %v2240 = vmul.f32 %v909, %v2112
      %v2241 = vmul.f32 %v911, %v2113
      %v2242 = vmul.f32 %v914, %v2114
      %v2243 = vmul.f32 %v916, %v2115
      %v2244 = vmul.f32 %v919, %v2116
      %v2245 = vmul.f32 %v921, %v2117
      %v2246 = vmul.f32 %v924, %v2118
      %v2247 = vmul.f32 %v926, %v2119
      %v2248 = vmul.f32 %v929, %v2120
      %v2249 = vmul.f32 %v931, %v2121
      %v2250 = vmul.f32 %v934, %v2122
      %v2251 = vmul.f32 %v936, %v2123
      %v2252 = vmul.f32 %v939, %v2124
      %v2253 = vmul.f32 %v941, %v2125
      %v2254 = vmul.f32 %v944, %v2126
      %v2255 = vmul.f32 %v946, %v2127
      %v2256 = vmul.f32 %v949, %v2128
      %v2257 = vmul.f32 %v951, %v2129
      %v2258 = vmul.f32 %v954, %v2130
      %v2259 = vmul.f32 %v956, %v2131
      %v2260 = vmul.f32 %v959, %v2132
      %v2261 = vmul.f32 %v961, %v2133
      %v2262 = vmul.f32 %v964, %v2134
      %v2263 = vmul.f32 %v966, %v2135
      %v2264 = vmul.f32 %v969, %v2136
      %v2265 = vmul.f32 %v971, %v2137
      %v2266 = vmul.f32 %v974, %v2138
      %v2267 = vmul.f32 %v976, %v2139
      %v2268 = vmul.f32 %v979, %v2140
      %v2269 = vmul.f32 %v981, %v2141
      %v2270 = vmul.f32 %v984, %v2142
      %v2271 = vmul.f32 %v986, %v2143
      %v2272 = vmul.f32 %v989, %v2144
      %v2273 = vmul.f32 %v991, %v2145
      %v2274 = vmul.f32 %v994, %v2146
      %v2275 = vmul.f32 %v996, %v2147
      %v2276 = vmul.f32 %v999, %v2148
      %v2277 = vmul.f32 %v1001, %v2149
      %v2278 = vmul.f32 %v1004, %v2150
      %v2279 = vmul.f32 %v1006, %v2151
      %v2280 = vmul.f32 %v1009, %v2152
      %v2281 = vmul.f32 %v1011, %v2153
      %v2282 = vmul.f32 %v1014, %v2154
      %v2283 = vmul.f32 %v1016, %v2155
      %v2284 = vmul.f32 %v1019, %v2156
      %v2285 = vmul.f32 %v1021, %v2157
      %v2286 = vmul.f32 %v1024, %v2158
      %v2287 = vmul.f32 %v1026, %v2159
      %v2288 = vmul.f32 %v1029, %v2160
      %v2289 = vmul.f32 %v1031, %v2161
      %v2290 = vmul.f32 %v1034, %v2162
      %v2291 = vmul.f32 %v1036, %v2163
      %v2292 = vmul.f32 %v1039, %v2164
      %v2293 = vmul.f32 %v1041, %v2165
      %v2294 = vmul.f32 %v1044, %v2166
      %v2295 = vmul.f32 %v1046, %v2167
      %v2296 = vmul.f32 %v1049, %v2168
      %v2297 = vmul.f32 %v1051, %v2169
      %v2298 = vmul.f32 %v1054, %v2170
      %v2299 = vmul.f32 %v1056, %v2171
      %v2300 = vmul.f32 %v1059, %v2172
      %v2301 = vmul.f32 %v1061, %v2173
      %v2302 = vmul.f32 %v1064, %v2174
      %v2303 = vmul.f32 %v1066, %v2175
      %v2304 = vmul.f32 %v1069, %v2176
      %v2305 = vmul.f32 %v1071, %v2177
      %v2306 = vmul.f32 %v1074, %v2178
      %v2307 = vmul.f32 %v1076, %v2179
      %v2308 = vmul.f32 %v1079, %v2180
      %v2309 = vmul.f32 %v1081, %v2181
      %v2310 = vmul.f32 %v1084, %v2182
      %v2311 = vmul.f32 %v1086, %v2183
      %v2312 = vmul.f32 %v1089, %v2184
      %v2313 = vmul.f32 %v1091, %v2185
      %v2314 = vmul.f32 %v1094, %v2186
      %v2315 = vmul.f32 %v1096, %v2187
      %v2316 = vmul.f32 %v1099, %v2188
      %v2317 = vmul.f32 %v1101, %v2189
      %v2318 = vmul.f32 %v1104, %v2190
      %v2319 = vmul.f32 %v1106, %v2191
      %v2320 = vmul.f32 %v1109, %v2192
      %v2321 = vmul.f32 %v1111, %v2193
      %v2322 = vmul.f32 %v1114, %v2194
      %v2323 = vmul.f32 %v1116, %v2195
      %v2324 = vmul.f32 %v1119, %v2196
      %v2325 = vmul.f32 %v1121, %v2197
      %v2326 = vmul.f32 %v1124, %v2198
      %v2327 = vmul.f32 %v1126, %v2199
      %v2328 = vmul.f32 %v1129, %v2200
      %v2329 = vmul.f32 %v1131, %v2201
      %v2330 = vmul.f32 %v1134, %v2202
      %v2331 = vmul.f32 %v1136, %v2203
      %v2332 = vmul.f32 %v1139, %v2204
      %v2333 = vmul.f32 %v1141, %v2205
      %v2334 = vmul.f32 %v1144, %v2206
      %v2335 = vmul.f32 %v1146, %v2207
      %v2336 = vmul.f32 %v1149, %v2208
      %v2337 = vmul.f32 %v1151, %v2209
      %v2338 = vmul.f32 %v1154, %v2210
      %v2339 = vmul.f32 %v1156, %v2211
      %v2340 = vmul.f32 %v1159, %v2212
      %v2341 = vmul.f32 %v1161, %v2213
      %v2342 = vmul.f32 %v1164, %v2214
      %v2343 = vmul.f32 %v1166, %v2215
      %v2344 = vmul.f32 %v1169, %v2216
      %v2345 = vmul.f32 %v1171, %v2217
      %v2346 = vmul.f32 %v1174, %v2218
      %v2347 = vmul.f32 %v1176, %v2219
      %v2348 = vmul.f32 %v1179, %v2220
      %v2349 = vmul.f32 %v1181, %v2221
      %v2350 = vmul.f32 %v1184, %v2222
      %v2351 = vmul.f32 %v1186, %v2223
      %v2352 = vmul.f32 %v1189, %v2224
      %v2353 = vmul.f32 %v1191, %v2225
      %v2354 = vmul.f32 %v1194, %v2226
      %v2355 = vmul.f32 %v1196, %v2227
      %v2356 = vmul.f32 %v1199, %v2228
      %v2357 = vmul.f32 %v1201, %v2229
      %v2358 = vmul.f32 %v1204, %v2230
      %v2359 = vmul.f32 %v1206, %v2231
      %v2360 = vpack.c.bf16 %v2233, %v2232
      %v2361 = vpack.c.bf16 %v2235, %v2234
      %v2362 = vpack.c.bf16 %v2237, %v2236
      %v2363 = vpack.c.bf16 %v2239, %v2238
      %v2364 = vpack.c.bf16 %v2241, %v2240
      %v2365 = vpack.c.bf16 %v2243, %v2242
      %v2366 = vpack.c.bf16 %v2245, %v2244
      %v2367 = vpack.c.bf16 %v2247, %v2246
      %v2368 = vpack.c.bf16 %v2249, %v2248
      %v2369 = vpack.c.bf16 %v2251, %v2250
      %v2370 = vpack.c.bf16 %v2253, %v2252
      %v2371 = vpack.c.bf16 %v2255, %v2254
      %v2372 = vpack.c.bf16 %v2257, %v2256
      %v2373 = vpack.c.bf16 %v2259, %v2258
      %v2374 = vpack.c.bf16 %v2261, %v2260
      %v2375 = vpack.c.bf16 %v2263, %v2262
      %v2376 = vpack.c.bf16 %v2265, %v2264
      %v2377 = vpack.c.bf16 %v2267, %v2266
      %v2378 = vpack.c.bf16 %v2269, %v2268
      %v2379 = vpack.c.bf16 %v2271, %v2270
      %v2380 = vpack.c.bf16 %v2273, %v2272
      %v2381 = vpack.c.bf16 %v2275, %v2274
      %v2382 = vpack.c.bf16 %v2277, %v2276
      %v2383 = vpack.c.bf16 %v2279, %v2278
      %v2384 = vpack.c.bf16 %v2281, %v2280
      %v2385 = vpack.c.bf16 %v2283, %v2282
      %v2386 = vpack.c.bf16 %v2285, %v2284
      %v2387 = vpack.c.bf16 %v2287, %v2286
      %v2388 = vpack.c.bf16 %v2289, %v2288
      %v2389 = vpack.c.bf16 %v2291, %v2290
      %v2390 = vpack.c.bf16 %v2293, %v2292
      %v2391 = vpack.c.bf16 %v2295, %v2294
      %v2392 = vpack.c.bf16 %v2297, %v2296
      %v2393 = vpack.c.bf16 %v2299, %v2298
      %v2394 = vpack.c.bf16 %v2301, %v2300
      %v2395 = vpack.c.bf16 %v2303, %v2302
      %v2396 = vpack.c.bf16 %v2305, %v2304
      %v2397 = vpack.c.bf16 %v2307, %v2306
      %v2398 = vpack.c.bf16 %v2309, %v2308
      %v2399 = vpack.c.bf16 %v2311, %v2310
      %v2400 = vpack.c.bf16 %v2313, %v2312
      %v2401 = vpack.c.bf16 %v2315, %v2314
      %v2402 = vpack.c.bf16 %v2317, %v2316
      %v2403 = vpack.c.bf16 %v2319, %v2318
      %v2404 = vpack.c.bf16 %v2321, %v2320
      %v2405 = vpack.c.bf16 %v2323, %v2322
      %v2406 = vpack.c.bf16 %v2325, %v2324
      %v2407 = vpack.c.bf16 %v2327, %v2326
      %v2408 = vpack.c.bf16 %v2329, %v2328
      %v2409 = vpack.c.bf16 %v2331, %v2330
      %v2410 = vpack.c.bf16 %v2333, %v2332
      %v2411 = vpack.c.bf16 %v2335, %v2334
      %v2412 = vpack.c.bf16 %v2337, %v2336
      %v2413 = vpack.c.bf16 %v2339, %v2338
      %v2414 = vpack.c.bf16 %v2341, %v2340
      %v2415 = vpack.c.bf16 %v2343, %v2342
      %v2416 = vpack.c.bf16 %v2345, %v2344
      %v2417 = vpack.c.bf16 %v2347, %v2346
      %v2418 = vpack.c.bf16 %v2349, %v2348
      %v2419 = vpack.c.bf16 %v2351, %v2350
      %v2420 = vpack.c.bf16 %v2353, %v2352
      %v2421 = vpack.c.bf16 %v2355, %v2354
      %v2422 = vpack.c.bf16 %v2357, %v2356
      %v2423 = vpack.c.bf16 %v2359, %v2358
      %v2424 = vld [vmem:[%s3] sm:$0xf]
      %v2425 = vld [vmem:[%s3 + $0x4] sm:$0xf]
      %v2426 = vld [vmem:[%s3 + $0x8] sm:$0xf]
      %v2427 = vld [vmem:[%s3 + $0xc] sm:$0xf]
      %v2428 = vld [vmem:[%s3 + $0x10] sm:$0xf]
      %v2429 = vld [vmem:[%s3 + $0x14] sm:$0xf]
      %v2430 = vld [vmem:[%s3 + $0x18] sm:$0xf]
      %v2431 = vld [vmem:[%s3 + $0x1c] sm:$0xf]
      %v2432 = vld [vmem:[%s4] sm:$0x1]
      %v2434 = vperm.slane %v2432, 0
      %v2444 = vunpack.c.l.b16 %v2424
      %v2445 = vunpack.c.l.b16 %v2425
      %v2446 = vunpack.c.l.b16 %v2426
      %v2447 = vunpack.c.l.b16 %v2427
      %v2448 = vunpack.c.l.b16 %v2428
      %v2449 = vunpack.c.l.b16 %v2429
      %v2450 = vunpack.c.l.b16 %v2430
      %v2451 = vunpack.c.l.b16 %v2431
      %v2452 = vpack.c.b16 %v2445, %v2444
      %v2453 = vpack.c.b16 %v2447, %v2446
      %v2454 = vpack.c.b16 %v2449, %v2448
      %v2455 = vpack.c.b16 %v2451, %v2450
      %vm2460 = vcmask 523264
      %v2462 = vsel %vm2460, %v2360, 0
      %v2465 = vsel %vm2460, %v2361, 0
      %v2468 = vsel %vm2460, %v2362, 0
      %v2471 = vsel %vm2460, %v2363, 0
      %v2474 = vsel %vm2460, %v2364, 0
      %v2477 = vsel %vm2460, %v2365, 0
      %v2480 = vsel %vm2460, %v2366, 0
      %v2483 = vsel %vm2460, %v2367, 0
      %v2486 = vsel %vm2460, %v2368, 0
      %v2489 = vsel %vm2460, %v2369, 0
      %v2492 = vsel %vm2460, %v2370, 0
      %v2495 = vsel %vm2460, %v2371, 0
      %v2498 = vsel %vm2460, %v2372, 0
      %v2501 = vsel %vm2460, %v2373, 0
      %v2504 = vsel %vm2460, %v2374, 0
      %v2507 = vsel %vm2460, %v2375, 0
      %v2510 = vsel %vm2460, %v2376, 0
      %v2513 = vsel %vm2460, %v2377, 0
      %v2516 = vsel %vm2460, %v2378, 0
      %v2519 = vsel %vm2460, %v2379, 0
      %v2522 = vsel %vm2460, %v2380, 0
      %v2525 = vsel %vm2460, %v2381, 0
      %v2528 = vsel %vm2460, %v2382, 0
      %v2531 = vsel %vm2460, %v2383, 0
      %v2534 = vsel %vm2460, %v2384, 0
      %v2537 = vsel %vm2460, %v2385, 0
      %v2540 = vsel %vm2460, %v2386, 0
      %v2543 = vsel %vm2460, %v2387, 0
      %v2546 = vsel %vm2460, %v2388, 0
      %v2549 = vsel %vm2460, %v2389, 0
      %v2552 = vsel %vm2460, %v2390, 0
      %v2555 = vsel %vm2460, %v2391, 0
      %v2558 = vsel %vm2460, %v2392, 0
      %v2561 = vsel %vm2460, %v2393, 0
      %v2564 = vsel %vm2460, %v2394, 0
      %v2567 = vsel %vm2460, %v2395, 0
      %v2570 = vsel %vm2460, %v2396, 0
      %v2573 = vsel %vm2460, %v2397, 0
      %v2576 = vsel %vm2460, %v2398, 0
      %v2579 = vsel %vm2460, %v2399, 0
      %v2582 = vsel %vm2460, %v2400, 0
      %v2585 = vsel %vm2460, %v2401, 0
      %v2588 = vsel %vm2460, %v2402, 0
      %v2591 = vsel %vm2460, %v2403, 0
      %v2594 = vsel %vm2460, %v2404, 0
      %v2597 = vsel %vm2460, %v2405, 0
      %v2600 = vsel %vm2460, %v2406, 0
      %v2603 = vsel %vm2460, %v2407, 0
      %v2606 = vsel %vm2460, %v2408, 0
      %v2609 = vsel %vm2460, %v2409, 0
      %v2612 = vsel %vm2460, %v2410, 0
      %v2615 = vsel %vm2460, %v2411, 0
      %v2618 = vsel %vm2460, %v2412, 0
      %v2621 = vsel %vm2460, %v2413, 0
      %v2624 = vsel %vm2460, %v2414, 0
      %v2627 = vsel %vm2460, %v2415, 0
      %v2630 = vsel %vm2460, %v2416, 0
      %v2633 = vsel %vm2460, %v2417, 0
      %v2636 = vsel %vm2460, %v2418, 0
      %v2639 = vsel %vm2460, %v2419, 0
      %v2642 = vsel %vm2460, %v2420, 0
      %v2645 = vsel %vm2460, %v2421, 0
      %v2648 = vsel %vm2460, %v2422, 0
      %v2651 = vsel %vm2460, %v2423, 0
      %2653 = vmatpush.bf16.msra.mxu0 0
      %2654 = vmatpush.bf16.msra.mxu0 0
      %2655 = vmatpush.bf16.msra.mxu0 0
      %2656 = vmatpush.bf16.msra.mxu0 0
      %2657 = vmatpush.bf16.msra.mxu0 %v2455
      %2658 = vmatpush.bf16.msra.mxu0 %v2454
      %2659 = vmatpush.bf16.msra.mxu0 %v2453
      %2660 = vmatpush.bf16.msra.mxu0 %v2452
      %2661 = vmatmul.bf16.gmra.mxu0 %v2462
      %v2662 = vpop.f32.mrf.mxu0
      %v2663 = vadd.f32 %v2434, %v2662
      %v2664 = vpop.f32.mrf.mxu0
      %v2665 = vadd.f32 %v2434, %v2664
      %2666 = vmatmul.bf16.gmra.mxu0 %v2465
      %v2667 = vpop.f32.mrf.mxu0
      %v2668 = vadd.f32 %v2434, %v2667
      %v2669 = vpop.f32.mrf.mxu0
      %v2670 = vadd.f32 %v2434, %v2669
      %2671 = vmatmul.bf16.gmra.mxu0 %v2468
      %v2672 = vpop.f32.mrf.mxu0
      %v2673 = vadd.f32 %v2434, %v2672
      %v2674 = vpop.f32.mrf.mxu0
      %v2675 = vadd.f32 %v2434, %v2674
      %2676 = vmatmul.bf16.gmra.mxu0 %v2471
      %v2677 = vpop.f32.mrf.mxu0
      %v2678 = vadd.f32 %v2434, %v2677
      %v2679 = vpop.f32.mrf.mxu0
      %v2680 = vadd.f32 %v2434, %v2679
      %2681 = vmatmul.bf16.gmra.mxu0 %v2474
      %v2682 = vpop.f32.mrf.mxu0
      %v2683 = vadd.f32 %v2434, %v2682
      %v2684 = vpop.f32.mrf.mxu0
      %v2685 = vadd.f32 %v2434, %v2684
      %2686 = vmatmul.bf16.gmra.mxu0 %v2477
      %v2687 = vpop.f32.mrf.mxu0
      %v2688 = vadd.f32 %v2434, %v2687
      %v2689 = vpop.f32.mrf.mxu0
      %v2690 = vadd.f32 %v2434, %v2689
      %2691 = vmatmul.bf16.gmra.mxu0 %v2480
      %v2692 = vpop.f32.mrf.mxu0
      %v2693 = vadd.f32 %v2434, %v2692
      %v2694 = vpop.f32.mrf.mxu0
      %v2695 = vadd.f32 %v2434, %v2694
      %2696 = vmatmul.bf16.gmra.mxu0 %v2483
      %v2697 = vpop.f32.mrf.mxu0
      %v2698 = vadd.f32 %v2434, %v2697
      %v2699 = vpop.f32.mrf.mxu0
      %v2700 = vadd.f32 %v2434, %v2699
      %2701 = vmatmul.bf16.gmra.mxu0 %v2486
      %v2702 = vpop.f32.mrf.mxu0
      %v2703 = vadd.f32 %v2434, %v2702
      %v2704 = vpop.f32.mrf.mxu0
      %v2705 = vadd.f32 %v2434, %v2704
      %2706 = vmatmul.bf16.gmra.mxu0 %v2489
      %v2707 = vpop.f32.mrf.mxu0
      %v2708 = vadd.f32 %v2434, %v2707
      %v2709 = vpop.f32.mrf.mxu0
      %v2710 = vadd.f32 %v2434, %v2709
      %2711 = vmatmul.bf16.gmra.mxu0 %v2492
      %v2712 = vpop.f32.mrf.mxu0
      %v2713 = vadd.f32 %v2434, %v2712
      %v2714 = vpop.f32.mrf.mxu0
      %v2715 = vadd.f32 %v2434, %v2714
      %2716 = vmatmul.bf16.gmra.mxu0 %v2495
      %v2717 = vpop.f32.mrf.mxu0
      %v2718 = vadd.f32 %v2434, %v2717
      %v2719 = vpop.f32.mrf.mxu0
      %v2720 = vadd.f32 %v2434, %v2719
      %2721 = vmatmul.bf16.gmra.mxu0 %v2498
      %v2722 = vpop.f32.mrf.mxu0
      %v2723 = vadd.f32 %v2434, %v2722
      %v2724 = vpop.f32.mrf.mxu0
      %v2725 = vadd.f32 %v2434, %v2724
      %2726 = vmatmul.bf16.gmra.mxu0 %v2501
      %v2727 = vpop.f32.mrf.mxu0
      %v2728 = vadd.f32 %v2434, %v2727
      %v2729 = vpop.f32.mrf.mxu0
      %v2730 = vadd.f32 %v2434, %v2729
      %2731 = vmatmul.bf16.gmra.mxu0 %v2504
      %v2732 = vpop.f32.mrf.mxu0
      %v2733 = vadd.f32 %v2434, %v2732
      %v2734 = vpop.f32.mrf.mxu0
      %v2735 = vadd.f32 %v2434, %v2734
      %2736 = vmatmul.bf16.gmra.mxu0 %v2507
      %v2737 = vpop.f32.mrf.mxu0
      %v2738 = vadd.f32 %v2434, %v2737
      %v2739 = vpop.f32.mrf.mxu0
      %v2740 = vadd.f32 %v2434, %v2739
      %2741 = vmatmul.bf16.gmra.mxu0 %v2510
      %v2742 = vpop.f32.mrf.mxu0
      %v2743 = vadd.f32 %v2434, %v2742
      %v2744 = vpop.f32.mrf.mxu0
      %v2745 = vadd.f32 %v2434, %v2744
      %2746 = vmatmul.bf16.gmra.mxu0 %v2513
      %v2747 = vpop.f32.mrf.mxu0
      %v2748 = vadd.f32 %v2434, %v2747
      %v2749 = vpop.f32.mrf.mxu0
      %v2750 = vadd.f32 %v2434, %v2749
      %2751 = vmatmul.bf16.gmra.mxu0 %v2516
      %v2752 = vpop.f32.mrf.mxu0
      %v2753 = vadd.f32 %v2434, %v2752
      %v2754 = vpop.f32.mrf.mxu0
      %v2755 = vadd.f32 %v2434, %v2754
      %2756 = vmatmul.bf16.gmra.mxu0 %v2519
      %v2757 = vpop.f32.mrf.mxu0
      %v2758 = vadd.f32 %v2434, %v2757
      %v2759 = vpop.f32.mrf.mxu0
      %v2760 = vadd.f32 %v2434, %v2759
      %2761 = vmatmul.bf16.gmra.mxu0 %v2522
      %v2762 = vpop.f32.mrf.mxu0
      %v2763 = vadd.f32 %v2434, %v2762
      %v2764 = vpop.f32.mrf.mxu0
      %v2765 = vadd.f32 %v2434, %v2764
      %2766 = vmatmul.bf16.gmra.mxu0 %v2525
      %v2767 = vpop.f32.mrf.mxu0
      %v2768 = vadd.f32 %v2434, %v2767
      %v2769 = vpop.f32.mrf.mxu0
      %v2770 = vadd.f32 %v2434, %v2769
      %2771 = vmatmul.bf16.gmra.mxu0 %v2528
      %v2772 = vpop.f32.mrf.mxu0
      %v2773 = vadd.f32 %v2434, %v2772
      %v2774 = vpop.f32.mrf.mxu0
      %v2775 = vadd.f32 %v2434, %v2774
      %2776 = vmatmul.bf16.gmra.mxu0 %v2531
      %v2777 = vpop.f32.mrf.mxu0
      %v2778 = vadd.f32 %v2434, %v2777
      %v2779 = vpop.f32.mrf.mxu0
      %v2780 = vadd.f32 %v2434, %v2779
      %2781 = vmatmul.bf16.gmra.mxu0 %v2534
      %v2782 = vpop.f32.mrf.mxu0
      %v2783 = vadd.f32 %v2434, %v2782
      %v2784 = vpop.f32.mrf.mxu0
      %v2785 = vadd.f32 %v2434, %v2784
      %2786 = vmatmul.bf16.gmra.mxu0 %v2537
      %v2787 = vpop.f32.mrf.mxu0
      %v2788 = vadd.f32 %v2434, %v2787
      %v2789 = vpop.f32.mrf.mxu0
      %v2790 = vadd.f32 %v2434, %v2789
      %2791 = vmatmul.bf16.gmra.mxu0 %v2540
      %v2792 = vpop.f32.mrf.mxu0
      %v2793 = vadd.f32 %v2434, %v2792
      %v2794 = vpop.f32.mrf.mxu0
      %v2795 = vadd.f32 %v2434, %v2794
      %2796 = vmatmul.bf16.gmra.mxu0 %v2543
      %v2797 = vpop.f32.mrf.mxu0
      %v2798 = vadd.f32 %v2434, %v2797
      %v2799 = vpop.f32.mrf.mxu0
      %v2800 = vadd.f32 %v2434, %v2799
      %2801 = vmatmul.bf16.gmra.mxu0 %v2546
      %v2802 = vpop.f32.mrf.mxu0
      %v2803 = vadd.f32 %v2434, %v2802
      %v2804 = vpop.f32.mrf.mxu0
      %v2805 = vadd.f32 %v2434, %v2804
      %2806 = vmatmul.bf16.gmra.mxu0 %v2549
      %v2807 = vpop.f32.mrf.mxu0
      %v2808 = vadd.f32 %v2434, %v2807
      %v2809 = vpop.f32.mrf.mxu0
      %v2810 = vadd.f32 %v2434, %v2809
      %2811 = vmatmul.bf16.gmra.mxu0 %v2552
      %v2812 = vpop.f32.mrf.mxu0
      %v2813 = vadd.f32 %v2434, %v2812
      %v2814 = vpop.f32.mrf.mxu0
      %v2815 = vadd.f32 %v2434, %v2814
      %2816 = vmatmul.bf16.gmra.mxu0 %v2555
      %v2817 = vpop.f32.mrf.mxu0
      %v2818 = vadd.f32 %v2434, %v2817
      %v2819 = vpop.f32.mrf.mxu0
      %v2820 = vadd.f32 %v2434, %v2819
      %2821 = vmatmul.bf16.gmra.mxu0 %v2558
      %v2822 = vpop.f32.mrf.mxu0
      %v2823 = vadd.f32 %v2434, %v2822
      %v2824 = vpop.f32.mrf.mxu0
      %v2825 = vadd.f32 %v2434, %v2824
      %2826 = vmatmul.bf16.gmra.mxu0 %v2561
      %v2827 = vpop.f32.mrf.mxu0
      %v2828 = vadd.f32 %v2434, %v2827
      %v2829 = vpop.f32.mrf.mxu0
      %v2830 = vadd.f32 %v2434, %v2829
      %2831 = vmatmul.bf16.gmra.mxu0 %v2564
      %v2832 = vpop.f32.mrf.mxu0
      %v2833 = vadd.f32 %v2434, %v2832
      %v2834 = vpop.f32.mrf.mxu0
      %v2835 = vadd.f32 %v2434, %v2834
      %2836 = vmatmul.bf16.gmra.mxu0 %v2567
      %v2837 = vpop.f32.mrf.mxu0
      %v2838 = vadd.f32 %v2434, %v2837
      %v2839 = vpop.f32.mrf.mxu0
      %v2840 = vadd.f32 %v2434, %v2839
      %2841 = vmatmul.bf16.gmra.mxu0 %v2570
      %v2842 = vpop.f32.mrf.mxu0
      %v2843 = vadd.f32 %v2434, %v2842
      %v2844 = vpop.f32.mrf.mxu0
      %v2845 = vadd.f32 %v2434, %v2844
      %2846 = vmatmul.bf16.gmra.mxu0 %v2573
      %v2847 = vpop.f32.mrf.mxu0
      %v2848 = vadd.f32 %v2434, %v2847
      %v2849 = vpop.f32.mrf.mxu0
      %v2850 = vadd.f32 %v2434, %v2849
      %2851 = vmatmul.bf16.gmra.mxu0 %v2576
      %v2852 = vpop.f32.mrf.mxu0
      %v2853 = vadd.f32 %v2434, %v2852
      %v2854 = vpop.f32.mrf.mxu0
      %v2855 = vadd.f32 %v2434, %v2854
      %2856 = vmatmul.bf16.gmra.mxu0 %v2579
      %v2857 = vpop.f32.mrf.mxu0
      %v2858 = vadd.f32 %v2434, %v2857
      %v2859 = vpop.f32.mrf.mxu0
      %v2860 = vadd.f32 %v2434, %v2859
      %2861 = vmatmul.bf16.gmra.mxu0 %v2582
      %v2862 = vpop.f32.mrf.mxu0
      %v2863 = vadd.f32 %v2434, %v2862
      %v2864 = vpop.f32.mrf.mxu0
      %v2865 = vadd.f32 %v2434, %v2864
      %2866 = vmatmul.bf16.gmra.mxu0 %v2585
      %v2867 = vpop.f32.mrf.mxu0
      %v2868 = vadd.f32 %v2434, %v2867
      %v2869 = vpop.f32.mrf.mxu0
      %v2870 = vadd.f32 %v2434, %v2869
      %2871 = vmatmul.bf16.gmra.mxu0 %v2588
      %v2872 = vpop.f32.mrf.mxu0
      %v2873 = vadd.f32 %v2434, %v2872
      %v2874 = vpop.f32.mrf.mxu0
      %v2875 = vadd.f32 %v2434, %v2874
      %2876 = vmatmul.bf16.gmra.mxu0 %v2591
      %v2877 = vpop.f32.mrf.mxu0
      %v2878 = vadd.f32 %v2434, %v2877
      %v2879 = vpop.f32.mrf.mxu0
      %v2880 = vadd.f32 %v2434, %v2879
      %2881 = vmatmul.bf16.gmra.mxu0 %v2594
      %v2882 = vpop.f32.mrf.mxu0
      %v2883 = vadd.f32 %v2434, %v2882
      %v2884 = vpop.f32.mrf.mxu0
      %v2885 = vadd.f32 %v2434, %v2884
      %2886 = vmatmul.bf16.gmra.mxu0 %v2597
      %v2887 = vpop.f32.mrf.mxu0
      %v2888 = vadd.f32 %v2434, %v2887
      %v2889 = vpop.f32.mrf.mxu0
      %v2890 = vadd.f32 %v2434, %v2889
      %2891 = vmatmul.bf16.gmra.mxu0 %v2600
      %v2892 = vpop.f32.mrf.mxu0
      %v2893 = vadd.f32 %v2434, %v2892
      %v2894 = vpop.f32.mrf.mxu0
      %v2895 = vadd.f32 %v2434, %v2894
      %2896 = vmatmul.bf16.gmra.mxu0 %v2603
      %v2897 = vpop.f32.mrf.mxu0
      %v2898 = vadd.f32 %v2434, %v2897
      %v2899 = vpop.f32.mrf.mxu0
      %v2900 = vadd.f32 %v2434, %v2899
      %2901 = vmatmul.bf16.gmra.mxu0 %v2606
      %v2902 = vpop.f32.mrf.mxu0
      %v2903 = vadd.f32 %v2434, %v2902
      %v2904 = vpop.f32.mrf.mxu0
      %v2905 = vadd.f32 %v2434, %v2904
      %2906 = vmatmul.bf16.gmra.mxu0 %v2609
      %v2907 = vpop.f32.mrf.mxu0
      %v2908 = vadd.f32 %v2434, %v2907
      %v2909 = vpop.f32.mrf.mxu0
      %v2910 = vadd.f32 %v2434, %v2909
      %2911 = vmatmul.bf16.gmra.mxu0 %v2612
      %v2912 = vpop.f32.mrf.mxu0
      %v2913 = vadd.f32 %v2434, %v2912
      %v2914 = vpop.f32.mrf.mxu0
      %v2915 = vadd.f32 %v2434, %v2914
      %2916 = vmatmul.bf16.gmra.mxu0 %v2615
      %v2917 = vpop.f32.mrf.mxu0
      %v2918 = vadd.f32 %v2434, %v2917
      %v2919 = vpop.f32.mrf.mxu0
      %v2920 = vadd.f32 %v2434, %v2919
      %2921 = vmatmul.bf16.gmra.mxu0 %v2618
      %v2922 = vpop.f32.mrf.mxu0
      %v2923 = vadd.f32 %v2434, %v2922
      %v2924 = vpop.f32.mrf.mxu0
      %v2925 = vadd.f32 %v2434, %v2924
      %2926 = vmatmul.bf16.gmra.mxu0 %v2621
      %v2927 = vpop.f32.mrf.mxu0
      %v2928 = vadd.f32 %v2434, %v2927
      %v2929 = vpop.f32.mrf.mxu0
      %v2930 = vadd.f32 %v2434, %v2929
      %2931 = vmatmul.bf16.gmra.mxu0 %v2624
      %v2932 = vpop.f32.mrf.mxu0
      %v2933 = vadd.f32 %v2434, %v2932
      %v2934 = vpop.f32.mrf.mxu0
      %v2935 = vadd.f32 %v2434, %v2934
      %2936 = vmatmul.bf16.gmra.mxu0 %v2627
      %v2937 = vpop.f32.mrf.mxu0
      %v2938 = vadd.f32 %v2434, %v2937
      %v2939 = vpop.f32.mrf.mxu0
      %v2940 = vadd.f32 %v2434, %v2939
      %2941 = vmatmul.bf16.gmra.mxu0 %v2630
      %v2942 = vpop.f32.mrf.mxu0
      %v2943 = vadd.f32 %v2434, %v2942
      %v2944 = vpop.f32.mrf.mxu0
      %v2945 = vadd.f32 %v2434, %v2944
      %2946 = vmatmul.bf16.gmra.mxu0 %v2633
      %v2947 = vpop.f32.mrf.mxu0
      %v2948 = vadd.f32 %v2434, %v2947
      %v2949 = vpop.f32.mrf.mxu0
      %v2950 = vadd.f32 %v2434, %v2949
      %2951 = vmatmul.bf16.gmra.mxu0 %v2636
      %v2952 = vpop.f32.mrf.mxu0
      %v2953 = vadd.f32 %v2434, %v2952
      %v2954 = vpop.f32.mrf.mxu0
      %v2955 = vadd.f32 %v2434, %v2954
      %2956 = vmatmul.bf16.gmra.mxu0 %v2639
      %v2957 = vpop.f32.mrf.mxu0
      %v2958 = vadd.f32 %v2434, %v2957
      %v2959 = vpop.f32.mrf.mxu0
      %v2960 = vadd.f32 %v2434, %v2959
      %2961 = vmatmul.bf16.gmra.mxu0 %v2642
      %v2962 = vpop.f32.mrf.mxu0
      %v2963 = vadd.f32 %v2434, %v2962
      %v2964 = vpop.f32.mrf.mxu0
      %v2965 = vadd.f32 %v2434, %v2964
      %2966 = vmatmul.bf16.gmra.mxu0 %v2645
      %v2967 = vpop.f32.mrf.mxu0
      %v2968 = vadd.f32 %v2434, %v2967
      %v2969 = vpop.f32.mrf.mxu0
      %v2970 = vadd.f32 %v2434, %v2969
      %2971 = vmatmul.bf16.gmra.mxu0 %v2648
      %v2972 = vpop.f32.mrf.mxu0
      %v2973 = vadd.f32 %v2434, %v2972
      %v2974 = vpop.f32.mrf.mxu0
      %v2975 = vadd.f32 %v2434, %v2974
      %2976 = vmatmul.bf16.gmra.mxu0 %v2651
      %v2977 = vpop.f32.mrf.mxu0
      %v2978 = vadd.f32 %v2434, %v2977
      %v2979 = vpop.f32.mrf.mxu0
      %v2980 = vadd.f32 %v2434, %v2979
      %2981 = vdwg.mxu0
      %2982 = vst.msk [vmem:[%s226] sm:$0xff] %vm2460, %v2663
      %2983 = vst.msk [vmem:[%s226 + $0x8] sm:$0xff] %vm2460, %v2665
      %2984 = vst.msk [vmem:[%s226 + $0x10] sm:$0xff] %vm2460, %v2668
      %2985 = vst.msk [vmem:[%s226 + $0x18] sm:$0xff] %vm2460, %v2670
      %2986 = vst.msk [vmem:[%s226 + $0x20] sm:$0xff] %vm2460, %v2673
      %2987 = vst.msk [vmem:[%s226 + $0x28] sm:$0xff] %vm2460, %v2675
      %2988 = vst.msk [vmem:[%s226 + $0x30] sm:$0xff] %vm2460, %v2678
      %2989 = vst.msk [vmem:[%s226 + $0x38] sm:$0xff] %vm2460, %v2680
      %2990 = vst.msk [vmem:[%s226 + $0x40] sm:$0xff] %vm2460, %v2683
      %2991 = vst.msk [vmem:[%s226 + $0x48] sm:$0xff] %vm2460, %v2685
      %2992 = vst.msk [vmem:[%s226 + $0x50] sm:$0xff] %vm2460, %v2688
      %2993 = vst.msk [vmem:[%s226 + $0x58] sm:$0xff] %vm2460, %v2690
      %2994 = vst.msk [vmem:[%s226 + $0x60] sm:$0xff] %vm2460, %v2693
      %2995 = vst.msk [vmem:[%s226 + $0x68] sm:$0xff] %vm2460, %v2695
      %2996 = vst.msk [vmem:[%s226 + $0x70] sm:$0xff] %vm2460, %v2698
      %2997 = vst.msk [vmem:[%s226 + $0x78] sm:$0xff] %vm2460, %v2700
      %2998 = vst.msk [vmem:[%s226 + $0x80] sm:$0xff] %vm2460, %v2703
      %2999 = vst.msk [vmem:[%s226 + $0x88] sm:$0xff] %vm2460, %v2705
      %3000 = vst.msk [vmem:[%s226 + $0x90] sm:$0xff] %vm2460, %v2708
      %3001 = vst.msk [vmem:[%s226 + $0x98] sm:$0xff] %vm2460, %v2710
      %3002 = vst.msk [vmem:[%s226 + $0xa0] sm:$0xff] %vm2460, %v2713
      %3003 = vst.msk [vmem:[%s226 + $0xa8] sm:$0xff] %vm2460, %v2715
      %3004 = vst.msk [vmem:[%s226 + $0xb0] sm:$0xff] %vm2460, %v2718
      %3005 = vst.msk [vmem:[%s226 + $0xb8] sm:$0xff] %vm2460, %v2720
      %3006 = vst.msk [vmem:[%s226 + $0xc0] sm:$0xff] %vm2460, %v2723
      %3007 = vst.msk [vmem:[%s226 + $0xc8] sm:$0xff] %vm2460, %v2725
      %3008 = vst.msk [vmem:[%s226 + $0xd0] sm:$0xff] %vm2460, %v2728
      %3009 = vst.msk [vmem:[%s226 + $0xd8] sm:$0xff] %vm2460, %v2730
      %3010 = vst.msk [vmem:[%s226 + $0xe0] sm:$0xff] %vm2460, %v2733
      %3011 = vst.msk [vmem:[%s226 + $0xe8] sm:$0xff] %vm2460, %v2735
      %3012 = vst.msk [vmem:[%s226 + $0xf0] sm:$0xff] %vm2460, %v2738
      %3013 = vst.msk [vmem:[%s226 + $0xf8] sm:$0xff] %vm2460, %v2740
      %3014 = vst.msk [vmem:[%s226 + $0x100] sm:$0xff] %vm2460, %v2743
      %3015 = vst.msk [vmem:[%s226 + $0x108] sm:$0xff] %vm2460, %v2745
      %3016 = vst.msk [vmem:[%s226 + $0x110] sm:$0xff] %vm2460, %v2748
      %3017 = vst.msk [vmem:[%s226 + $0x118] sm:$0xff] %vm2460, %v2750
      %3018 = vst.msk [vmem:[%s226 + $0x120] sm:$0xff] %vm2460, %v2753
      %3019 = vst.msk [vmem:[%s226 + $0x128] sm:$0xff] %vm2460, %v2755
      %3020 = vst.msk [vmem:[%s226 + $0x130] sm:$0xff] %vm2460, %v2758
      %3021 = vst.msk [vmem:[%s226 + $0x138] sm:$0xff] %vm2460, %v2760
      %3022 = vst.msk [vmem:[%s226 + $0x140] sm:$0xff] %vm2460, %v2763
      %3023 = vst.msk [vmem:[%s226 + $0x148] sm:$0xff] %vm2460, %v2765
      %3024 = vst.msk [vmem:[%s226 + $0x150] sm:$0xff] %vm2460, %v2768
      %3025 = vst.msk [vmem:[%s226 + $0x158] sm:$0xff] %vm2460, %v2770
      %3026 = vst.msk [vmem:[%s226 + $0x160] sm:$0xff] %vm2460, %v2773
      %3027 = vst.msk [vmem:[%s226 + $0x168] sm:$0xff] %vm2460, %v2775
      %3028 = vst.msk [vmem:[%s226 + $0x170] sm:$0xff] %vm2460, %v2778
      %3029 = vst.msk [vmem:[%s226 + $0x178] sm:$0xff] %vm2460, %v2780
      %3030 = vst.msk [vmem:[%s226 + $0x180] sm:$0xff] %vm2460, %v2783
      %3031 = vst.msk [vmem:[%s226 + $0x188] sm:$0xff] %vm2460, %v2785
      %3032 = vst.msk [vmem:[%s226 + $0x190] sm:$0xff] %vm2460, %v2788
      %3033 = vst.msk [vmem:[%s226 + $0x198] sm:$0xff] %vm2460, %v2790
      %3034 = vst.msk [vmem:[%s226 + $0x1a0] sm:$0xff] %vm2460, %v2793
      %3035 = vst.msk [vmem:[%s226 + $0x1a8] sm:$0xff] %vm2460, %v2795
      %3036 = vst.msk [vmem:[%s226 + $0x1b0] sm:$0xff] %vm2460, %v2798
      %3037 = vst.msk [vmem:[%s226 + $0x1b8] sm:$0xff] %vm2460, %v2800
      %3038 = vst.msk [vmem:[%s226 + $0x1c0] sm:$0xff] %vm2460, %v2803
      %3039 = vst.msk [vmem:[%s226 + $0x1c8] sm:$0xff] %vm2460, %v2805
      %3040 = vst.msk [vmem:[%s226 + $0x1d0] sm:$0xff] %vm2460, %v2808
      %3041 = vst.msk [vmem:[%s226 + $0x1d8] sm:$0xff] %vm2460, %v2810
      %3042 = vst.msk [vmem:[%s226 + $0x1e0] sm:$0xff] %vm2460, %v2813
      %3043 = vst.msk [vmem:[%s226 + $0x1e8] sm:$0xff] %vm2460, %v2815
      %3044 = vst.msk [vmem:[%s226 + $0x1f0] sm:$0xff] %vm2460, %v2818
      %3045 = vst.msk [vmem:[%s226 + $0x1f8] sm:$0xff] %vm2460, %v2820
      %3046 = vst.msk [vmem:[%s226 + $0x200] sm:$0xff] %vm2460, %v2823
      %3047 = vst.msk [vmem:[%s226 + $0x208] sm:$0xff] %vm2460, %v2825
      %3048 = vst.msk [vmem:[%s226 + $0x210] sm:$0xff] %vm2460, %v2828
      %3049 = vst.msk [vmem:[%s226 + $0x218] sm:$0xff] %vm2460, %v2830
      %3050 = vst.msk [vmem:[%s226 + $0x220] sm:$0xff] %vm2460, %v2833
      %3051 = vst.msk [vmem:[%s226 + $0x228] sm:$0xff] %vm2460, %v2835
      %3052 = vst.msk [vmem:[%s226 + $0x230] sm:$0xff] %vm2460, %v2838
      %3053 = vst.msk [vmem:[%s226 + $0x238] sm:$0xff] %vm2460, %v2840
      %3054 = vst.msk [vmem:[%s226 + $0x240] sm:$0xff] %vm2460, %v2843
      %3055 = vst.msk [vmem:[%s226 + $0x248] sm:$0xff] %vm2460, %v2845
      %3056 = vst.msk [vmem:[%s226 + $0x250] sm:$0xff] %vm2460, %v2848
      %3057 = vst.msk [vmem:[%s226 + $0x258] sm:$0xff] %vm2460, %v2850
      %3058 = vst.msk [vmem:[%s226 + $0x260] sm:$0xff] %vm2460, %v2853
      %3059 = vst.msk [vmem:[%s226 + $0x268] sm:$0xff] %vm2460, %v2855
      %3060 = vst.msk [vmem:[%s226 + $0x270] sm:$0xff] %vm2460, %v2858
      %3061 = vst.msk [vmem:[%s226 + $0x278] sm:$0xff] %vm2460, %v2860
      %3062 = vst.msk [vmem:[%s226 + $0x280] sm:$0xff] %vm2460, %v2863
      %3063 = vst.msk [vmem:[%s226 + $0x288] sm:$0xff] %vm2460, %v2865
      %3064 = vst.msk [vmem:[%s226 + $0x290] sm:$0xff] %vm2460, %v2868
      %3065 = vst.msk [vmem:[%s226 + $0x298] sm:$0xff] %vm2460, %v2870
      %3066 = vst.msk [vmem:[%s226 + $0x2a0] sm:$0xff] %vm2460, %v2873
      %3067 = vst.msk [vmem:[%s226 + $0x2a8] sm:$0xff] %vm2460, %v2875
      %3068 = vst.msk [vmem:[%s226 + $0x2b0] sm:$0xff] %vm2460, %v2878
      %3069 = vst.msk [vmem:[%s226 + $0x2b8] sm:$0xff] %vm2460, %v2880
      %3070 = vst.msk [vmem:[%s226 + $0x2c0] sm:$0xff] %vm2460, %v2883
      %3071 = vst.msk [vmem:[%s226 + $0x2c8] sm:$0xff] %vm2460, %v2885
      %3072 = vst.msk [vmem:[%s226 + $0x2d0] sm:$0xff] %vm2460, %v2888
      %3073 = vst.msk [vmem:[%s226 + $0x2d8] sm:$0xff] %vm2460, %v2890
      %3074 = vst.msk [vmem:[%s226 + $0x2e0] sm:$0xff] %vm2460, %v2893
      %3075 = vst.msk [vmem:[%s226 + $0x2e8] sm:$0xff] %vm2460, %v2895
      %3076 = vst.msk [vmem:[%s226 + $0x2f0] sm:$0xff] %vm2460, %v2898
      %3077 = vst.msk [vmem:[%s226 + $0x2f8] sm:$0xff] %vm2460, %v2900
      %3078 = vst.msk [vmem:[%s226 + $0x300] sm:$0xff] %vm2460, %v2903
      %3079 = vst.msk [vmem:[%s226 + $0x308] sm:$0xff] %vm2460, %v2905
      %3080 = vst.msk [vmem:[%s226 + $0x310] sm:$0xff] %vm2460, %v2908
      %3081 = vst.msk [vmem:[%s226 + $0x318] sm:$0xff] %vm2460, %v2910
      %3082 = vst.msk [vmem:[%s226 + $0x320] sm:$0xff] %vm2460, %v2913
      %3083 = vst.msk [vmem:[%s226 + $0x328] sm:$0xff] %vm2460, %v2915
      %3084 = vst.msk [vmem:[%s226 + $0x330] sm:$0xff] %vm2460, %v2918
      %3085 = vst.msk [vmem:[%s226 + $0x338] sm:$0xff] %vm2460, %v2920
      %3086 = vst.msk [vmem:[%s226 + $0x340] sm:$0xff] %vm2460, %v2923
      %3087 = vst.msk [vmem:[%s226 + $0x348] sm:$0xff] %vm2460, %v2925
      %3088 = vst.msk [vmem:[%s226 + $0x350] sm:$0xff] %vm2460, %v2928
      %3089 = vst.msk [vmem:[%s226 + $0x358] sm:$0xff] %vm2460, %v2930
      %3090 = vst.msk [vmem:[%s226 + $0x360] sm:$0xff] %vm2460, %v2933
      %3091 = vst.msk [vmem:[%s226 + $0x368] sm:$0xff] %vm2460, %v2935
      %3092 = vst.msk [vmem:[%s226 + $0x370] sm:$0xff] %vm2460, %v2938
      %3093 = vst.msk [vmem:[%s226 + $0x378] sm:$0xff] %vm2460, %v2940
      %3094 = vst.msk [vmem:[%s226 + $0x380] sm:$0xff] %vm2460, %v2943
      %3095 = vst.msk [vmem:[%s226 + $0x388] sm:$0xff] %vm2460, %v2945
      %3096 = vst.msk [vmem:[%s226 + $0x390] sm:$0xff] %vm2460, %v2948
      %3097 = vst.msk [vmem:[%s226 + $0x398] sm:$0xff] %vm2460, %v2950
      %3098 = vst.msk [vmem:[%s226 + $0x3a0] sm:$0xff] %vm2460, %v2953
      %3099 = vst.msk [vmem:[%s226 + $0x3a8] sm:$0xff] %vm2460, %v2955
      %3100 = vst.msk [vmem:[%s226 + $0x3b0] sm:$0xff] %vm2460, %v2958
      %3101 = vst.msk [vmem:[%s226 + $0x3b8] sm:$0xff] %vm2460, %v2960
      %3102 = vst.msk [vmem:[%s226 + $0x3c0] sm:$0xff] %vm2460, %v2963
      %3103 = vst.msk [vmem:[%s226 + $0x3c8] sm:$0xff] %vm2460, %v2965
      %3104 = vst.msk [vmem:[%s226 + $0x3d0] sm:$0xff] %vm2460, %v2968
      %3105 = vst.msk [vmem:[%s226 + $0x3d8] sm:$0xff] %vm2460, %v2970
      %3106 = vst.msk [vmem:[%s226 + $0x3e0] sm:$0xff] %vm2460, %v2973
      %3107 = vst.msk [vmem:[%s226 + $0x3e8] sm:$0xff] %vm2460, %v2975
      %3108 = vst.msk [vmem:[%s226 + $0x3f0] sm:$0xff] %vm2460, %v2978
      %3109 = vst.msk [vmem:[%s226 + $0x3f8] sm:$0xff] %vm2460, %v2980
      %s3110 = smul.u32 128, %s16
      %p3111 = scmp.lt.s32.totalorder %s3110, 511
      %s3112 = scalar_select %p3111, %s3110, 511
      %s3113 = smul.addr %s3112, 8
      %s3114 = scalar_lea.vmem %s5, %s3113
      // Predicated region
      $region41: #{deeponet_forward.4} parent=39 // pred_check
        %p3115 = pneg %p144
      $region42: #{deeponet_forward.4} parent=39 // pred_check_branch
        %3117 = sbr.rel (%p3115) target = $region44
      $region43: #{deeponet_forward.4} parent=39 // pred_region
        %s3118 = smul.u32 128, %s16
      $region44: #{deeponet_forward.4} parent=39 // pred_fallthru
        _
    $region40: #{deeponet_forward.4} parent=5 // pred_fallthru
      _
    %p3119 = scmp.le.s32.totalorder 2, %s11
    // Predicated region
    $region45: #{deeponet_forward.4} parent=5 // pred_check
      %p3120 = pneg %p3119
    $region46: #{deeponet_forward.4} parent=5 // pred_check_branch
      %3122 = sbr.rel (%p3120) target = $region48
    $region47: #{deeponet_forward.4} parent=5 // pred_region
      %s3123 = ssub.s32 %s11, 2
      // Predicated region
      $region49: #{deeponet_forward.4} parent=47 // pred_check
        %p3124 = pneg %p150
      $region50: #{deeponet_forward.4} parent=47 // pred_check_branch
        %3126 = sbr.rel (%p3124) target = $region52
      $region51: #{deeponet_forward.4} parent=47 // pred_region
        %s3127 = smul.u32 128, %s17
        %p3128 = scmp.lt.s32.totalorder %s3127, 511
        %s3129 = scalar_select %p3128, %s3127, 511
        %s3130 = smul.addr %s3129, 8
        %s3131 = scalar_lea.vmem %s5, %s3130
      $region52: #{deeponet_forward.4} parent=47 // pred_fallthru
        _
    $region48: #{deeponet_forward.4} parent=5 // pred_fallthru
      _
  $region6: #{deeponet_forward.4} parent=0 // loop_footer
    %s15 = sadd.s32 1, %s11
  $region7: #{deeponet_forward.4} parent=0 // loop_footer_branch
    %10 = sbr.rel target = $region3
  $region8: #{deeponet_forward.4} parent=0 // loop_exit
    _

// kernel: custom-call
$region0: #{custom-call}
  %s0 = inlined_call_operand.hbm [shape: c64[4,5,64,64], index: 0, kind: input, shape index: {}]
  %s1 = inlined_call_operand.vmem [shape: f32[4,5,64,64], index: 1, kind: output, shape index: {}]
  $region1: #{custom-call} parent=0
    #allocation0 [shape = 's32[1]{0}', space=sflag, size = 0x4, scoped, tag = 'scoped memory for custom-call']
    %2 = vsyncpa [#allocation0], 0
    %s4 = sshll.u32 %s0, 4
    %s5 = int_to_ptr.hbm [resolvable:$true] %s4
    %s6 = sshll.u32 %s1, 4
    %s7 = int_to_ptr.vmem [resolvable:$true] %s6
    %9 = dma.hbm_to_vmem [thread:$0]  %s5, 20480, %s7, [#allocation0]
    %11 = dma.done [#allocation0], 20480
    %12 = vsyncpa [#allocation0], 1

// kernel: custom-call.1
$region0: #{custom-call.1}
  %s0 = inlined_call_operand.hbm [shape: c64[4,5,64,64], index: 0, kind: input, shape index: {}]
  %s1 = inlined_call_operand.vmem [shape: f32[4,5,64,64], index: 1, kind: output, shape index: {}]
  %s2 = scalar_lea.hbm %s0, 1280
  $region1: #{custom-call.1} parent=0
    #allocation0 [shape = 's32[1]{0}', space=sflag, size = 0x4, scoped, tag = 'scoped memory for custom-call.1']
    %3 = vsyncpa [#allocation0], 0
    %s5 = sshll.u32 %s2, 4
    %s6 = int_to_ptr.hbm [resolvable:$true] %s5
    %s7 = sshll.u32 %s1, 4
    %s8 = int_to_ptr.vmem [resolvable:$true] %s7
    %10 = dma.hbm_to_vmem [thread:$0]  %s6, 20480, %s8, [#allocation0]
    %12 = dma.done [#allocation0], 20480
    %13 = vsyncpa [#allocation0], 1

// kernel: reverse.3
$region0: #{reverse.3}
  #allocation0 [shape = 's32[1]{0}', space=sflag, size = 0x4, scoped, tag = 'scoped memory for reverse.3']
  %s0 = inlined_call_operand.vmem [shape: f32[2,64,32,7], index: 0, kind: input, shape index: {}]
  %s1 = inlined_call_operand.vmem [shape: f32[2,64,32,7], index: 1, kind: output, shape index: {}]
  %s2 = scalar_lea.vmem %s0, 192
  %v3 = vld [vmem:[%s2] sm:$0xff]
  %4 = vst [vmem:[%s1] sm:$0xff] %v3
  %s5 = scalar_lea.vmem %s0, 416
  %v6 = vld [vmem:[%s5] sm:$0xff]
  %s7 = scalar_lea.vmem %s1, 224
  %8 = vst [vmem:[%s7] sm:$0xff] %v6
  %s9 = scalar_lea.vmem %s0, 160
  %v10 = vld [vmem:[%s9] sm:$0xff]
  %s11 = scalar_lea.vmem %s1, 32
  %12 = vst [vmem:[%s11] sm:$0xff] %v10
  %s13 = scalar_lea.vmem %s0, 384
  %v14 = vld [vmem:[%s13] sm:$0xff]
  %s15 = scalar_lea.vmem %s1, 256
  %16 = vst [vmem:[%s15] sm:$0xff] %v14
  %s17 = scalar_lea.vmem %s0, 128
  %v18 = vld [vmem:[%s17] sm:$0xff]
  %s19 = scalar_lea.vmem %s1, 64
  %20 = vst [vmem:[%s19] sm:$0xff] %v18
  %s21 = scalar_lea.vmem %s0, 352
  %v22 = vld [vmem:[%s21] sm:$0xff]
  %s23 = scalar_lea.vmem %s1, 288
  %24 = vst [vmem:[%s23] sm:$0xff] %v22
  %s25 = scalar_lea.vmem %s0, 96
  %v26 = vld [vmem:[%s25] sm:$0xff]
  %s27 = scalar_lea.vmem %s1, 96
  %28 = vst [vmem:[%s27] sm:$0xff] %v26
  %s29 = scalar_lea.vmem %s0, 320
  %v30 = vld [vmem:[%s29] sm:$0xff]
  %s31 = scalar_lea.vmem %s1, 320
  %32 = vst [vmem:[%s31] sm:$0xff] %v30
  %s33 = scalar_lea.vmem %s0, 64
  %v34 = vld [vmem:[%s33] sm:$0xff]
  %s35 = scalar_lea.vmem %s1, 128
  %36 = vst [vmem:[%s35] sm:$0xff] %v34
  %s37 = scalar_lea.vmem %s0, 288
  %v38 = vld [vmem:[%s37] sm:$0xff]
  %s39 = scalar_lea.vmem %s1, 352
  %40 = vst [vmem:[%s39] sm:$0xff] %v38
  %s41 = scalar_lea.vmem %s0, 32
  %v42 = vld [vmem:[%s41] sm:$0xff]
  %s43 = scalar_lea.vmem %s1, 160
  %44 = vst [vmem:[%s43] sm:$0xff] %v42
  %s45 = scalar_lea.vmem %s0, 256
  %v46 = vld [vmem:[%s45] sm:$0xff]
  %s47 = scalar_lea.vmem %s1, 384
  %48 = vst [vmem:[%s47] sm:$0xff] %v46
  %v49 = vld [vmem:[%s0] sm:$0xff]
  %s50 = scalar_lea.vmem %s1, 192
  %51 = vst [vmem:[%s50] sm:$0xff] %v49
  %s52 = scalar_lea.vmem %s0, 224
  %v53 = vld [vmem:[%s52] sm:$0xff]
  %s54 = scalar_lea.vmem %s1, 416
  %55 = vst [vmem:[%s54] sm:$0xff] %v53
  %s56 = scalar_lea.vmem %s0, 200
  %v57 = vld [vmem:[%s56] sm:$0xff]
  %s58 = scalar_lea.vmem %s1, 8
  %59 = vst [vmem:[%s58] sm:$0xff] %v57
  %s60 = scalar_lea.vmem %s0, 424
  %v61 = vld [vmem:[%s60] sm:$0xff]
  %s62 = scalar_lea.vmem %s1, 232
  %63 = vst [vmem:[%s62] sm:$0xff] %v61
  %s64 = scalar_lea.vmem %s0, 168
  %v65 = vld [vmem:[%s64] sm:$0xff]
  %s66 = scalar_lea.vmem %s1, 40
  %67 = vst [vmem:[%s66] sm:$0xff] %v65
  %s68 = scalar_lea.vmem %s0, 392
  %v69 = vld [vmem:[%s68] sm:$0xff]
  %s70 = scalar_lea.vmem %s1, 264
  %71 = vst [vmem:[%s70] sm:$0xff] %v69
  %s72 = scalar_lea.vmem %s0, 136
  %v73 = vld [vmem:[%s72] sm:$0xff]
  %s74 = scalar_lea.vmem %s1, 72
  %75 = vst [vmem:[%s74] sm:$0xff] %v73
  %s76 = scalar_lea.vmem %s0, 360
  %v77 = vld [vmem:[%s76] sm:$0xff]
  %s78 = scalar_lea.vmem %s1, 296
  %79 = vst [vmem:[%s78] sm:$0xff] %v77
  %s80 = scalar_lea.vmem %s0, 104
  %v81 = vld [vmem:[%s80] sm:$0xff]
  %s82 = scalar_lea.vmem %s1, 104
  %83 = vst [vmem:[%s82] sm:$0xff] %v81
  %s84 = scalar_lea.vmem %s0, 328
  %v85 = vld [vmem:[%s84] sm:$0xff]
  %s86 = scalar_lea.vmem %s1, 328
  %87 = vst [vmem:[%s86] sm:$0xff] %v85
  %s88 = scalar_lea.vmem %s0, 72
  %v89 = vld [vmem:[%s88] sm:$0xff]
  %s90 = scalar_lea.vmem %s1, 136
  %91 = vst [vmem:[%s90] sm:$0xff] %v89
  %s92 = scalar_lea.vmem %s0, 296
  %v93 = vld [vmem:[%s92] sm:$0xff]
  %s94 = scalar_lea.vmem %s1, 360
  %95 = vst [vmem:[%s94] sm:$0xff] %v93
  %s96 = scalar_lea.vmem %s0, 40
  %v97 = vld [vmem:[%s96] sm:$0xff]
  %s98 = scalar_lea.vmem %s1, 168
  %99 = vst [vmem:[%s98] sm:$0xff] %v97
  %s100 = scalar_lea.vmem %s0, 264
  %v101 = vld [vmem:[%s100] sm:$0xff]
  %s102 = scalar_lea.vmem %s1, 392
  %103 = vst [vmem:[%s102] sm:$0xff] %v101
  %s104 = scalar_lea.vmem %s0, 8
  %v105 = vld [vmem:[%s104] sm:$0xff]
  %s106 = scalar_lea.vmem %s1, 200
  %107 = vst [vmem:[%s106] sm:$0xff] %v105
  %s108 = scalar_lea.vmem %s0, 232
  %v109 = vld [vmem:[%s108] sm:$0xff]
  %s110 = scalar_lea.vmem %s1, 424
  %111 = vst [vmem:[%s110] sm:$0xff] %v109
  %s112 = scalar_lea.vmem %s0, 208
  %v113 = vld [vmem:[%s112] sm:$0xff]
  %s114 = scalar_lea.vmem %s1, 16
  %115 = vst [vmem:[%s114] sm:$0xff] %v113
  %s116 = scalar_lea.vmem %s0, 432
  %v117 = vld [vmem:[%s116] sm:$0xff]
  %s118 = scalar_lea.vmem %s1, 240
  %119 = vst [vmem:[%s118] sm:$0xff] %v117
  %s120 = scalar_lea.vmem %s0, 176
  %v121 = vld [vmem:[%s120] sm:$0xff]
  %s122 = scalar_lea.vmem %s1, 48
  %123 = vst [vmem:[%s122] sm:$0xff] %v121
  %s124 = scalar_lea.vmem %s0, 400
  %v125 = vld [vmem:[%s124] sm:$0xff]
  %s126 = scalar_lea.vmem %s1, 272
  %127 = vst [vmem:[%s126] sm:$0xff] %v125
  %s128 = scalar_lea.vmem %s0, 144
  %v129 = vld [vmem:[%s128] sm:$0xff]
  %s130 = scalar_lea.vmem %s1, 80
  %131 = vst [vmem:[%s130] sm:$0xff] %v129
  %s132 = scalar_lea.vmem %s0, 368
  %v133 = vld [vmem:[%s132] sm:$0xff]
  %s134 = scalar_lea.vmem %s1, 304
  %135 = vst [vmem:[%s134] sm:$0xff] %v133
  %s136 = scalar_lea.vmem %s0, 112
  %v137 = vld [vmem:[%s136] sm:$0xff]
  %s138 = scalar_lea.vmem %s1, 112
  %139 = vst [vmem:[%s138] sm:$0xff] %v137
  %s140 = scalar_lea.vmem %s0, 336
  %v141 = vld [vmem:[%s140] sm:$0xff]
  %s142 = scalar_lea.vmem %s1, 336
  %143 = vst [vmem:[%s142] sm:$0xff] %v141
  %s144 = scalar_lea.vmem %s0, 80
  %v145 = vld [vmem:[%s144] sm:$0xff]
  %s146 = scalar_lea.vmem %s1, 144
  %147 = vst [vmem:[%s146] sm:$0xff] %v145
  %s148 = scalar_lea.vmem %s0, 304
  %v149 = vld [vmem:[%s148] sm:$0xff]
  %s150 = scalar_lea.vmem %s1, 368
  %151 = vst [vmem:[%s150] sm:$0xff] %v149
  %s152 = scalar_lea.vmem %s0, 48
  %v153 = vld [vmem:[%s152] sm:$0xff]
  %s154 = scalar_lea.vmem %s1, 176
  %155 = vst [vmem:[%s154] sm:$0xff] %v153
  %s156 = scalar_lea.vmem %s0, 272
  %v157 = vld [vmem:[%s156] sm:$0xff]
  %s158 = scalar_lea.vmem %s1, 400
  %159 = vst [vmem:[%s158] sm:$0xff] %v157
  %s160 = scalar_lea.vmem %s0, 16
  %v161 = vld [vmem:[%s160] sm:$0xff]
  %s162 = scalar_lea.vmem %s1, 208
  %163 = vst [vmem:[%s162] sm:$0xff] %v161
  %s164 = scalar_lea.vmem %s0, 240
  %v165 = vld [vmem:[%s164] sm:$0xff]
  %s166 = scalar_lea.vmem %s1, 432
  %167 = vst [vmem:[%s166] sm:$0xff] %v165
  %s168 = scalar_lea.vmem %s0, 216
  %v169 = vld [vmem:[%s168] sm:$0xff]
  %s170 = scalar_lea.vmem %s1, 24
  %171 = vst [vmem:[%s170] sm:$0xff] %v169
  %s172 = scalar_lea.vmem %s0, 440
  %v173 = vld [vmem:[%s172] sm:$0xff]
  %s174 = scalar_lea.vmem %s1, 248
  %175 = vst [vmem:[%s174] sm:$0xff] %v173
  %s176 = scalar_lea.vmem %s0, 184
  %v177 = vld [vmem:[%s176] sm:$0xff]
  %s178 = scalar_lea.vmem %s1, 56
  %179 = vst [vmem:[%s178] sm:$0xff] %v177
  %s180 = scalar_lea.vmem %s0, 408
  %v181 = vld [vmem:[%s180] sm:$0xff]
  %s182 = scalar_lea.vmem %s1, 280
  %183 = vst [vmem:[%s182] sm:$0xff] %v181
  %s184 = scalar_lea.vmem %s0, 152
  %v185 = vld [vmem:[%s184] sm:$0xff]
  %s186 = scalar_lea.vmem %s1, 88
  %187 = vst [vmem:[%s186] sm:$0xff] %v185
  %s188 = scalar_lea.vmem %s0, 376
  %v189 = vld [vmem:[%s188] sm:$0xff]
  %s190 = scalar_lea.vmem %s1, 312
  %191 = vst [vmem:[%s190] sm:$0xff] %v189
  %s192 = scalar_lea.vmem %s0, 120
  %v193 = vld [vmem:[%s192] sm:$0xff]
  %s194 = scalar_lea.vmem %s1, 120
  %195 = vst [vmem:[%s194] sm:$0xff] %v193
  %s196 = scalar_lea.vmem %s0, 344
  %v197 = vld [vmem:[%s196] sm:$0xff]
  %s198 = scalar_lea.vmem %s1, 344
  %199 = vst [vmem:[%s198] sm:$0xff] %v197
  %s200 = scalar_lea.vmem %s0, 88
  %v201 = vld [vmem:[%s200] sm:$0xff]
  %s202 = scalar_lea.vmem %s1, 152
  %203 = vst [vmem:[%s202] sm:$0xff] %v201
  %s204 = scalar_lea.vmem %s0, 312
  %v205 = vld [vmem:[%s204] sm:$0xff]
  %s206 = scalar_lea.vmem %s1, 376
  %207 = vst [vmem:[%s206] sm:$0xff] %v205
  %s208 = scalar_lea.vmem %s0, 56
  %v209 = vld [vmem:[%s208] sm:$0xff]
  %s210 = scalar_lea.vmem %s1, 184
  %211 = vst [vmem:[%s210] sm:$0xff] %v209
  %s212 = scalar_lea.vmem %s0, 280
  %v213 = vld [vmem:[%s212] sm:$0xff]
  %s214 = scalar_lea.vmem %s1, 408
  %215 = vst [vmem:[%s214] sm:$0xff] %v213
  %s216 = scalar_lea.vmem %s0, 24
  %v217 = vld [vmem:[%s216] sm:$0xff]
  %s218 = scalar_lea.vmem %s1, 216
  %219 = vst [vmem:[%s218] sm:$0xff] %v217
  %s220 = scalar_lea.vmem %s0, 248
  %v221 = vld [vmem:[%s220] sm:$0xff]
  %s222 = scalar_lea.vmem %s1, 440
  %223 = vst [vmem:[%s222] sm:$0xff] %v221

// kernel: reverse.4
$region0: #{reverse.4}
  #allocation0 [shape = 's32[1]{0}', space=sflag, size = 0x4, scoped, tag = 'scoped memory for reverse.4']
  %s0 = inlined_call_operand.vmem [shape: f32[2,64,16,3], index: 0, kind: input, shape index: {}]
  %s1 = inlined_call_operand.vmem [shape: f32[2,64,16,3], index: 1, kind: output, shape index: {}]
  %s2 = scalar_lea.vmem %s0, 32
  %v3 = vld [vmem:[%s2] sm:$0xff]
  %4 = vst [vmem:[%s1] sm:$0xff] %v3
  %s5 = scalar_lea.vmem %s0, 80
  %v6 = vld [vmem:[%s5] sm:$0xff]
  %s7 = scalar_lea.vmem %s1, 48
  %8 = vst [vmem:[%s7] sm:$0xff] %v6
  %s9 = scalar_lea.vmem %s0, 16
  %v10 = vld [vmem:[%s9] sm:$0xff]
  %s11 = scalar_lea.vmem %s1, 16
  %12 = vst [vmem:[%s11] sm:$0xff] %v10
  %s13 = scalar_lea.vmem %s0, 64
  %v14 = vld [vmem:[%s13] sm:$0xff]
  %s15 = scalar_lea.vmem %s1, 64
  %16 = vst [vmem:[%s15] sm:$0xff] %v14
  %v17 = vld [vmem:[%s0] sm:$0xff]
  %s18 = scalar_lea.vmem %s1, 32
  %19 = vst [vmem:[%s18] sm:$0xff] %v17
  %s20 = scalar_lea.vmem %s0, 48
  %v21 = vld [vmem:[%s20] sm:$0xff]
  %s22 = scalar_lea.vmem %s1, 80
  %23 = vst [vmem:[%s22] sm:$0xff] %v21
  %s24 = scalar_lea.vmem %s0, 40
  %v25 = vld [vmem:[%s24] sm:$0xff]
  %s26 = scalar_lea.vmem %s1, 8
  %27 = vst [vmem:[%s26] sm:$0xff] %v25
  %s28 = scalar_lea.vmem %s0, 88
  %v29 = vld [vmem:[%s28] sm:$0xff]
  %s30 = scalar_lea.vmem %s1, 56
  %31 = vst [vmem:[%s30] sm:$0xff] %v29
  %s32 = scalar_lea.vmem %s0, 24
  %v33 = vld [vmem:[%s32] sm:$0xff]
  %s34 = scalar_lea.vmem %s1, 24
  %35 = vst [vmem:[%s34] sm:$0xff] %v33
  %s36 = scalar_lea.vmem %s0, 72
  %v37 = vld [vmem:[%s36] sm:$0xff]
  %s38 = scalar_lea.vmem %s1, 72
  %39 = vst [vmem:[%s38] sm:$0xff] %v37
  %s40 = scalar_lea.vmem %s0, 8
  %v41 = vld [vmem:[%s40] sm:$0xff]
  %s42 = scalar_lea.vmem %s1, 40
  %43 = vst [vmem:[%s42] sm:$0xff] %v41
  %s44 = scalar_lea.vmem %s0, 56
  %v45 = vld [vmem:[%s44] sm:$0xff]
  %s46 = scalar_lea.vmem %s1, 88
  %47 = vst [vmem:[%s46] sm:$0xff] %v45

// kernel: custom-call.8
$region0: #{custom-call.8}
  %s0 = inlined_call_operand.hbm [shape: c64[4,5,128,64], index: 0, kind: input, shape index: {}]
  %s1 = inlined_call_operand.vmem [shape: f32[4,5,128,64], index: 1, kind: output, shape index: {}]
  $region1: #{custom-call.8} parent=0
    #allocation0 [shape = 's32[1]{0}', space=sflag, size = 0x4, scoped, tag = 'scoped memory for custom-call.8']
    %2 = vsyncpa [#allocation0], 0
    %s4 = sshll.u32 %s0, 4
    %s5 = int_to_ptr.hbm [resolvable:$true] %s4
    %s6 = sshll.u32 %s1, 4
    %s7 = int_to_ptr.vmem [resolvable:$true] %s6
    %9 = dma.hbm_to_vmem [thread:$0]  %s5, 20480, %s7, [#allocation0]
    %11 = dma.done [#allocation0], 20480
    %12 = vsyncpa [#allocation0], 1

// kernel: custom-call.9
$region0: #{custom-call.9}
  %s0 = inlined_call_operand.hbm [shape: c64[4,5,128,64], index: 0, kind: input, shape index: {}]
  %s1 = inlined_call_operand.vmem [shape: f32[4,5,128,64], index: 1, kind: output, shape index: {}]
  %s2 = scalar_lea.hbm %s0, 1280
  $region1: #{custom-call.9} parent=0
    #allocation0 [shape = 's32[1]{0}', space=sflag, size = 0x4, scoped, tag = 'scoped memory for custom-call.9']
    %3 = vsyncpa [#allocation0], 0
    %s5 = sshll.u32 %s2, 4
    %s6 = int_to_ptr.hbm [resolvable:$true] %s5
    %s7 = sshll.u32 %s1, 4
    %s8 = int_to_ptr.vmem [resolvable:$true] %s7
    %10 = dma.hbm_to_vmem [thread:$0]  %s6, 20480, %s8, [#allocation0]
    %12 = dma.done [#allocation0], 20480
    %13 = vsyncpa [#allocation0], 1

// kernel: deeponet_forward.5
$region0: #{deeponet_forward.5}
  #allocation0 [shape = 'u32[]', space=smem, size = 0x4, offset = 0x4, fixed_abs, tag = 'smem constant byte address 0x4 - core index']
  #allocation1 [shape = 'u32[72,128]{1,0:T(1,128)}', space=vmem, size = 0x9000, scoped, tag = 'internal scratch']
  %s0 = inlined_call_operand.vmem [shape: bf16[16,64], index: 0, kind: input, shape index: {}]
  %s1 = inlined_call_operand.vmem [shape: bf16[64,64], index: 1, kind: input, shape index: {}]
  %s2 = inlined_call_operand.vmem [shape: f32[1,64], index: 2, kind: input, shape index: {}]
  %s3 = inlined_call_operand.vmem [shape: bf16[64,64], index: 3, kind: input, shape index: {}]
  %s4 = inlined_call_operand.vmem [shape: f32[1,64], index: 4, kind: input, shape index: {}]
  %s5 = inlined_call_operand.vmem [shape: bf16[16,64], index: 5, kind: output, shape index: {}]
  %s6 = sld [smem:[#allocation0]]
  $region30: #{deeponet_forward.5} parent=0
    _
  %s8 = ssub.s32 1, %s6
  %s9 = scalar_select 0, %s8, %s6
  // Predicated region
  $region2: #{deeponet_forward.5} parent=0 // pred_check
    _
  $region3: #{deeponet_forward.5} parent=0 // pred_check_branch
    %11 = sbr.rel (0) target = $region5
  $region4: #{deeponet_forward.5} parent=0 // pred_region
    _
  $region5: #{deeponet_forward.5} parent=0 // pred_fallthru
    _
  // Predicated region
  $region6: #{deeponet_forward.5} parent=0 // pred_check
    _
  $region7: #{deeponet_forward.5} parent=0 // pred_check_branch
    %13 = sbr.rel (0) target = $region9
  $region8: #{deeponet_forward.5} parent=0 // pred_region
    _
  $region9: #{deeponet_forward.5} parent=0 // pred_fallthru
    _
  // Predicated region
  $region10: #{deeponet_forward.5} parent=0 // pred_check
    _
  $region11: #{deeponet_forward.5} parent=0 // pred_check_branch
    %15 = sbr.rel (0) target = $region13
  $region12: #{deeponet_forward.5} parent=0 // pred_region
    _
  $region13: #{deeponet_forward.5} parent=0 // pred_fallthru
    _
  // Predicated region
  $region14: #{deeponet_forward.5} parent=0 // pred_check
    _
  $region15: #{deeponet_forward.5} parent=0 // pred_check_branch
    %17 = sbr.rel (0) target = $region17
  $region16: #{deeponet_forward.5} parent=0 // pred_region
    _
  $region17: #{deeponet_forward.5} parent=0 // pred_fallthru
    _
  // Predicated region
  $region18: #{deeponet_forward.5} parent=0 // pred_check
    _
  $region19: #{deeponet_forward.5} parent=0 // pred_check_branch
    %19 = sbr.rel (0) target = $region21
  $region20: #{deeponet_forward.5} parent=0 // pred_region
    _
  $region21: #{deeponet_forward.5} parent=0 // pred_fallthru
    _
  %v21 = vld [vmem:[%s0] sm:$0xf]
  %v22 = vld [vmem:[%s0 + $0x4] sm:$0xf]
  %v23 = vld [vmem:[%s1] sm:$0xf]
  %v24 = vld [vmem:[%s1 + $0x4] sm:$0xf]
  %v25 = vld [vmem:[%s1 + $0x8] sm:$0xf]
  %v26 = vld [vmem:[%s1 + $0xc] sm:$0xf]
  %v27 = vld [vmem:[%s1 + $0x10] sm:$0xf]
  %v28 = vld [vmem:[%s1 + $0x14] sm:$0xf]
  %v29 = vld [vmem:[%s1 + $0x18] sm:$0xf]
  %v30 = vld [vmem:[%s1 + $0x1c] sm:$0xf]
  %v31 = vld [vmem:[%s2] sm:$0x1]
  %v33 = vperm.slane %v31, 0
  %v37 = vunpack.c.l.b16 %v21
  %v38 = vunpack.c.l.b16 %v22
  %v39 = vpack.c.b16 %v38, %v37
  %v48 = vunpack.c.l.b16 %v23
  %v49 = vunpack.c.l.b16 %v24
  %v50 = vunpack.c.l.b16 %v25
  %v51 = vunpack.c.l.b16 %v26
  %v52 = vunpack.c.l.b16 %v27
  %v53 = vunpack.c.l.b16 %v28
  %v54 = vunpack.c.l.b16 %v29
  %v55 = vunpack.c.l.b16 %v30
  %v56 = vpack.c.b16 %v49, %v48
  %v57 = vpack.c.b16 %v51, %v50
  %v58 = vpack.c.b16 %v53, %v52
  %v59 = vpack.c.b16 %v55, %v54
  %vm64 = vcmask 523264
  %v66 = vsel %vm64, %v39, 0
  %68 = vmatpush.bf16.msra.mxu0 0
  %69 = vmatpush.bf16.msra.mxu0 0
  %70 = vmatpush.bf16.msra.mxu0 0
  %71 = vmatpush.bf16.msra.mxu0 0
  %72 = vmatpush.bf16.msra.mxu0 %v59
  %73 = vmatpush.bf16.msra.mxu0 %v58
  %74 = vmatpush.bf16.msra.mxu0 %v57
  %75 = vmatpush.bf16.msra.mxu0 %v56
  %76 = vmatmul.bf16.gmra.mxu0 %v66
  %v77 = vpop.f32.mrf.mxu0
  %v78 = vadd.f32 %v33, %v77
  %v79 = vpop.f32.mrf.mxu0
  %v80 = vadd.f32 %v33, %v79
  %81 = vdwg.mxu0
  %v82 = vmul.f32 %v78, %v78
  %v83 = vmul.f32 %v80, %v80
  %v84 = vmul.f32 %v78, %v82
  %v85 = vmul.f32 %v80, %v83
  %v86 = vmul.f32 %v84, 0.044715
  %v87 = vmul.f32 %v85, 0.044715
  %v88 = vadd.f32 %v78, %v86
  %v89 = vadd.f32 %v80, %v87
  %v90 = vmul.f32 %v88, 0.7978846
  %v91 = vmul.f32 %v89, 0.7978846
  %v92 = vtanh.pop %v90
  %v93 = vtanh.pop %v91
  %v94 = vadd.f32 %v92, 1.0
  %v95 = vadd.f32 %v93, 1.0
  %v96 = vmul.f32 %v94, 0.5
  %v97 = vmul.f32 %v95, 0.5
  %v98 = vmul.f32 %v78, %v96
  %v99 = vmul.f32 %v80, %v97
  %v100 = vpack.c.bf16 %v99, %v98
  %v101 = vld [vmem:[%s3] sm:$0xf]
  %v102 = vld [vmem:[%s3 + $0x4] sm:$0xf]
  %v103 = vld [vmem:[%s3 + $0x8] sm:$0xf]
  %v104 = vld [vmem:[%s3 + $0xc] sm:$0xf]
  %v105 = vld [vmem:[%s3 + $0x10] sm:$0xf]
  %v106 = vld [vmem:[%s3 + $0x14] sm:$0xf]
  %v107 = vld [vmem:[%s3 + $0x18] sm:$0xf]
  %v108 = vld [vmem:[%s3 + $0x1c] sm:$0xf]
  %v109 = vld [vmem:[%s4] sm:$0x1]
  %v111 = vperm.slane %v109, 0
  %v121 = vunpack.c.l.b16 %v101
  %v122 = vunpack.c.l.b16 %v102
  %v123 = vunpack.c.l.b16 %v103
  %v124 = vunpack.c.l.b16 %v104
  %v125 = vunpack.c.l.b16 %v105
  %v126 = vunpack.c.l.b16 %v106
  %v127 = vunpack.c.l.b16 %v107
  %v128 = vunpack.c.l.b16 %v108
  %v129 = vpack.c.b16 %v122, %v121
  %v130 = vpack.c.b16 %v124, %v123
  %v131 = vpack.c.b16 %v126, %v125
  %v132 = vpack.c.b16 %v128, %v127
  %v138 = vsel %vm64, %v100, 0
  %140 = vmatpush.bf16.msra.mxu0 0
  %141 = vmatpush.bf16.msra.mxu0 0
  %142 = vmatpush.bf16.msra.mxu0 0
  %143 = vmatpush.bf16.msra.mxu0 0
  %144 = vmatpush.bf16.msra.mxu0 %v132
  %145 = vmatpush.bf16.msra.mxu0 %v131
  %146 = vmatpush.bf16.msra.mxu0 %v130
  %147 = vmatpush.bf16.msra.mxu0 %v129
  %148 = vmatmul.bf16.gmra.mxu0 %v138
  %v149 = vpop.f32.mrf.mxu0
  %v150 = vadd.f32 %v111, %v149
  %v151 = vpop.f32.mrf.mxu0
  %v152 = vadd.f32 %v111, %v151
  %153 = vdwg.mxu0
  %v154 = vpack.c.bf16 %v150, %v150
  %v155 = vpack.c.bf16 %v152, %v152
  %vm156 = vcmask 519168
  %157 = vst.msk [vmem:[%s5] sm:$0xf] %vm156, %v154
  %158 = vst.msk [vmem:[%s5 + $0x4] sm:$0xf] %vm156, %v155
  // Predicated region
  $region22: #{deeponet_forward.5} parent=0 // pred_check
    _
  $region23: #{deeponet_forward.5} parent=0 // pred_check_branch
    %160 = sbr.rel (0) target = $region25
  $region24: #{deeponet_forward.5} parent=0 // pred_region
    _
  $region25: #{deeponet_forward.5} parent=0 // pred_fallthru
    _
  // Predicated region
  $region26: #{deeponet_forward.5} parent=0 // pred_check
    _
  $region27: #{deeponet_forward.5} parent=0 // pred_check_branch
    %162 = sbr.rel (0) target = $region29
  $region28: #{deeponet_forward.5} parent=0 // pred_region
    _
  $region29: #{deeponet_forward.5} parent=0 // pred_fallthru
    _

// kernel: deeponet_forward.6
$region0: #{deeponet_forward.6}
  #allocation0 [shape = 'u32[]', space=smem, size = 0x4, offset = 0x4, fixed_abs, tag = 'smem constant byte address 0x4 - core index']
  #allocation1 [shape = 'u32[72,128]{1,0:T(1,128)}', space=vmem, size = 0x9000, scoped, tag = 'internal scratch']
  %s0 = inlined_call_operand.vmem [shape: bf16[16,512], index: 0, kind: input, shape index: {}]
  %s1 = inlined_call_operand.vmem [shape: bf16[512,64], index: 1, kind: input, shape index: {}]
  %s2 = inlined_call_operand.vmem [shape: f32[1,64], index: 2, kind: input, shape index: {}]
  %s3 = inlined_call_operand.vmem [shape: f32[16,64], index: 3, kind: output, shape index: {}]
  %s4 = sld [smem:[#allocation0]]
  $region22: #{deeponet_forward.6} parent=0
    _
  %s6 = ssub.s32 1, %s4
  %s7 = scalar_select 0, %s6, %s4
  // Predicated region
  $region2: #{deeponet_forward.6} parent=0 // pred_check
    _
  $region3: #{deeponet_forward.6} parent=0 // pred_check_branch
    %9 = sbr.rel (0) target = $region5
  $region4: #{deeponet_forward.6} parent=0 // pred_region
    _
  $region5: #{deeponet_forward.6} parent=0 // pred_fallthru
    _
  // Predicated region
  $region6: #{deeponet_forward.6} parent=0 // pred_check
    _
  $region7: #{deeponet_forward.6} parent=0 // pred_check_branch
    %11 = sbr.rel (0) target = $region9
  $region8: #{deeponet_forward.6} parent=0 // pred_region
    _
  $region9: #{deeponet_forward.6} parent=0 // pred_fallthru
    _
  // Predicated region
  $region10: #{deeponet_forward.6} parent=0 // pred_check
    _
  $region11: #{deeponet_forward.6} parent=0 // pred_check_branch
    %13 = sbr.rel (0) target = $region13
  $region12: #{deeponet_forward.6} parent=0 // pred_region
    _
  $region13: #{deeponet_forward.6} parent=0 // pred_fallthru
    _
  %v14 = vld [vmem:[%s0] sm:$0xff]
  %v15 = vld [vmem:[%s0 + $0x8] sm:$0xff]
  %v16 = vld [vmem:[%s0 + $0x10] sm:$0xff]
  %v17 = vld [vmem:[%s0 + $0x18] sm:$0xff]
  %v18 = vld [vmem:[%s1] sm:$0xf]
  %v19 = vld [vmem:[%s1 + $0x4] sm:$0xf]
  %v20 = vld [vmem:[%s1 + $0x8] sm:$0xf]
  %v21 = vld [vmem:[%s1 + $0xc] sm:$0xf]
  %v22 = vld [vmem:[%s1 + $0x10] sm:$0xf]
  %v23 = vld [vmem:[%s1 + $0x14] sm:$0xf]
  %v24 = vld [vmem:[%s1 + $0x18] sm:$0xf]
  %v25 = vld [vmem:[%s1 + $0x1c] sm:$0xf]
  %v26 = vld [vmem:[%s1 + $0x20] sm:$0xf]
  %v27 = vld [vmem:[%s1 + $0x24] sm:$0xf]
  %v28 = vld [vmem:[%s1 + $0x28] sm:$0xf]
  %v29 = vld [vmem:[%s1 + $0x2c] sm:$0xf]
  %v30 = vld [vmem:[%s1 + $0x30] sm:$0xf]
  %v31 = vld [vmem:[%s1 + $0x34] sm:$0xf]
  %v32 = vld [vmem:[%s1 + $0x38] sm:$0xf]
  %v33 = vld [vmem:[%s1 + $0x3c] sm:$0xf]
  %v34 = vld [vmem:[%s1 + $0x40] sm:$0xf]
  %v35 = vld [vmem:[%s1 + $0x44] sm:$0xf]
  %v36 = vld [vmem:[%s1 + $0x48] sm:$0xf]
  %v37 = vld [vmem:[%s1 + $0x4c] sm:$0xf]
  %v38 = vld [vmem:[%s1 + $0x50] sm:$0xf]
  %v39 = vld [vmem:[%s1 + $0x54] sm:$0xf]
  %v40 = vld [vmem:[%s1 + $0x58] sm:$0xf]
  %v41 = vld [vmem:[%s1 + $0x5c] sm:$0xf]
  %v42 = vld [vmem:[%s1 + $0x60] sm:$0xf]
  %v43 = vld [vmem:[%s1 + $0x64] sm:$0xf]
  %v44 = vld [vmem:[%s1 + $0x68] sm:$0xf]
  %v45 = vld [vmem:[%s1 + $0x6c] sm:$0xf]
  %v46 = vld [vmem:[%s1 + $0x70] sm:$0xf]
  %v47 = vld [vmem:[%s1 + $0x74] sm:$0xf]
  %v48 = vld [vmem:[%s1 + $0x78] sm:$0xf]
  %v49 = vld [vmem:[%s1 + $0x7c] sm:$0xf]
  %v50 = vld [vmem:[%s1 + $0x80] sm:$0xf]
  %v51 = vld [vmem:[%s1 + $0x84] sm:$0xf]
  %v52 = vld [vmem:[%s1 + $0x88] sm:$0xf]
  %v53 = vld [vmem:[%s1 + $0x8c] sm:$0xf]
  %v54 = vld [vmem:[%s1 + $0x90] sm:$0xf]
  %v55 = vld [vmem:[%s1 + $0x94] sm:$0xf]
  %v56 = vld [vmem:[%s1 + $0x98] sm:$0xf]
  %v57 = vld [vmem:[%s1 + $0x9c] sm:$0xf]
  %v58 = vld [vmem:[%s1 + $0xa0] sm:$0xf]
  %v59 = vld [vmem:[%s1 + $0xa4] sm:$0xf]
  %v60 = vld [vmem:[%s1 + $0xa8] sm:$0xf]
  %v61 = vld [vmem:[%s1 + $0xac] sm:$0xf]
  %v62 = vld [vmem:[%s1 + $0xb0] sm:$0xf]
  %v63 = vld [vmem:[%s1 + $0xb4] sm:$0xf]
  %v64 = vld [vmem:[%s1 + $0xb8] sm:$0xf]
  %v65 = vld [vmem:[%s1 + $0xbc] sm:$0xf]
  %v66 = vld [vmem:[%s1 + $0xc0] sm:$0xf]
  %v67 = vld [vmem:[%s1 + $0xc4] sm:$0xf]
  %v68 = vld [vmem:[%s1 + $0xc8] sm:$0xf]
  %v69 = vld [vmem:[%s1 + $0xcc] sm:$0xf]
  %v70 = vld [vmem:[%s1 + $0xd0] sm:$0xf]
  %v71 = vld [vmem:[%s1 + $0xd4] sm:$0xf]
  %v72 = vld [vmem:[%s1 + $0xd8] sm:$0xf]
  %v73 = vld [vmem:[%s1 + $0xdc] sm:$0xf]
  %v74 = vld [vmem:[%s1 + $0xe0] sm:$0xf]
  %v75 = vld [vmem:[%s1 + $0xe4] sm:$0xf]
  %v76 = vld [vmem:[%s1 + $0xe8] sm:$0xf]
  %v77 = vld [vmem:[%s1 + $0xec] sm:$0xf]
  %v78 = vld [vmem:[%s1 + $0xf0] sm:$0xf]
  %v79 = vld [vmem:[%s1 + $0xf4] sm:$0xf]
  %v80 = vld [vmem:[%s1 + $0xf8] sm:$0xf]
  %v81 = vld [vmem:[%s1 + $0xfc] sm:$0xf]
  %v82 = vld [vmem:[%s2] sm:$0x1]
  %v84 = vperm.slane %v82, 0
  %v90 = vunpack.c.l.b16 %v14
  %v91 = vunpack.c.h.b16 %v14
  %v92 = vunpack.c.l.b16 %v15
  %v93 = vunpack.c.h.b16 %v15
  %v94 = vunpack.c.l.b16 %v16
  %v95 = vunpack.c.h.b16 %v16
  %v96 = vunpack.c.l.b16 %v17
  %v97 = vunpack.c.h.b16 %v17
  %v98 = vpack.c.b16 %v94, %v90
  %v99 = vpack.c.b16 %v95, %v91
  %v100 = vpack.c.b16 %v96, %v92
  %v101 = vpack.c.b16 %v97, %v93
  %v170 = vunpack.c.l.b16 %v18
  %v171 = vunpack.c.l.b16 %v19
  %v172 = vunpack.c.l.b16 %v20
  %v173 = vunpack.c.l.b16 %v21
  %v174 = vunpack.c.l.b16 %v22
  %v175 = vunpack.c.l.b16 %v23
  %v176 = vunpack.c.l.b16 %v24
  %v177 = vunpack.c.l.b16 %v25
  %v178 = vunpack.c.l.b16 %v26
  %v179 = vunpack.c.l.b16 %v27
  %v180 = vunpack.c.l.b16 %v28
  %v181 = vunpack.c.l.b16 %v29
  %v182 = vunpack.c.l.b16 %v30
  %v183 = vunpack.c.l.b16 %v31
  %v184 = vunpack.c.l.b16 %v32
  %v185 = vunpack.c.l.b16 %v33
  %v186 = vunpack.c.l.b16 %v34
  %v187 = vunpack.c.l.b16 %v35
  %v188 = vunpack.c.l.b16 %v36
  %v189 = vunpack.c.l.b16 %v37
  %v190 = vunpack.c.l.b16 %v38
  %v191 = vunpack.c.l.b16 %v39
  %v192 = vunpack.c.l.b16 %v40
  %v193 = vunpack.c.l.b16 %v41
  %v194 = vunpack.c.l.b16 %v42
  %v195 = vunpack.c.l.b16 %v43
  %v196 = vunpack.c.l.b16 %v44
  %v197 = vunpack.c.l.b16 %v45
  %v198 = vunpack.c.l.b16 %v46
  %v199 = vunpack.c.l.b16 %v47
  %v200 = vunpack.c.l.b16 %v48
  %v201 = vunpack.c.l.b16 %v49
  %v202 = vunpack.c.l.b16 %v50
  %v203 = vunpack.c.l.b16 %v51
  %v204 = vunpack.c.l.b16 %v52
  %v205 = vunpack.c.l.b16 %v53
  %v206 = vunpack.c.l.b16 %v54
  %v207 = vunpack.c.l.b16 %v55
  %v208 = vunpack.c.l.b16 %v56
  %v209 = vunpack.c.l.b16 %v57
  %v210 = vunpack.c.l.b16 %v58
  %v211 = vunpack.c.l.b16 %v59
  %v212 = vunpack.c.l.b16 %v60
  %v213 = vunpack.c.l.b16 %v61
  %v214 = vunpack.c.l.b16 %v62
  %v215 = vunpack.c.l.b16 %v63
  %v216 = vunpack.c.l.b16 %v64
  %v217 = vunpack.c.l.b16 %v65
  %v218 = vunpack.c.l.b16 %v66
  %v219 = vunpack.c.l.b16 %v67
  %v220 = vunpack.c.l.b16 %v68
  %v221 = vunpack.c.l.b16 %v69
  %v222 = vunpack.c.l.b16 %v70
  %v223 = vunpack.c.l.b16 %v71
  %v224 = vunpack.c.l.b16 %v72
  %v225 = vunpack.c.l.b16 %v73
  %v226 = vunpack.c.l.b16 %v74
  %v227 = vunpack.c.l.b16 %v75
  %v228 = vunpack.c.l.b16 %v76
  %v229 = vunpack.c.l.b16 %v77
  %v230 = vunpack.c.l.b16 %v78
  %v231 = vunpack.c.l.b16 %v79
  %v232 = vunpack.c.l.b16 %v80
  %v233 = vunpack.c.l.b16 %v81
  %v234 = vpack.c.b16 %v171, %v170
  %v235 = vpack.c.b16 %v173, %v172
  %v236 = vpack.c.b16 %v175, %v174
  %v237 = vpack.c.b16 %v177, %v176
  %v238 = vpack.c.b16 %v179, %v178
  %v239 = vpack.c.b16 %v181, %v180
  %v240 = vpack.c.b16 %v183, %v182
  %v241 = vpack.c.b16 %v185, %v184
  %v242 = vpack.c.b16 %v187, %v186
  %v243 = vpack.c.b16 %v189, %v188
  %v244 = vpack.c.b16 %v191, %v190
  %v245 = vpack.c.b16 %v193, %v192
  %v246 = vpack.c.b16 %v195, %v194
  %v247 = vpack.c.b16 %v197, %v196
  %v248 = vpack.c.b16 %v199, %v198
  %v249 = vpack.c.b16 %v201, %v200
  %v250 = vpack.c.b16 %v203, %v202
  %v251 = vpack.c.b16 %v205, %v204
  %v252 = vpack.c.b16 %v207, %v206
  %v253 = vpack.c.b16 %v209, %v208
  %v254 = vpack.c.b16 %v211, %v210
  %v255 = vpack.c.b16 %v213, %v212
  %v256 = vpack.c.b16 %v215, %v214
  %v257 = vpack.c.b16 %v217, %v216
  %v258 = vpack.c.b16 %v219, %v218
  %v259 = vpack.c.b16 %v221, %v220
  %v260 = vpack.c.b16 %v223, %v222
  %v261 = vpack.c.b16 %v225, %v224
  %v262 = vpack.c.b16 %v227, %v226
  %v263 = vpack.c.b16 %v229, %v228
  %v264 = vpack.c.b16 %v231, %v230
  %v265 = vpack.c.b16 %v233, %v232
  %298 = vmatpush.bf16.msra.mxu0 %v241
  %299 = vmatpush.bf16.msra.mxu0 %v240
  %300 = vmatpush.bf16.msra.mxu0 %v239
  %301 = vmatpush.bf16.msra.mxu0 %v238
  %302 = vmatpush.bf16.msra.mxu0 %v237
  %303 = vmatpush.bf16.msra.mxu0 %v236
  %304 = vmatpush.bf16.msra.mxu0 %v235
  %305 = vmatpush.bf16.msra.mxu0 %v234
  %306 = vmatmul.bf16.gmra.mxu0 %v98
  %v307 = vpop.f32.mrf.mxu0
  %v308 = vadd.f32 %v84, %v307
  %v309 = vpop.f32.mrf.mxu0
  %v310 = vadd.f32 %v84, %v309
  %311 = vdwg.mxu0
  %312 = vmatpush.bf16.msra.mxu0 %v249
  %313 = vmatpush.bf16.msra.mxu0 %v248
  %314 = vmatpush.bf16.msra.mxu0 %v247
  %315 = vmatpush.bf16.msra.mxu0 %v246
  %316 = vmatpush.bf16.msra.mxu0 %v245
  %317 = vmatpush.bf16.msra.mxu0 %v244
  %318 = vmatpush.bf16.msra.mxu0 %v243
  %319 = vmatpush.bf16.msra.mxu0 %v242
  %320 = vmatmul.bf16.gmra.mxu0 %v99
  %v321 = vpop.f32.mrf.mxu0
  %v322 = vadd.f32 %v308, %v321
  %v323 = vpop.f32.mrf.mxu0
  %v324 = vadd.f32 %v310, %v323
  %325 = vdwg.mxu0
  %326 = vmatpush.bf16.msra.mxu0 %v257
  %327 = vmatpush.bf16.msra.mxu0 %v256
  %328 = vmatpush.bf16.msra.mxu0 %v255
  %329 = vmatpush.bf16.msra.mxu0 %v254
  %330 = vmatpush.bf16.msra.mxu0 %v253
  %331 = vmatpush.bf16.msra.mxu0 %v252
  %332 = vmatpush.bf16.msra.mxu0 %v251
  %333 = vmatpush.bf16.msra.mxu0 %v250
  %334 = vmatmul.bf16.gmra.mxu0 %v100
  %v335 = vpop.f32.mrf.mxu0
  %v336 = vadd.f32 %v322, %v335
  %v337 = vpop.f32.mrf.mxu0
  %v338 = vadd.f32 %v324, %v337
  %339 = vdwg.mxu0
  %340 = vmatpush.bf16.msra.mxu0 %v265
  %341 = vmatpush.bf16.msra.mxu0 %v264
  %342 = vmatpush.bf16.msra.mxu0 %v263
  %343 = vmatpush.bf16.msra.mxu0 %v262
  %344 = vmatpush.bf16.msra.mxu0 %v261
  %345 = vmatpush.bf16.msra.mxu0 %v260
  %346 = vmatpush.bf16.msra.mxu0 %v259
  %347 = vmatpush.bf16.msra.mxu0 %v258
  %348 = vmatmul.bf16.gmra.mxu0 %v101
  %v349 = vpop.f32.mrf.mxu0
  %v350 = vadd.f32 %v336, %v349
  %v351 = vpop.f32.mrf.mxu0
  %v352 = vadd.f32 %v338, %v351
  %353 = vdwg.mxu0
  %vm354 = vcmask 523264
  %355 = vst.msk [vmem:[%s3] sm:$0xff] %vm354, %v350
  %356 = vst.msk [vmem:[%s3 + $0x8] sm:$0xff] %vm354, %v352
  // Predicated region
  $region14: #{deeponet_forward.6} parent=0 // pred_check
    _
  $region15: #{deeponet_forward.6} parent=0 // pred_check_branch
    %358 = sbr.rel (0) target = $region17
  $region16: #{deeponet_forward.6} parent=0 // pred_region
    _
  $region17: #{deeponet_forward.6} parent=0 // pred_fallthru
    _
  // Predicated region
  $region18: #{deeponet_forward.6} parent=0 // pred_check
    _
  $region19: #{deeponet_forward.6} parent=0 // pred_check_branch
    %360 = sbr.rel (0) target = $region21
  $region20: #{deeponet_forward.6} parent=0 // pred_region
    _
  $region21: #{deeponet_forward.6} parent=0 // pred_fallthru
    _

// kernel: deeponet_forward.7
$region0: #{deeponet_forward.7}
  #allocation0 [shape = 'u32[]', space=smem, size = 0x4, offset = 0x4, fixed_abs, tag = 'smem constant byte address 0x4 - core index']
  #allocation1 [shape = 'u32[72,128]{1,0:T(1,128)}', space=vmem, size = 0x9000, scoped, tag = 'internal scratch']
  %s0 = inlined_call_operand.vmem [shape: bf16[2,8,8], index: 0, kind: input, shape index: {}]
  %s1 = inlined_call_operand.vmem [shape: f32[2,1,64], index: 1, kind: input, shape index: {}]
  %s2 = inlined_call_operand.vmem [shape: bf16[8,32], index: 2, kind: input, shape index: {}]
  %s3 = inlined_call_operand.vmem [shape: f32[1,32], index: 3, kind: input, shape index: {}]
  %s4 = inlined_call_operand.vmem [shape: bf16[32,32], index: 4, kind: input, shape index: {}]
  %s5 = inlined_call_operand.vmem [shape: f32[1,32], index: 5, kind: input, shape index: {}]
  %s6 = inlined_call_operand.vmem [shape: bf16[32,32], index: 6, kind: input, shape index: {}]
  %s7 = inlined_call_operand.vmem [shape: f32[1,32], index: 7, kind: input, shape index: {}]
  %s8 = inlined_call_operand.vmem [shape: bf16[32,64], index: 8, kind: input, shape index: {}]
  %s9 = inlined_call_operand.vmem [shape: f32[1,64], index: 9, kind: input, shape index: {}]
  %s10 = inlined_call_operand.vmem [shape: bf16[64,128], index: 10, kind: input, shape index: {}]
  %s11 = inlined_call_operand.vmem [shape: f32[1,128], index: 11, kind: input, shape index: {}]
  %s12 = inlined_call_operand.vmem [shape: f32[2,8,128], index: 12, kind: output, shape index: {}]
  %s13 = sld [smem:[#allocation0]]
  $region81: #{deeponet_forward.7} parent=0
    _
  %s15 = ssub.s32 1, %s13
  %s16 = scalar_select 0, %s15, %s13
  loop: start=0, step=1, limit=4
  $region2: #{deeponet_forward.7} parent=0 // loop_pre_header
    _
  $region3: #{deeponet_forward.7} parent=0 // loop_header
    %s18 = sphi 0, %s22
    %p19 = scmp.ge.s32.totalorder %s18, 4
    %s25 = sphi 0, %s37
    %s26 = sphi 0, %s33
    %s27 = sphi 0, %s25
    %s28 = sphi 0, %s26
    %s29 = sphi 0, %s27
    %s30 = sphi 0, %s28
    %s42 = sphi 0, %s44
    %s45 = sphi 0, %s42
    %s46 = sphi 0, %s45
    %s62 = sphi 0, %s46
    %s68 = sphi 0, %s70
    %s71 = sphi 0, %s68
    %s72 = sphi 0, %s71
    %s88 = sphi 0, %s72
    %s92 = sphi 0, %s92
    %s94 = sphi 0, %s92
    %s95 = sphi 0, %s94
    %s109 = sphi 0, %s95
    %s113 = sphi 0, %s113
    %s115 = sphi 0, %s113
    %s116 = sphi 0, %s115
    %s130 = sphi 0, %s116
    %s134 = sphi 0, %s134
    %s136 = sphi 0, %s134
    %s137 = sphi 0, %s136
    %s151 = sphi 0, %s137
    %s155 = sphi 0, %s155
    %s157 = sphi 0, %s155
    %s158 = sphi 0, %s157
    %s172 = sphi 0, %s158
    %s176 = sphi 0, %s176
    %s178 = sphi 0, %s176
    %s179 = sphi 0, %s178
    %s193 = sphi 0, %s179
    %s197 = sphi 0, %s197
    %s199 = sphi 0, %s197
    %s200 = sphi 0, %s199
    %s214 = sphi 0, %s200
    %s218 = sphi 0, %s218
    %s220 = sphi 0, %s218
    %s221 = sphi 0, %s220
    %s235 = sphi 0, %s221
    %s239 = sphi 0, %s239
    %s241 = sphi 0, %s239
    %s242 = sphi 0, %s241
    %s256 = sphi 0, %s242
    %s260 = sphi 0, %s260
    %s262 = sphi 0, %s260
    %s263 = sphi 0, %s262
    %s277 = sphi 0, %s263
    %s281 = sphi 0, %s281
    %s283 = sphi 0, %s281
    %s284 = sphi 0, %s283
    %s298 = sphi 0, %s284
    %s306 = sphi 0, %s308
    %s309 = sphi 0, %s306
    %s310 = sphi 0, %s309
    %s326 = sphi 0, %s310
  $region4: #{deeponet_forward.7} parent=0 // loop_header_branch
    %21 = sbr.rel (%p19) target = $region8
  $region5: #{deeponet_forward.7} parent=0 // loop_body
    %s23 = ssub.s32 %s18, 1
    %s24 = ssub.s32 %s18, 2
    %s31 = sadd.s32 1, %s26
    %p32 = scmp.ge.s32.totalorder %s31, 1
    %s33 = scalar_select %p32, 0, %s31
    %s34 = sadd.s32 1, %s25
    %s35 = scalar_select %p32, %s34, %s25
    %p36 = scmp.ge.s32.totalorder %s35, 2
    %s37 = scalar_select %p36, 0, %s35
    %s38 = ssub.s32 %s25, %s37
    %s39 = ssub.s32 %s26, %s33
    %s40 = sor.u32 %s38, %s39
    %p41 = scmp.eq.s32.totalorder %s40, 0
    %s43 = sadd.s32 %s42, 1
    %s44 = scalar_select %p41, %s42, %s43
    %p47 = pneg %p41
    %p48 = scmp.eq.s32.totalorder %s18, 1
    %p49 = por %p47, %p48
    %p50 = scmp.ne.s32.totalorder %s42, %s45
    %p51 = scmp.eq.s32.totalorder %s18, 0
    %p52 = por %p50, %p51
    %p53 = scmp.ne.s32.totalorder %s42, %s45
    %p54 = scmp.eq.s32.totalorder %s23, 1
    %p55 = por %p53, %p54
    %p56 = scmp.ne.s32.totalorder %s45, %s46
    %p57 = scmp.eq.s32.totalorder %s23, 0
    %p58 = por %p56, %p57
    %p59 = scmp.ne.s32.totalorder %s45, %s46
    %p60 = scmp.eq.s32.totalorder %s24, 1
    %p61 = por %p59, %p60
    %p63 = scmp.ne.s32.totalorder %s46, %s62
    %p64 = scmp.eq.s32.totalorder %s24, 0
    %p65 = por %p63, %p64
    %s66 = ssub.s32 %s25, %s37
    %p67 = scmp.eq.s32.totalorder %s66, 0
    %s69 = sadd.s32 %s68, 1
    %s70 = scalar_select %p67, %s68, %s69
    %p73 = pneg %p67
    %p74 = scmp.eq.s32.totalorder %s18, 1
    %p75 = por %p73, %p74
    %p76 = scmp.ne.s32.totalorder %s68, %s71
    %p77 = scmp.eq.s32.totalorder %s18, 0
    %p78 = por %p76, %p77
    %p79 = scmp.ne.s32.totalorder %s68, %s71
    %p80 = scmp.eq.s32.totalorder %s23, 1
    %p81 = por %p79, %p80
    %p82 = scmp.ne.s32.totalorder %s71, %s72
    %p83 = scmp.eq.s32.totalorder %s23, 0
    %p84 = por %p82, %p83
    %p85 = scmp.ne.s32.totalorder %s71, %s72
    %p86 = scmp.eq.s32.totalorder %s24, 1
    %p87 = por %p85, %p86
    %p89 = scmp.ne.s32.totalorder %s72, %s88
    %p90 = scmp.eq.s32.totalorder %s24, 0
    %p91 = por %p89, %p90
    %s93 = sadd.s32 %s92, 1
    %p96 = scmp.eq.s32.totalorder %s18, 1
    %p97 = scmp.ne.s32.totalorder %s92, %s94
    %p98 = scmp.eq.s32.totalorder %s18, 0
    %p99 = por %p97, %p98
    %p100 = scmp.ne.s32.totalorder %s92, %s94
    %p101 = scmp.eq.s32.totalorder %s23, 1
    %p102 = por %p100, %p101
    %p103 = scmp.ne.s32.totalorder %s94, %s95
    %p104 = scmp.eq.s32.totalorder %s23, 0
    %p105 = por %p103, %p104
    %p106 = scmp.ne.s32.totalorder %s94, %s95
    %p107 = scmp.eq.s32.totalorder %s24, 1
    %p108 = por %p106, %p107
    %p110 = scmp.ne.s32.totalorder %s95, %s109
    %p111 = scmp.eq.s32.totalorder %s24, 0
    %p112 = por %p110, %p111
    %s114 = sadd.s32 %s113, 1
    %p117 = scmp.eq.s32.totalorder %s18, 1
    %p118 = scmp.ne.s32.totalorder %s113, %s115
    %p119 = scmp.eq.s32.totalorder %s18, 0
    %p120 = por %p118, %p119
    %p121 = scmp.ne.s32.totalorder %s113, %s115
    %p122 = scmp.eq.s32.totalorder %s23, 1
    %p123 = por %p121, %p122
    %p124 = scmp.ne.s32.totalorder %s115, %s116
    %p125 = scmp.eq.s32.totalorder %s23, 0
    %p126 = por %p124, %p125
    %p127 = scmp.ne.s32.totalorder %s115, %s116
    %p128 = scmp.eq.s32.totalorder %s24, 1
    %p129 = por %p127, %p128
    %p131 = scmp.ne.s32.totalorder %s116, %s130
    %p132 = scmp.eq.s32.totalorder %s24, 0
    %p133 = por %p131, %p132
    %s135 = sadd.s32 %s134, 1
    %p138 = scmp.eq.s32.totalorder %s18, 1
    %p139 = scmp.ne.s32.totalorder %s134, %s136
    %p140 = scmp.eq.s32.totalorder %s18, 0
    %p141 = por %p139, %p140
    %p142 = scmp.ne.s32.totalorder %s134, %s136
    %p143 = scmp.eq.s32.totalorder %s23, 1
    %p144 = por %p142, %p143
    %p145 = scmp.ne.s32.totalorder %s136, %s137
    %p146 = scmp.eq.s32.totalorder %s23, 0
    %p147 = por %p145, %p146
    %p148 = scmp.ne.s32.totalorder %s136, %s137
    %p149 = scmp.eq.s32.totalorder %s24, 1
    %p150 = por %p148, %p149
    %p152 = scmp.ne.s32.totalorder %s137, %s151
    %p153 = scmp.eq.s32.totalorder %s24, 0
    %p154 = por %p152, %p153
    %s156 = sadd.s32 %s155, 1
    %p159 = scmp.eq.s32.totalorder %s18, 1
    %p160 = scmp.ne.s32.totalorder %s155, %s157
    %p161 = scmp.eq.s32.totalorder %s18, 0
    %p162 = por %p160, %p161
    %p163 = scmp.ne.s32.totalorder %s155, %s157
    %p164 = scmp.eq.s32.totalorder %s23, 1
    %p165 = por %p163, %p164
    %p166 = scmp.ne.s32.totalorder %s157, %s158
    %p167 = scmp.eq.s32.totalorder %s23, 0
    %p168 = por %p166, %p167
    %p169 = scmp.ne.s32.totalorder %s157, %s158
    %p170 = scmp.eq.s32.totalorder %s24, 1
    %p171 = por %p169, %p170
    %p173 = scmp.ne.s32.totalorder %s158, %s172
    %p174 = scmp.eq.s32.totalorder %s24, 0
    %p175 = por %p173, %p174
    %s177 = sadd.s32 %s176, 1
    %p180 = scmp.eq.s32.totalorder %s18, 1
    %p181 = scmp.ne.s32.totalorder %s176, %s178
    %p182 = scmp.eq.s32.totalorder %s18, 0
    %p183 = por %p181, %p182
    %p184 = scmp.ne.s32.totalorder %s176, %s178
    %p185 = scmp.eq.s32.totalorder %s23, 1
    %p186 = por %p184, %p185
    %p187 = scmp.ne.s32.totalorder %s178, %s179
    %p188 = scmp.eq.s32.totalorder %s23, 0
    %p189 = por %p187, %p188
    %p190 = scmp.ne.s32.totalorder %s178, %s179
    %p191 = scmp.eq.s32.totalorder %s24, 1
    %p192 = por %p190, %p191
    %p194 = scmp.ne.s32.totalorder %s179, %s193
    %p195 = scmp.eq.s32.totalorder %s24, 0
    %p196 = por %p194, %p195
    %s198 = sadd.s32 %s197, 1
    %p201 = scmp.eq.s32.totalorder %s18, 1
    %p202 = scmp.ne.s32.totalorder %s197, %s199
    %p203 = scmp.eq.s32.totalorder %s18, 0
    %p204 = por %p202, %p203
    %p205 = scmp.ne.s32.totalorder %s197, %s199
    %p206 = scmp.eq.s32.totalorder %s23, 1
    %p207 = por %p205, %p206
    %p208 = scmp.ne.s32.totalorder %s199, %s200
    %p209 = scmp.eq.s32.totalorder %s23, 0
    %p210 = por %p208, %p209
    %p211 = scmp.ne.s32.totalorder %s199, %s200
    %p212 = scmp.eq.s32.totalorder %s24, 1
    %p213 = por %p211, %p212
    %p215 = scmp.ne.s32.totalorder %s200, %s214
    %p216 = scmp.eq.s32.totalorder %s24, 0
    %p217 = por %p215, %p216
    %s219 = sadd.s32 %s218, 1
    %p222 = scmp.eq.s32.totalorder %s18, 1
    %p223 = scmp.ne.s32.totalorder %s218, %s220
    %p224 = scmp.eq.s32.totalorder %s18, 0
    %p225 = por %p223, %p224
    %p226 = scmp.ne.s32.totalorder %s218, %s220
    %p227 = scmp.eq.s32.totalorder %s23, 1
    %p228 = por %p226, %p227
    %p229 = scmp.ne.s32.totalorder %s220, %s221
    %p230 = scmp.eq.s32.totalorder %s23, 0
    %p231 = por %p229, %p230
    %p232 = scmp.ne.s32.totalorder %s220, %s221
    %p233 = scmp.eq.s32.totalorder %s24, 1
    %p234 = por %p232, %p233
    %p236 = scmp.ne.s32.totalorder %s221, %s235
    %p237 = scmp.eq.s32.totalorder %s24, 0
    %p238 = por %p236, %p237
    %s240 = sadd.s32 %s239, 1
    %p243 = scmp.eq.s32.totalorder %s18, 1
    %p244 = scmp.ne.s32.totalorder %s239, %s241
    %p245 = scmp.eq.s32.totalorder %s18, 0
    %p246 = por %p244, %p245
    %p247 = scmp.ne.s32.totalorder %s239, %s241
    %p248 = scmp.eq.s32.totalorder %s23, 1
    %p249 = por %p247, %p248
    %p250 = scmp.ne.s32.totalorder %s241, %s242
    %p251 = scmp.eq.s32.totalorder %s23, 0
    %p252 = por %p250, %p251
    %p253 = scmp.ne.s32.totalorder %s241, %s242
    %p254 = scmp.eq.s32.totalorder %s24, 1
    %p255 = por %p253, %p254
    %p257 = scmp.ne.s32.totalorder %s242, %s256
    %p258 = scmp.eq.s32.totalorder %s24, 0
    %p259 = por %p257, %p258
    %s261 = sadd.s32 %s260, 1
    %p264 = scmp.eq.s32.totalorder %s18, 1
    %p265 = scmp.ne.s32.totalorder %s260, %s262
    %p266 = scmp.eq.s32.totalorder %s18, 0
    %p267 = por %p265, %p266
    %p268 = scmp.ne.s32.totalorder %s260, %s262
    %p269 = scmp.eq.s32.totalorder %s23, 1
    %p270 = por %p268, %p269
    %p271 = scmp.ne.s32.totalorder %s262, %s263
    %p272 = scmp.eq.s32.totalorder %s23, 0
    %p273 = por %p271, %p272
    %p274 = scmp.ne.s32.totalorder %s262, %s263
    %p275 = scmp.eq.s32.totalorder %s24, 1
    %p276 = por %p274, %p275
    %p278 = scmp.ne.s32.totalorder %s263, %s277
    %p279 = scmp.eq.s32.totalorder %s24, 0
    %p280 = por %p278, %p279
    %s282 = sadd.s32 %s281, 1
    %p285 = scmp.eq.s32.totalorder %s18, 1
    %p286 = scmp.ne.s32.totalorder %s281, %s283
    %p287 = scmp.eq.s32.totalorder %s18, 0
    %p288 = por %p286, %p287
    %p289 = scmp.ne.s32.totalorder %s281, %s283
    %p290 = scmp.eq.s32.totalorder %s23, 1
    %p291 = por %p289, %p290
    %p292 = scmp.ne.s32.totalorder %s283, %s284
    %p293 = scmp.eq.s32.totalorder %s23, 0
    %p294 = por %p292, %p293
    %p295 = scmp.ne.s32.totalorder %s283, %s284
    %p296 = scmp.eq.s32.totalorder %s24, 1
    %p297 = por %p295, %p296
    %p299 = scmp.ne.s32.totalorder %s284, %s298
    %p300 = scmp.eq.s32.totalorder %s24, 0
    %p301 = por %p299, %p300
    %s302 = ssub.s32 %s25, %s37
    %s303 = ssub.s32 %s26, %s33
    %s304 = sor.u32 %s302, %s303
    %p305 = scmp.eq.s32.totalorder %s304, 0
    %s307 = sadd.s32 %s306, 1
    %s308 = scalar_select %p305, %s306, %s307
    %p311 = pneg %p305
    %p312 = scmp.eq.s32.totalorder %s18, 1
    %p313 = por %p311, %p312
    %p314 = scmp.ne.s32.totalorder %s306, %s309
    %p315 = scmp.eq.s32.totalorder %s18, 0
    %p316 = por %p314, %p315
    %p317 = scmp.ne.s32.totalorder %s306, %s309
    %p318 = scmp.eq.s32.totalorder %s23, 1
    %p319 = por %p317, %p318
    %p320 = scmp.ne.s32.totalorder %s309, %s310
    %p321 = scmp.eq.s32.totalorder %s23, 0
    %p322 = por %p320, %p321
    %p323 = scmp.ne.s32.totalorder %s309, %s310
    %p324 = scmp.eq.s32.totalorder %s24, 1
    %p325 = por %p323, %p324
    %p327 = scmp.ne.s32.totalorder %s310, %s326
    %p328 = scmp.eq.s32.totalorder %s24, 0
    %p329 = por %p327, %p328
    %p330 = scmp.le.s32.totalorder 1, %s18
    %p331 = scmp.lt.s32.totalorder %s18, 3
    %p332 = pnand %p330, %p331
    %p333 = pneg %p332
    // Predicated region
    $region9: #{deeponet_forward.7} parent=5 // pred_check
      _
    $region10: #{deeponet_forward.7} parent=5 // pred_check_branch
      %335 = sbr.rel (%p332) target = $region12
    $region11: #{deeponet_forward.7} parent=5 // pred_region
      %s336 = ssub.s32 %s18, 1
      // Predicated region
      $region13: #{deeponet_forward.7} parent=11 // pred_check
        %p337 = pneg %p105
      $region14: #{deeponet_forward.7} parent=11 // pred_check_branch
        %339 = sbr.rel (%p337) target = $region16
      $region15: #{deeponet_forward.7} parent=11 // pred_region
        _
      $region16: #{deeponet_forward.7} parent=11 // pred_fallthru
        _
      // Predicated region
      $region17: #{deeponet_forward.7} parent=11 // pred_check
        %p340 = pneg %p126
      $region18: #{deeponet_forward.7} parent=11 // pred_check_branch
        %342 = sbr.rel (%p340) target = $region20
      $region19: #{deeponet_forward.7} parent=11 // pred_region
        _
      $region20: #{deeponet_forward.7} parent=11 // pred_fallthru
        _
      // Predicated region
      $region21: #{deeponet_forward.7} parent=11 // pred_check
        %p343 = pneg %p147
      $region22: #{deeponet_forward.7} parent=11 // pred_check_branch
        %345 = sbr.rel (%p343) target = $region24
      $region23: #{deeponet_forward.7} parent=11 // pred_region
        _
      $region24: #{deeponet_forward.7} parent=11 // pred_fallthru
        _
      // Predicated region
      $region25: #{deeponet_forward.7} parent=11 // pred_check
        %p346 = pneg %p168
      $region26: #{deeponet_forward.7} parent=11 // pred_check_branch
        %348 = sbr.rel (%p346) target = $region28
      $region27: #{deeponet_forward.7} parent=11 // pred_region
        _
      $region28: #{deeponet_forward.7} parent=11 // pred_fallthru
        _
      // Predicated region
      $region29: #{deeponet_forward.7} parent=11 // pred_check
        %p349 = pneg %p189
      $region30: #{deeponet_forward.7} parent=11 // pred_check_branch
        %351 = sbr.rel (%p349) target = $region32
      $region31: #{deeponet_forward.7} parent=11 // pred_region
        _
      $region32: #{deeponet_forward.7} parent=11 // pred_fallthru
        _
      // Predicated region
      $region33: #{deeponet_forward.7} parent=11 // pred_check
        %p352 = pneg %p210
      $region34: #{deeponet_forward.7} parent=11 // pred_check_branch
        %354 = sbr.rel (%p352) target = $region36
      $region35: #{deeponet_forward.7} parent=11 // pred_region
        _
      $region36: #{deeponet_forward.7} parent=11 // pred_fallthru
        _
      // Predicated region
      $region37: #{deeponet_forward.7} parent=11 // pred_check
        %p355 = pneg %p231
      $region38: #{deeponet_forward.7} parent=11 // pred_check_branch
        %357 = sbr.rel (%p355) target = $region40
      $region39: #{deeponet_forward.7} parent=11 // pred_region
        _
      $region40: #{deeponet_forward.7} parent=11 // pred_fallthru
        _
      // Predicated region
      $region41: #{deeponet_forward.7} parent=11 // pred_check
        %p358 = pneg %p252
      $region42: #{deeponet_forward.7} parent=11 // pred_check_branch
        %360 = sbr.rel (%p358) target = $region44
      $region43: #{deeponet_forward.7} parent=11 // pred_region
        _
      $region44: #{deeponet_forward.7} parent=11 // pred_fallthru
        _
      // Predicated region
      $region45: #{deeponet_forward.7} parent=11 // pred_check
        %p361 = pneg %p273
      $region46: #{deeponet_forward.7} parent=11 // pred_check_branch
        %363 = sbr.rel (%p361) target = $region48
      $region47: #{deeponet_forward.7} parent=11 // pred_region
        _
      $region48: #{deeponet_forward.7} parent=11 // pred_fallthru
        _
      // Predicated region
      $region49: #{deeponet_forward.7} parent=11 // pred_check
        %p364 = pneg %p294
      $region50: #{deeponet_forward.7} parent=11 // pred_check_branch
        %366 = sbr.rel (%p364) target = $region52
      $region51: #{deeponet_forward.7} parent=11 // pred_region
        _
      $region52: #{deeponet_forward.7} parent=11 // pred_fallthru
        _
    $region12: #{deeponet_forward.7} parent=5 // pred_fallthru
      _
    %p367 = scmp.lt.s32.totalorder %s18, 2
    // Predicated region
    $region53: #{deeponet_forward.7} parent=5 // pred_check
      %p368 = pneg %p367
    $region54: #{deeponet_forward.7} parent=5 // pred_check_branch
      %370 = sbr.rel (%p368) target = $region56
    $region55: #{deeponet_forward.7} parent=5 // pred_region
      // Predicated region
      $region57: #{deeponet_forward.7} parent=55 // pred_check
        %p371 = pneg %p52
      $region58: #{deeponet_forward.7} parent=55 // pred_check_branch
        %373 = sbr.rel (%p371) target = $region60
      $region59: #{deeponet_forward.7} parent=55 // pred_region
        %p374 = scmp.lt.s32.totalorder %s25, 1
        %s375 = scalar_select %p374, %s25, 1
        %p376 = scmp.lt.s32.totalorder %s26, 0
        %s377 = scalar_select %p376, %s26, 0
        %s378 = sadd.s32 %s377, %s375
        %s379 = smul.addr %s378, 4
        %s380 = scalar_lea.vmem %s0, %s379
      $region60: #{deeponet_forward.7} parent=55 // pred_fallthru
        _
      // Predicated region
      $region61: #{deeponet_forward.7} parent=55 // pred_check
        %p381 = pneg %p78
      $region62: #{deeponet_forward.7} parent=55 // pred_check_branch
        %383 = sbr.rel (%p381) target = $region64
      $region63: #{deeponet_forward.7} parent=55 // pred_region
        %p384 = scmp.lt.s32.totalorder %s25, 1
        %s385 = scalar_select %p384, %s25, 1
        %s386 = scalar_lea.vmem %s1, %s385
      $region64: #{deeponet_forward.7} parent=55 // pred_fallthru
        _
    $region56: #{deeponet_forward.7} parent=5 // pred_fallthru
      _
    %p387 = scmp.le.s32.totalorder 1, %s18
    %p388 = scmp.lt.s32.totalorder %s18, 3
    %p389 = pnand %p387, %p388
    %p390 = pneg %p389
    // Predicated region
    $region65: #{deeponet_forward.7} parent=5 // pred_check
      _
    $region66: #{deeponet_forward.7} parent=5 // pred_check_branch
      %392 = sbr.rel (%p389) target = $region68
    $region67: #{deeponet_forward.7} parent=5 // pred_region
      %s393 = ssub.s32 %s18, 1
      %p394 = scmp.lt.s32.totalorder %s27, 1
      %s395 = scalar_select %p394, %s27, 1
      %p396 = scmp.lt.s32.totalorder %s28, 0
      %s397 = scalar_select %p396, %s28, 0
      %s398 = sadd.s32 %s397, %s395
      %s399 = smul.addr %s398, 4
      %s400 = scalar_lea.vmem %s0, %s399
      %p401 = pneg %p58
      %p402 = pneg %p55
      %p403 = scmp.lt.s32.totalorder %s27, 1
      %s404 = scalar_select %p403, %s27, 1
      %s405 = scalar_lea.vmem %s1, %s404
      %p406 = pneg %p84
      %p407 = pneg %p81
      %p408 = pneg %p105
      %p409 = pneg %p102
      %p410 = pneg %p126
      %p411 = pneg %p123
      %p412 = pneg %p147
      %p413 = pneg %p144
      %p414 = pneg %p168
      %p415 = pneg %p165
      %p416 = pneg %p189
      %p417 = pneg %p186
      %p418 = pneg %p210
      %p419 = pneg %p207
      %p420 = pneg %p231
      %p421 = pneg %p228
      %p422 = pneg %p252
      %p423 = pneg %p249
      %p424 = pneg %p273
      %p425 = pneg %p270
      %p426 = pneg %p294
      %p427 = pneg %p291
      %p428 = pneg %p322
      %p429 = pneg %p319
      %p430 = scmp.lt.s32.totalorder %s27, 1
      %s431 = scalar_select %p430, %s27, 1
      %p432 = scmp.lt.s32.totalorder %s28, 0
      %s433 = scalar_select %p432, %s28, 0
      %s434 = sadd.s32 %s433, %s431
      %s435 = smul.addr %s434, 8
      %s436 = scalar_lea.vmem %s12, %s435
      %p437 = scmp.lt.s32.totalorder %s27, 1
      %s438 = scalar_select %p437, %s27, 1
      %p439 = scmp.lt.s32.totalorder %s28, 0
      %s440 = scalar_select %p439, %s28, 0
      %s441 = sadd.s32 %s440, %s438
      %s442 = smul.addr %s441, 4
      %s443 = scalar_lea.vmem %s0, %s442
      %p444 = scmp.lt.s32.totalorder %s27, 1
      %s445 = scalar_select %p444, %s27, 1
      %s446 = scalar_lea.vmem %s1, %s445
      %p447 = scmp.lt.s32.totalorder %s27, 1
      %s448 = scalar_select %p447, %s27, 1
      %p449 = scmp.lt.s32.totalorder %s28, 0
      %s450 = scalar_select %p449, %s28, 0
      %s451 = sadd.s32 %s450, %s448
      %s452 = smul.addr %s451, 8
      %s453 = scalar_lea.vmem %s12, %s452
      %v455 = vld [vmem:[%s443] sm:$0xf]
      %v456 = vld [vmem:[%s2] sm:$0xf]
      %v457 = vld [vmem:[%s3] sm:$0x1]
      %v459 = vperm.slane %v457, 0
      %vm461 = vcmask 64512
      %v463 = vsel %vm461, %v455, 0
      %vm465 = vcmask 1043456
      %v467 = vsel %vm465, %v456, 0
      %469 = vmatpush.bf16.msra.mxu0 0
      %470 = vmatpush.bf16.msra.mxu0 0
      %471 = vmatpush.bf16.msra.mxu0 0
      %472 = vmatpush.bf16.msra.mxu0 0
      %473 = vmatpush.bf16.msra.mxu0 0
      %474 = vmatpush.bf16.msra.mxu0 0
      %475 = vmatpush.bf16.msra.mxu0 0
      %476 = vmatpush.bf16.msra.mxu0 %v467
      %477 = vmatmul.bf16.gmra.mxu0 %v463
      %v478 = vpop.f32.mrf.mxu0
      %v479 = vadd.f32 %v459, %v478
      %v480 = vpop.f32.mrf.mxu0
      %481 = vdwg.mxu0
      %v482 = vand.u32 2147483647, %v479
      %vm483 = vcmp.le.f32.partialorder %v482, 0.7853982
      %vm484 = vcmp.lt.s32.totalorder %v479, 0
      %v485 = vand.u32 %v479, 2139095040
      %v486 = vshrl.u32 %v485, 23
      %v487 = vsub.s32 %v486, 127
      %v488 = vand.u32 2147483647, %v479
      %v489 = vand.u32 %v488, 8388607
      %v490 = vor.u32 %v489, 8388608
      %v491 = vsub.s32 0, %v490
      %v492 = vadd.s32 %v487, 1
      %vm493 = vcmp.gt.s32.totalorder %v492, 0
      %v494 = vsel %vm493, %v492, 0
      %v495 = vshrl.u32 %v494, 5
      %v496 = vand.u32 %v494, 31
      %v497 = vsub.s32 32, %v496
      %v498 = vshrl.u32 683565275, %v497
      %v499 = vshll.u32 683565275, %v496
      %v500 = vshrl.u32 2475754826, %v497
      %v501 = vor.u32 %v499, %v500
      %v502 = vshll.u32 2475754826, %v496
      %v503 = vshrl.u32 2131351028, %v497
      %v504 = vor.u32 %v502, %v503
      %v505 = vshll.u32 2131351028, %v496
      %v506 = vshrl.u32 2102212464, %v497
      %v507 = vor.u32 %v505, %v506
      %v508 = vshll.u32 2102212464, %v496
      %v509 = vshrl.u32 920167782, %v497
      %v510 = vor.u32 %v508, %v509
      %v511 = vshll.u32 920167782, %v496
      %v512 = vshrl.u32 1326507024, %v497
      %v513 = vor.u32 %v511, %v512
      %vm514 = vcmp.lt.s32.totalorder %v495, 1
      %vm515 = vcmp.lt.s32.totalorder %v495, 2
      %vm516 = vcmp.lt.s32.totalorder %v495, 3
      %vm517 = vcmp.lt.s32.totalorder %v495, 4
      %v518 = vsel %vm514, %v498, %v501
      %v519 = vsel %vm517, %v507, 2102212464
      %v520 = vsel %vm516, %v504, %v519
      %v521 = vsel %vm515, %v518, %v520
      %v522 = vsel %vm514, %v501, %v504
      %v523 = vsel %vm517, %v510, 920167782
      %v524 = vsel %vm516, %v507, %v523
      %v525 = vsel %vm515, %v522, %v524
      %v526 = vsel %vm514, %v504, %v507
      %v527 = vsel %vm517, %v513, 1326507024
      %v528 = vsel %vm516, %v510, %v527
      %v529 = vsel %vm515, %v526, %v528
      %v530 = vshll.u32 %v490, 8
      %v531 = vand.u32 %v530, 65535
      %v532 = vshrl.u32 %v530, 16
      %v533 = vand.u32 %v529, 65535
      %v534 = vshrl.u32 %v529, 16
      %v535 = vmul.u32 %v531, %v533
      %v536 = vmul.u32 %v531, %v534
      %v537 = vmul.u32 %v532, %v533
      %v538 = vmul.u32 %v532, %v534
      %v539 = vshll.u32 %v536, 16
      %v540 = vshrl.u32 %v536, 16
      %v541 = vshll.u32 %v537, 16
      %v542 = vshrl.u32 %v537, 16
      %vm543 = vc.u32 %v535, %v539
      %v544 = vsel %vm543, 1, 0
      %v545 = vadd.s32 %v535, %v539
      %v546 = vadd.s32 %v538, %v544
      %vm547 = vc.u32 %v545, %v541
      %v548 = vsel %vm547, 1, 0
      %v549 = vadd.s32 %v545, %v541
      %v550 = vadd.s32 %v546, %v548
      %v551 = vadd.s32 %v550, %v540
      %v552 = vadd.s32 %v551, %v542
      %v553 = vand.u32 %v530, 65535
      %v554 = vshrl.u32 %v530, 16
      %v555 = vand.u32 %v525, 65535
      %v556 = vshrl.u32 %v525, 16
      %v557 = vmul.u32 %v553, %v555
      %v558 = vmul.u32 %v553, %v556
      %v559 = vmul.u32 %v554, %v555
      %v560 = vmul.u32 %v554, %v556
      %v561 = vshll.u32 %v558, 16
      %v562 = vshrl.u32 %v558, 16
      %v563 = vshll.u32 %v559, 16
      %v564 = vshrl.u32 %v559, 16
      %vm565 = vc.u32 %v557, %v561
      %v566 = vsel %vm565, 1, 0
      %v567 = vadd.s32 %v557, %v561
      %v568 = vadd.s32 %v560, %v566
      %vm569 = vc.u32 %v567, %v563
      %v570 = vsel %vm569, 1, 0
      %v571 = vadd.s32 %v567, %v563
      %v572 = vadd.s32 %v568, %v570
      %v573 = vadd.s32 %v572, %v562
      %v574 = vadd.s32 %v573, %v564
      %v575 = vmul.u32 %v530, %v521
      %v576 = vadd.s32 %v552, %v571
      %vm577 = vc.u32 %v552, %v571
      %v578 = vadd.s32 %v574, 1
      %v579 = vsel %vm577, %v578, %v574
      %v580 = vadd.s32 %v575, %v579
      %v581 = vadd.s32 %v580, 536870912
      %v582 = vshrl.u32 %v581, 30
      %v583 = vshll.u32 %v582, 30
      %v584 = vsub.s32 %v580, %v583
      %vm585 = vcmp.lt.s32.totalorder %v584, 0
      %v586 = vsub.s32 0, %v584
      %v587 = vsel %vm585, %v586, %v584
      %v588 = vclz %v587
      %v589 = vsub.s32 %v588, 2
      %vm590 = vcmp.gt.s32.totalorder 0, %v589
      %v591 = vsel %vm590, 0, %v589
      %v592 = vsub.s32 32, %v591
      %v593 = vshll.u32 %v584, %v591
      %v594 = vshrl.u32 %v576, %v592
      %v595 = vor.u32 %v593, %v594
      %v596 = vsub.s32 4294967266, %v591
      %v597 = vadd.s32 %v596, 127
      %v598 = vshll.u32 %v597, 23
      %v599 = vor.u32 4788187, %v598
      %v600 = vand.u32 2147483647, %v599
      %v602 = vcvt.s32.f32 %v595
      %v603 = vmul.f32 %v602, %v600
      %v604 = vxor.u32 %v603, 2147483648
      %v605 = vsel %vm484, %v604, %v603
      %v606 = vsub.s32 4, %v582
      %v607 = vsel %vm484, %v606, %v582
      %v608 = vsel %vm483, %v479, %v605
      %v609 = vsel %vm483, 0, %v607
      %v610 = vmul.f32 %v608, %v608
      %v611 = vmul.f32 %v610, -0.001358992
      %v612 = vadd.f32 %v611, 0.041655596
      %v613 = vmul.f32 %v610, %v612
      %v614 = vadd.f32 %v613, -0.4999988
      %v615 = vmul.f32 %v610, %v614
      %v616 = vadd.f32 1.0, %v615
      %v617 = vmul.f32 %v608, %v608
      %v618 = vmul.f32 %v617, -0.00019511016
      %v619 = vadd.f32 %v618, 0.008332121
      %v620 = vmul.f32 %v617, %v619
      %v621 = vadd.f32 %v620, -0.16666654
      %v622 = vmul.f32 %v617, %v621
      %v623 = vadd.f32 %v622, 1.0
      %v624 = vmul.f32 %v623, %v608
      %vm625 = vweird.f32 %v479
      %v626 = vadd.s32 %v609, 3
      %v627 = vand.u32 %v626, 3
      %vm628 = vcmp.lt.s32.totalorder %v627, 2
      %vm629 = vcmp.eq.s32.totalorder %v627, 0
      %v630 = vxor.u32 %v624, 2147483648
      %v631 = vsel %vm629, %v616, %v630
      %vm632 = vcmp.eq.s32.totalorder %v627, 2
      %v633 = vxor.u32 %v616, 2147483648
      %v634 = vsel %vm632, %v633, %v624
      %v635 = vsel %vm628, %v631, %v634
      %v636 = vsel %vm625, nan, %v635
      %v637 = vpack.c.bf16 %v636, %v636
      %v638 = vld [vmem:[%s4] sm:$0xf]
      %v639 = vld [vmem:[%s4 + $0x4] sm:$0xf]
      %v640 = vld [vmem:[%s4 + $0x8] sm:$0xf]
      %v641 = vld [vmem:[%s4 + $0xc] sm:$0xf]
      %v642 = vld [vmem:[%s5] sm:$0x1]
      %v644 = vperm.slane %v642, 0
      %v650 = vunpack.c.l.b16 %v638
      %v651 = vunpack.c.l.b16 %v639
      %v652 = vunpack.c.l.b16 %v640
      %v653 = vunpack.c.l.b16 %v641
      %v654 = vpack.c.b16 %v651, %v650
      %v655 = vpack.c.b16 %v653, %v652
      %vm658 = vcmask 261120
      %v660 = vsel %vm658, %v637, 0
      %662 = vmatpush.bf16.msra.mxu0 0
      %663 = vmatpush.bf16.msra.mxu0 0
      %664 = vmatpush.bf16.msra.mxu0 0
      %665 = vmatpush.bf16.msra.mxu0 0
      %666 = vmatpush.bf16.msra.mxu0 0
      %667 = vmatpush.bf16.msra.mxu0 0
      %668 = vmatpush.bf16.msra.mxu0 %v655
      %669 = vmatpush.bf16.msra.mxu0 %v654
      %670 = vmatmul.bf16.gmra.mxu0 %v660
      %v671 = vpop.f32.mrf.mxu0
      %v672 = vadd.f32 %v644, %v671
      %v673 = vpop.f32.mrf.mxu0
      %674 = vdwg.mxu0
      %v675 = vand.u32 2147483647, %v672
      %vm676 = vcmp.le.f32.partialorder %v675, 0.7853982
      %vm677 = vcmp.lt.s32.totalorder %v672, 0
      %v678 = vand.u32 %v672, 2139095040
      %v679 = vshrl.u32 %v678, 23
      %v680 = vsub.s32 %v679, 127
      %v681 = vand.u32 2147483647, %v672
      %v682 = vand.u32 %v681, 8388607
      %v683 = vor.u32 %v682, 8388608
      %v684 = vsub.s32 0, %v683
      %v685 = vadd.s32 %v680, 1
      %vm686 = vcmp.gt.s32.totalorder %v685, 0
      %v687 = vsel %vm686, %v685, 0
      %v688 = vshrl.u32 %v687, 5
      %v689 = vand.u32 %v687, 31
      %v690 = vsub.s32 32, %v689
      %v691 = vshrl.u32 683565275, %v690
      %v692 = vshll.u32 683565275, %v689
      %v693 = vshrl.u32 2475754826, %v690
      %v694 = vor.u32 %v692, %v693
      %v695 = vshll.u32 2475754826, %v689
      %v696 = vshrl.u32 2131351028, %v690
      %v697 = vor.u32 %v695, %v696
      %v698 = vshll.u32 2131351028, %v689
      %v699 = vshrl.u32 2102212464, %v690
      %v700 = vor.u32 %v698, %v699
      %v701 = vshll.u32 2102212464, %v689
      %v702 = vshrl.u32 920167782, %v690
      %v703 = vor.u32 %v701, %v702
      %v704 = vshll.u32 920167782, %v689
      %v705 = vshrl.u32 1326507024, %v690
      %v706 = vor.u32 %v704, %v705
      %vm707 = vcmp.lt.s32.totalorder %v688, 1
      %vm708 = vcmp.lt.s32.totalorder %v688, 2
      %vm709 = vcmp.lt.s32.totalorder %v688, 3
      %vm710 = vcmp.lt.s32.totalorder %v688, 4
      %v711 = vsel %vm707, %v691, %v694
      %v712 = vsel %vm710, %v700, 2102212464
      %v713 = vsel %vm709, %v697, %v712
      %v714 = vsel %vm708, %v711, %v713
      %v715 = vsel %vm707, %v694, %v697
      %v716 = vsel %vm710, %v703, 920167782
      %v717 = vsel %vm709, %v700, %v716
      %v718 = vsel %vm708, %v715, %v717
      %v719 = vsel %vm707, %v697, %v700
      %v720 = vsel %vm710, %v706, 1326507024
      %v721 = vsel %vm709, %v703, %v720
      %v722 = vsel %vm708, %v719, %v721
      %v723 = vshll.u32 %v683, 8
      %v724 = vand.u32 %v723, 65535
      %v725 = vshrl.u32 %v723, 16
      %v726 = vand.u32 %v722, 65535
      %v727 = vshrl.u32 %v722, 16
      %v728 = vmul.u32 %v724, %v726
      %v729 = vmul.u32 %v724, %v727
      %v730 = vmul.u32 %v725, %v726
      %v731 = vmul.u32 %v725, %v727
      %v732 = vshll.u32 %v729, 16
      %v733 = vshrl.u32 %v729, 16
      %v734 = vshll.u32 %v730, 16
      %v735 = vshrl.u32 %v730, 16
      %vm736 = vc.u32 %v728, %v732
      %v737 = vsel %vm736, 1, 0
      %v738 = vadd.s32 %v728, %v732
      %v739 = vadd.s32 %v731, %v737
      %vm740 = vc.u32 %v738, %v734
      %v741 = vsel %vm740, 1, 0
      %v742 = vadd.s32 %v738, %v734
      %v743 = vadd.s32 %v739, %v741
      %v744 = vadd.s32 %v743, %v733
      %v745 = vadd.s32 %v744, %v735
      %v746 = vand.u32 %v723, 65535
      %v747 = vshrl.u32 %v723, 16
      %v748 = vand.u32 %v718, 65535
      %v749 = vshrl.u32 %v718, 16
      %v750 = vmul.u32 %v746, %v748
      %v751 = vmul.u32 %v746, %v749
      %v752 = vmul.u32 %v747, %v748
      %v753 = vmul.u32 %v747, %v749
      %v754 = vshll.u32 %v751, 16
      %v755 = vshrl.u32 %v751, 16
      %v756 = vshll.u32 %v752, 16
      %v757 = vshrl.u32 %v752, 16
      %vm758 = vc.u32 %v750, %v754
      %v759 = vsel %vm758, 1, 0
      %v760 = vadd.s32 %v750, %v754
      %v761 = vadd.s32 %v753, %v759
      %vm762 = vc.u32 %v760, %v756
      %v763 = vsel %vm762, 1, 0
      %v764 = vadd.s32 %v760, %v756
      %v765 = vadd.s32 %v761, %v763
      %v766 = vadd.s32 %v765, %v755
      %v767 = vadd.s32 %v766, %v757
      %v768 = vmul.u32 %v723, %v714
      %v769 = vadd.s32 %v745, %v764
      %vm770 = vc.u32 %v745, %v764
      %v771 = vadd.s32 %v767, 1
      %v772 = vsel %vm770, %v771, %v767
      %v773 = vadd.s32 %v768, %v772
      %v774 = vadd.s32 %v773, 536870912
      %v775 = vshrl.u32 %v774, 30
      %v776 = vshll.u32 %v775, 30
      %v777 = vsub.s32 %v773, %v776
      %vm778 = vcmp.lt.s32.totalorder %v777, 0
      %v779 = vsub.s32 0, %v777
      %v780 = vsel %vm778, %v779, %v777
      %v781 = vclz %v780
      %v782 = vsub.s32 %v781, 2
      %vm783 = vcmp.gt.s32.totalorder 0, %v782
      %v784 = vsel %vm783, 0, %v782
      %v785 = vsub.s32 32, %v784
      %v786 = vshll.u32 %v777, %v784
      %v787 = vshrl.u32 %v769, %v785
      %v788 = vor.u32 %v786, %v787
      %v789 = vsub.s32 4294967266, %v784
      %v790 = vadd.s32 %v789, 127
      %v791 = vshll.u32 %v790, 23
      %v792 = vor.u32 4788187, %v791
      %v793 = vand.u32 2147483647, %v792
      %v795 = vcvt.s32.f32 %v788
      %v796 = vmul.f32 %v795, %v793
      %v797 = vxor.u32 %v796, 2147483648
      %v798 = vsel %vm677, %v797, %v796
      %v799 = vsub.s32 4, %v775
      %v800 = vsel %vm677, %v799, %v775
      %v801 = vsel %vm676, %v672, %v798
      %v802 = vsel %vm676, 0, %v800
      %v803 = vmul.f32 %v801, %v801
      %v804 = vmul.f32 %v803, -0.001358992
      %v805 = vadd.f32 %v804, 0.041655596
      %v806 = vmul.f32 %v803, %v805
      %v807 = vadd.f32 %v806, -0.4999988
      %v808 = vmul.f32 %v803, %v807
      %v809 = vadd.f32 1.0, %v808
      %v810 = vmul.f32 %v801, %v801
      %v811 = vmul.f32 %v810, -0.00019511016
      %v812 = vadd.f32 %v811, 0.008332121
      %v813 = vmul.f32 %v810, %v812
      %v814 = vadd.f32 %v813, -0.16666654
      %v815 = vmul.f32 %v810, %v814
      %v816 = vadd.f32 %v815, 1.0
      %v817 = vmul.f32 %v816, %v801
      %vm818 = vweird.f32 %v672
      %v819 = vadd.s32 %v802, 3
      %v820 = vand.u32 %v819, 3
      %vm821 = vcmp.lt.s32.totalorder %v820, 2
      %vm822 = vcmp.eq.s32.totalorder %v820, 0
      %v823 = vxor.u32 %v817, 2147483648
      %v824 = vsel %vm822, %v809, %v823
      %vm825 = vcmp.eq.s32.totalorder %v820, 2
      %v826 = vxor.u32 %v809, 2147483648
      %v827 = vsel %vm825, %v826, %v817
      %v828 = vsel %vm821, %v824, %v827
      %v829 = vsel %vm818, nan, %v828
      %v830 = vpack.c.bf16 %v829, %v829
      %v831 = vld [vmem:[%s6] sm:$0xf]
      %v832 = vld [vmem:[%s6 + $0x4] sm:$0xf]
      %v833 = vld [vmem:[%s6 + $0x8] sm:$0xf]
      %v834 = vld [vmem:[%s6 + $0xc] sm:$0xf]
      %v835 = vld [vmem:[%s7] sm:$0x1]
      %v837 = vperm.slane %v835, 0
      %v843 = vunpack.c.l.b16 %v831
      %v844 = vunpack.c.l.b16 %v832
      %v845 = vunpack.c.l.b16 %v833
      %v846 = vunpack.c.l.b16 %v834
      %v847 = vpack.c.b16 %v844, %v843
      %v848 = vpack.c.b16 %v846, %v845
      %v852 = vsel %vm658, %v830, 0
      %854 = vmatpush.bf16.msra.mxu0 0
      %855 = vmatpush.bf16.msra.mxu0 0
      %856 = vmatpush.bf16.msra.mxu0 0
      %857 = vmatpush.bf16.msra.mxu0 0
      %858 = vmatpush.bf16.msra.mxu0 0
      %859 = vmatpush.bf16.msra.mxu0 0
      %860 = vmatpush.bf16.msra.mxu0 %v848
      %861 = vmatpush.bf16.msra.mxu0 %v847
      %862 = vmatmul.bf16.gmra.mxu0 %v852
      %v863 = vpop.f32.mrf.mxu0
      %v864 = vadd.f32 %v837, %v863
      %v865 = vpop.f32.mrf.mxu0
      %866 = vdwg.mxu0
      %v867 = vand.u32 2147483647, %v864
      %vm868 = vcmp.le.f32.partialorder %v867, 0.7853982
      %vm869 = vcmp.lt.s32.totalorder %v864, 0
      %v870 = vand.u32 %v864, 2139095040
      %v871 = vshrl.u32 %v870, 23
      %v872 = vsub.s32 %v871, 127
      %v873 = vand.u32 2147483647, %v864
      %v874 = vand.u32 %v873, 8388607
      %v875 = vor.u32 %v874, 8388608
      %v876 = vsub.s32 0, %v875
      %v877 = vadd.s32 %v872, 1
      %vm878 = vcmp.gt.s32.totalorder %v877, 0
      %v879 = vsel %vm878, %v877, 0
      %v880 = vshrl.u32 %v879, 5
      %v881 = vand.u32 %v879, 31
      %v882 = vsub.s32 32, %v881
      %v883 = vshrl.u32 683565275, %v882
      %v884 = vshll.u32 683565275, %v881
      %v885 = vshrl.u32 2475754826, %v882
      %v886 = vor.u32 %v884, %v885
      %v887 = vshll.u32 2475754826, %v881
      %v888 = vshrl.u32 2131351028, %v882
      %v889 = vor.u32 %v887, %v888
      %v890 = vshll.u32 2131351028, %v881
      %v891 = vshrl.u32 2102212464, %v882
      %v892 = vor.u32 %v890, %v891
      %v893 = vshll.u32 2102212464, %v881
      %v894 = vshrl.u32 920167782, %v882
      %v895 = vor.u32 %v893, %v894
      %v896 = vshll.u32 920167782, %v881
      %v897 = vshrl.u32 1326507024, %v882
      %v898 = vor.u32 %v896, %v897
      %vm899 = vcmp.lt.s32.totalorder %v880, 1
      %vm900 = vcmp.lt.s32.totalorder %v880, 2
      %vm901 = vcmp.lt.s32.totalorder %v880, 3
      %vm902 = vcmp.lt.s32.totalorder %v880, 4
      %v903 = vsel %vm899, %v883, %v886
      %v904 = vsel %vm902, %v892, 2102212464
      %v905 = vsel %vm901, %v889, %v904
      %v906 = vsel %vm900, %v903, %v905
      %v907 = vsel %vm899, %v886, %v889
      %v908 = vsel %vm902, %v895, 920167782
      %v909 = vsel %vm901, %v892, %v908
      %v910 = vsel %vm900, %v907, %v909
      %v911 = vsel %vm899, %v889, %v892
      %v912 = vsel %vm902, %v898, 1326507024
      %v913 = vsel %vm901, %v895, %v912
      %v914 = vsel %vm900, %v911, %v913
      %v915 = vshll.u32 %v875, 8
      %v916 = vand.u32 %v915, 65535
      %v917 = vshrl.u32 %v915, 16
      %v918 = vand.u32 %v914, 65535
      %v919 = vshrl.u32 %v914, 16
      %v920 = vmul.u32 %v916, %v918
      %v921 = vmul.u32 %v916, %v919
      %v922 = vmul.u32 %v917, %v918
      %v923 = vmul.u32 %v917, %v919
      %v924 = vshll.u32 %v921, 16
      %v925 = vshrl.u32 %v921, 16
      %v926 = vshll.u32 %v922, 16
      %v927 = vshrl.u32 %v922, 16
      %vm928 = vc.u32 %v920, %v924
      %v929 = vsel %vm928, 1, 0
      %v930 = vadd.s32 %v920, %v924
      %v931 = vadd.s32 %v923, %v929
      %vm932 = vc.u32 %v930, %v926
      %v933 = vsel %vm932, 1, 0
      %v934 = vadd.s32 %v930, %v926
      %v935 = vadd.s32 %v931, %v933
      %v936 = vadd.s32 %v935, %v925
      %v937 = vadd.s32 %v936, %v927
      %v938 = vand.u32 %v915, 65535
      %v939 = vshrl.u32 %v915, 16
      %v940 = vand.u32 %v910, 65535
      %v941 = vshrl.u32 %v910, 16
      %v942 = vmul.u32 %v938, %v940
      %v943 = vmul.u32 %v938, %v941
      %v944 = vmul.u32 %v939, %v940
      %v945 = vmul.u32 %v939, %v941
      %v946 = vshll.u32 %v943, 16
      %v947 = vshrl.u32 %v943, 16
      %v948 = vshll.u32 %v944, 16
      %v949 = vshrl.u32 %v944, 16
      %vm950 = vc.u32 %v942, %v946
      %v951 = vsel %vm950, 1, 0
      %v952 = vadd.s32 %v942, %v946
      %v953 = vadd.s32 %v945, %v951
      %vm954 = vc.u32 %v952, %v948
      %v955 = vsel %vm954, 1, 0
      %v956 = vadd.s32 %v952, %v948
      %v957 = vadd.s32 %v953, %v955
      %v958 = vadd.s32 %v957, %v947
      %v959 = vadd.s32 %v958, %v949
      %v960 = vmul.u32 %v915, %v906
      %v961 = vadd.s32 %v937, %v956
      %vm962 = vc.u32 %v937, %v956
      %v963 = vadd.s32 %v959, 1
      %v964 = vsel %vm962, %v963, %v959
      %v965 = vadd.s32 %v960, %v964
      %v966 = vadd.s32 %v965, 536870912
      %v967 = vshrl.u32 %v966, 30
      %v968 = vshll.u32 %v967, 30
      %v969 = vsub.s32 %v965, %v968
      %vm970 = vcmp.lt.s32.totalorder %v969, 0
      %v971 = vsub.s32 0, %v969
      %v972 = vsel %vm970, %v971, %v969
      %v973 = vclz %v972
      %v974 = vsub.s32 %v973, 2
      %vm975 = vcmp.gt.s32.totalorder 0, %v974
      %v976 = vsel %vm975, 0, %v974
      %v977 = vsub.s32 32, %v976
      %v978 = vshll.u32 %v969, %v976
      %v979 = vshrl.u32 %v961, %v977
      %v980 = vor.u32 %v978, %v979
      %v981 = vsub.s32 4294967266, %v976
      %v982 = vadd.s32 %v981, 127
      %v983 = vshll.u32 %v982, 23
      %v984 = vor.u32 4788187, %v983
      %v985 = vand.u32 2147483647, %v984
      %v987 = vcvt.s32.f32 %v980
      %v988 = vmul.f32 %v987, %v985
      %v989 = vxor.u32 %v988, 2147483648
      %v990 = vsel %vm869, %v989, %v988
      %v991 = vsub.s32 4, %v967
      %v992 = vsel %vm869, %v991, %v967
      %v993 = vsel %vm868, %v864, %v990
      %v994 = vsel %vm868, 0, %v992
      %v995 = vmul.f32 %v993, %v993
      %v996 = vmul.f32 %v995, -0.001358992
      %v997 = vadd.f32 %v996, 0.041655596
      %v998 = vmul.f32 %v995, %v997
      %v999 = vadd.f32 %v998, -0.4999988
      %v1000 = vmul.f32 %v995, %v999
      %v1001 = vadd.f32 1.0, %v1000
      %v1002 = vmul.f32 %v993, %v993
      %v1003 = vmul.f32 %v1002, -0.00019511016
      %v1004 = vadd.f32 %v1003, 0.008332121
      %v1005 = vmul.f32 %v1002, %v1004
      %v1006 = vadd.f32 %v1005, -0.16666654
      %v1007 = vmul.f32 %v1002, %v1006
      %v1008 = vadd.f32 %v1007, 1.0
      %v1009 = vmul.f32 %v1008, %v993
      %vm1010 = vweird.f32 %v864
      %v1011 = vadd.s32 %v994, 3
      %v1012 = vand.u32 %v1011, 3
      %vm1013 = vcmp.lt.s32.totalorder %v1012, 2
      %vm1014 = vcmp.eq.s32.totalorder %v1012, 0
      %v1015 = vxor.u32 %v1009, 2147483648
      %v1016 = vsel %vm1014, %v1001, %v1015
      %vm1017 = vcmp.eq.s32.totalorder %v1012, 2
      %v1018 = vxor.u32 %v1001, 2147483648
      %v1019 = vsel %vm1017, %v1018, %v1009
      %v1020 = vsel %vm1013, %v1016, %v1019
      %v1021 = vsel %vm1010, nan, %v1020
      %v1022 = vpack.c.bf16 %v1021, %v1021
      %v1023 = vld [vmem:[%s8] sm:$0xf]
      %v1024 = vld [vmem:[%s8 + $0x4] sm:$0xf]
      %v1025 = vld [vmem:[%s8 + $0x8] sm:$0xf]
      %v1026 = vld [vmem:[%s8 + $0xc] sm:$0xf]
      %v1027 = vld [vmem:[%s9] sm:$0x1]
      %v1029 = vperm.slane %v1027, 0
      %v1035 = vunpack.c.l.b16 %v1023
      %v1036 = vunpack.c.l.b16 %v1024
      %v1037 = vunpack.c.l.b16 %v1025
      %v1038 = vunpack.c.l.b16 %v1026
      %v1039 = vpack.c.b16 %v1036, %v1035
      %v1040 = vpack.c.b16 %v1038, %v1037
      %v1044 = vsel %vm658, %v1022, 0
      %1046 = vmatpush.bf16.msra.mxu0 0
      %1047 = vmatpush.bf16.msra.mxu0 0
      %1048 = vmatpush.bf16.msra.mxu0 0
      %1049 = vmatpush.bf16.msra.mxu0 0
      %1050 = vmatpush.bf16.msra.mxu0 0
      %1051 = vmatpush.bf16.msra.mxu0 0
      %1052 = vmatpush.bf16.msra.mxu0 %v1040
      %1053 = vmatpush.bf16.msra.mxu0 %v1039
      %1054 = vmatmul.bf16.gmra.mxu0 %v1044
      %v1055 = vpop.f32.mrf.mxu0
      %v1056 = vadd.f32 %v1029, %v1055
      %v1057 = vpop.f32.mrf.mxu0
      %1058 = vdwg.mxu0
      %v1059 = vld [vmem:[%s446] sm:$0x1]
      %v1061 = vperm.slane %v1059, 0
      %v1063 = vmul.f32 %v1061, %v1056
      %v1064 = vand.u32 2147483647, %v1063
      %vm1065 = vcmp.le.f32.partialorder %v1064, 0.7853982
      %vm1066 = vcmp.lt.s32.totalorder %v1063, 0
      %v1067 = vand.u32 %v1063, 2139095040
      %v1068 = vshrl.u32 %v1067, 23
      %v1069 = vsub.s32 %v1068, 127
      %v1070 = vand.u32 2147483647, %v1063
      %v1071 = vand.u32 %v1070, 8388607
      %v1072 = vor.u32 %v1071, 8388608
      %v1073 = vsub.s32 0, %v1072
      %v1074 = vadd.s32 %v1069, 1
      %vm1075 = vcmp.gt.s32.totalorder %v1074, 0
      %v1076 = vsel %vm1075, %v1074, 0
      %v1077 = vshrl.u32 %v1076, 5
      %v1078 = vand.u32 %v1076, 31
      %v1079 = vsub.s32 32, %v1078
      %v1080 = vshrl.u32 683565275, %v1079
      %v1081 = vshll.u32 683565275, %v1078
      %v1082 = vshrl.u32 2475754826, %v1079
      %v1083 = vor.u32 %v1081, %v1082
      %v1084 = vshll.u32 2475754826, %v1078
      %v1085 = vshrl.u32 2131351028, %v1079
      %v1086 = vor.u32 %v1084, %v1085
      %v1087 = vshll.u32 2131351028, %v1078
      %v1088 = vshrl.u32 2102212464, %v1079
      %v1089 = vor.u32 %v1087, %v1088
      %v1090 = vshll.u32 2102212464, %v1078
      %v1091 = vshrl.u32 920167782, %v1079
      %v1092 = vor.u32 %v1090, %v1091
      %v1093 = vshll.u32 920167782, %v1078
      %v1094 = vshrl.u32 1326507024, %v1079
      %v1095 = vor.u32 %v1093, %v1094
      %vm1096 = vcmp.lt.s32.totalorder %v1077, 1
      %vm1097 = vcmp.lt.s32.totalorder %v1077, 2
      %vm1098 = vcmp.lt.s32.totalorder %v1077, 3
      %vm1099 = vcmp.lt.s32.totalorder %v1077, 4
      %v1100 = vsel %vm1096, %v1080, %v1083
      %v1101 = vsel %vm1099, %v1089, 2102212464
      %v1102 = vsel %vm1098, %v1086, %v1101
      %v1103 = vsel %vm1097, %v1100, %v1102
      %v1104 = vsel %vm1096, %v1083, %v1086
      %v1105 = vsel %vm1099, %v1092, 920167782
      %v1106 = vsel %vm1098, %v1089, %v1105
      %v1107 = vsel %vm1097, %v1104, %v1106
      %v1108 = vsel %vm1096, %v1086, %v1089
      %v1109 = vsel %vm1099, %v1095, 1326507024
      %v1110 = vsel %vm1098, %v1092, %v1109
      %v1111 = vsel %vm1097, %v1108, %v1110
      %v1112 = vshll.u32 %v1072, 8
      %v1113 = vand.u32 %v1112, 65535
      %v1114 = vshrl.u32 %v1112, 16
      %v1115 = vand.u32 %v1111, 65535
      %v1116 = vshrl.u32 %v1111, 16
      %v1117 = vmul.u32 %v1113, %v1115
      %v1118 = vmul.u32 %v1113, %v1116
      %v1119 = vmul.u32 %v1114, %v1115
      %v1120 = vmul.u32 %v1114, %v1116
      %v1121 = vshll.u32 %v1118, 16
      %v1122 = vshrl.u32 %v1118, 16
      %v1123 = vshll.u32 %v1119, 16
      %v1124 = vshrl.u32 %v1119, 16
      %vm1125 = vc.u32 %v1117, %v1121
      %v1126 = vsel %vm1125, 1, 0
      %v1127 = vadd.s32 %v1117, %v1121
      %v1128 = vadd.s32 %v1120, %v1126
      %vm1129 = vc.u32 %v1127, %v1123
      %v1130 = vsel %vm1129, 1, 0
      %v1131 = vadd.s32 %v1127, %v1123
      %v1132 = vadd.s32 %v1128, %v1130
      %v1133 = vadd.s32 %v1132, %v1122
      %v1134 = vadd.s32 %v1133, %v1124
      %v1135 = vand.u32 %v1112, 65535
      %v1136 = vshrl.u32 %v1112, 16
      %v1137 = vand.u32 %v1107, 65535
      %v1138 = vshrl.u32 %v1107, 16
      %v1139 = vmul.u32 %v1135, %v1137
      %v1140 = vmul.u32 %v1135, %v1138
      %v1141 = vmul.u32 %v1136, %v1137
      %v1142 = vmul.u32 %v1136, %v1138
      %v1143 = vshll.u32 %v1140, 16
      %v1144 = vshrl.u32 %v1140, 16
      %v1145 = vshll.u32 %v1141, 16
      %v1146 = vshrl.u32 %v1141, 16
      %vm1147 = vc.u32 %v1139, %v1143
      %v1148 = vsel %vm1147, 1, 0
      %v1149 = vadd.s32 %v1139, %v1143
      %v1150 = vadd.s32 %v1142, %v1148
      %vm1151 = vc.u32 %v1149, %v1145
      %v1152 = vsel %vm1151, 1, 0
      %v1153 = vadd.s32 %v1149, %v1145
      %v1154 = vadd.s32 %v1150, %v1152
      %v1155 = vadd.s32 %v1154, %v1144
      %v1156 = vadd.s32 %v1155, %v1146
      %v1157 = vmul.u32 %v1112, %v1103
      %v1158 = vadd.s32 %v1134, %v1153
      %vm1159 = vc.u32 %v1134, %v1153
      %v1160 = vadd.s32 %v1156, 1
      %v1161 = vsel %vm1159, %v1160, %v1156
      %v1162 = vadd.s32 %v1157, %v1161
      %v1163 = vadd.s32 %v1162, 536870912
      %v1164 = vshrl.u32 %v1163, 30
      %v1165 = vshll.u32 %v1164, 30
      %v1166 = vsub.s32 %v1162, %v1165
      %vm1167 = vcmp.lt.s32.totalorder %v1166, 0
      %v1168 = vsub.s32 0, %v1166
      %v1169 = vsel %vm1167, %v1168, %v1166
      %v1170 = vclz %v1169
      %v1171 = vsub.s32 %v1170, 2
      %vm1172 = vcmp.gt.s32.totalorder 0, %v1171
      %v1173 = vsel %vm1172, 0, %v1171
      %v1174 = vsub.s32 32, %v1173
      %v1175 = vshll.u32 %v1166, %v1173
      %v1176 = vshrl.u32 %v1158, %v1174
      %v1177 = vor.u32 %v1175, %v1176
      %v1178 = vsub.s32 4294967266, %v1173
      %v1179 = vadd.s32 %v1178, 127
      %v1180 = vshll.u32 %v1179, 23
      %v1181 = vor.u32 4788187, %v1180
      %v1182 = vand.u32 2147483647, %v1181
      %v1184 = vcvt.s32.f32 %v1177
      %v1185 = vmul.f32 %v1184, %v1182
      %v1186 = vxor.u32 %v1185, 2147483648
      %v1187 = vsel %vm1066, %v1186, %v1185
      %v1188 = vsub.s32 4, %v1164
      %v1189 = vsel %vm1066, %v1188, %v1164
      %v1190 = vsel %vm1065, %v1063, %v1187
      %v1191 = vsel %vm1065, 0, %v1189
      %v1192 = vmul.f32 %v1190, %v1190
      %v1193 = vmul.f32 %v1192, -0.001358992
      %v1194 = vadd.f32 %v1193, 0.041655596
      %v1195 = vmul.f32 %v1192, %v1194
      %v1196 = vadd.f32 %v1195, -0.4999988
      %v1197 = vmul.f32 %v1192, %v1196
      %v1198 = vadd.f32 1.0, %v1197
      %v1199 = vmul.f32 %v1190, %v1190
      %v1200 = vmul.f32 %v1199, -0.00019511016
      %v1201 = vadd.f32 %v1200, 0.008332121
      %v1202 = vmul.f32 %v1199, %v1201
      %v1203 = vadd.f32 %v1202, -0.16666654
      %v1204 = vmul.f32 %v1199, %v1203
      %v1205 = vadd.f32 %v1204, 1.0
      %v1206 = vmul.f32 %v1205, %v1190
      %vm1207 = vweird.f32 %v1063
      %v1208 = vadd.s32 %v1191, 3
      %v1209 = vand.u32 %v1208, 3
      %vm1210 = vcmp.lt.s32.totalorder %v1209, 2
      %vm1211 = vcmp.eq.s32.totalorder %v1209, 0
      %v1212 = vxor.u32 %v1206, 2147483648
      %v1213 = vsel %vm1211, %v1198, %v1212
      %vm1214 = vcmp.eq.s32.totalorder %v1209, 2
      %v1215 = vxor.u32 %v1198, 2147483648
      %v1216 = vsel %vm1214, %v1215, %v1206
      %v1217 = vsel %vm1210, %v1213, %v1216
      %v1218 = vsel %vm1207, nan, %v1217
      %v1219 = vpack.c.bf16 %v1218, %v1218
      %v1220 = vld [vmem:[%s10] sm:$0xf]
      %v1221 = vld [vmem:[%s10 + $0x4] sm:$0xf]
      %v1222 = vld [vmem:[%s10 + $0x8] sm:$0xf]
      %v1223 = vld [vmem:[%s10 + $0xc] sm:$0xf]
      %v1224 = vld [vmem:[%s10 + $0x10] sm:$0xf]
      %v1225 = vld [vmem:[%s10 + $0x14] sm:$0xf]
      %v1226 = vld [vmem:[%s10 + $0x18] sm:$0xf]
      %v1227 = vld [vmem:[%s10 + $0x1c] sm:$0xf]
      %v1228 = vld [vmem:[%s11] sm:$0x1]
      %v1230 = vperm.slane %v1228, 0
      %v1240 = vunpack.c.l.b16 %v1220
      %v1241 = vunpack.c.l.b16 %v1221
      %v1242 = vunpack.c.l.b16 %v1222
      %v1243 = vunpack.c.l.b16 %v1223
      %v1244 = vunpack.c.l.b16 %v1224
      %v1245 = vunpack.c.l.b16 %v1225
      %v1246 = vunpack.c.l.b16 %v1226
      %v1247 = vunpack.c.l.b16 %v1227
      %v1248 = vpack.c.b16 %v1241, %v1240
      %v1249 = vpack.c.b16 %v1243, %v1242
      %v1250 = vpack.c.b16 %v1245, %v1244
      %v1251 = vpack.c.b16 %v1247, %v1246
      %vm1256 = vcmask 523264
      %v1258 = vsel %vm1256, %v1219, 0
      %1260 = vmatpush.bf16.msra.mxu0 0
      %1261 = vmatpush.bf16.msra.mxu0 0
      %1262 = vmatpush.bf16.msra.mxu0 0
      %1263 = vmatpush.bf16.msra.mxu0 0
      %1264 = vmatpush.bf16.msra.mxu0 %v1251
      %1265 = vmatpush.bf16.msra.mxu0 %v1250
      %1266 = vmatpush.bf16.msra.mxu0 %v1249
      %1267 = vmatpush.bf16.msra.mxu0 %v1248
      %1268 = vmatmul.bf16.gmra.mxu0 %v1258
      %v1269 = vpop.f32.mrf.mxu0
      %v1270 = vadd.f32 %v1230, %v1269
      %v1271 = vpop.f32.mrf.mxu0
      %1272 = vdwg.mxu0
      %1273 = vst [vmem:[%s453] sm:$0xff] %v1270
      %p1274 = scmp.lt.s32.totalorder %s27, 1
      %s1275 = scalar_select %p1274, %s27, 1
      %p1276 = scmp.lt.s32.totalorder %s28, 0
      %s1277 = scalar_select %p1276, %s28, 0
      %s1278 = sadd.s32 %s1277, %s1275
      %s1279 = smul.addr %s1278, 8
      %s1280 = scalar_lea.vmem %s12, %s1279
      // Predicated region
      $region69: #{deeponet_forward.7} parent=67 // pred_check
        %p1281 = pneg %p319
      $region70: #{deeponet_forward.7} parent=67 // pred_check_branch
        %1283 = sbr.rel (%p1281) target = $region72
      $region71: #{deeponet_forward.7} parent=67 // pred_region
        _
      $region72: #{deeponet_forward.7} parent=67 // pred_fallthru
        _
    $region68: #{deeponet_forward.7} parent=5 // pred_fallthru
      _
    %p1284 = scmp.le.s32.totalorder 2, %s18
    // Predicated region
    $region73: #{deeponet_forward.7} parent=5 // pred_check
      %p1285 = pneg %p1284
    $region74: #{deeponet_forward.7} parent=5 // pred_check_branch
      %1287 = sbr.rel (%p1285) target = $region76
    $region75: #{deeponet_forward.7} parent=5 // pred_region
      %s1288 = ssub.s32 %s18, 2
      // Predicated region
      $region77: #{deeponet_forward.7} parent=75 // pred_check
        %p1289 = pneg %p325
      $region78: #{deeponet_forward.7} parent=75 // pred_check_branch
        %1291 = sbr.rel (%p1289) target = $region80
      $region79: #{deeponet_forward.7} parent=75 // pred_region
        %p1292 = scmp.lt.s32.totalorder %s29, 1
        %s1293 = scalar_select %p1292, %s29, 1
        %p1294 = scmp.lt.s32.totalorder %s30, 0
        %s1295 = scalar_select %p1294, %s30, 0
        %s1296 = sadd.s32 %s1295, %s1293
        %s1297 = smul.addr %s1296, 8
        %s1298 = scalar_lea.vmem %s12, %s1297
      $region80: #{deeponet_forward.7} parent=75 // pred_fallthru
        _
    $region76: #{deeponet_forward.7} parent=5 // pred_fallthru
      _
  $region6: #{deeponet_forward.7} parent=0 // loop_footer
    %s22 = sadd.s32 1, %s18
  $region7: #{deeponet_forward.7} parent=0 // loop_footer_branch
    %17 = sbr.rel target = $region3
  $region8: #{deeponet_forward.7} parent=0 // loop_exit
    _

</llo_original>
